<compile_context>
chip_gen: v7x
topology: tpu7x:2x2x1
jax: 0.10.0
libtpu: 0.0.40
codegen_flags: <defaults>
</compile_context>

<pallas_src>
import functools
import math

import jax
import jax.numpy as jnp
from jax.experimental import pallas as pl
from jax.experimental.pallas import tpu as pltpu

KH = KW = 7
PAD = 3
COUT = 16


def conv7x7_bn_relu_kernel(x_ref, w_ref, shift_ref, o_ref, slab_ref, acc_ref, *, wp):
    """One (batch, row-tile) step: interleaved per-kh im2col + MXU matmul + BN/ReLU.

    x_ref:     (1, 1, Cin_p, L_tile)  bf16  halo'd row tile, (rows, Wp) flattened
    w_ref:     (KH, Cout, KW*Cin_p)   bf16  conv weights with BN scale folded in
    shift_ref: (Cout, 1)              f32   folded BN shift (beta - mean*scale)
    o_ref:     (1, Cout, tile)              lane-dense output tile (junk halo cols kept)
    slab_ref:  (2, KW*Cin_p, tile)    bf16  double-buffered per-kh im2col slab
    acc_ref:   (Cout, tile)           f32   matmul accumulator
    """
    cinp = x_ref.shape[2]
    tile = o_ref.shape[2]

    # Contraction split into KH chunks: fill one slab bank with the 7 kw-shifted
    # strips for kernel row kh (contiguous, lane-dense copies; the per-row
    # "wrap" columns are junk and cropped by the wrapper), then matmul and
    # accumulate.  The alternating slab bank lets the scheduler overlap the
    # copies for chunk kh+1 with the MXU work for chunk kh.
    for kh in range(KH):
        bank = kh & 1
        off = kh * wp                      # static: tile selection is done by BlockSpec
        for kw in range(KW):
            slab_ref[bank, kw * cinp:(kw + 1) * cinp, :] = (
                x_ref[0, 0, :, off + kw:off + kw + tile])
        part = jnp.dot(w_ref[kh], slab_ref[bank],
                       preferred_element_type=jnp.float32)
        if kh == 0:
            acc_ref[...] = part            # first chunk doubles as the zero-init
        else:
            acc_ref[...] += part

    # BN shift (scale already folded into the weights) + ReLU.  The accumulator
    # lives in VMEM, so this elementwise epilogue streams vreg-by-vreg instead
    # of holding a giant (Cout, tile) register value.
    o_ref[0] = jnp.maximum(acc_ref[...] + shift_ref[...], 0.0).astype(o_ref.dtype)


def _pick_row_tile(h, wp, target_lanes=8192):
    """Largest row tile TH with TH*wp <= target_lanes and TH*wp % 128 == 0
    (falls back to the whole image, where the full-dim block needs no alignment)."""
    g = 128 // math.gcd(wp, 128)           # TH must be a multiple of g
    th = max(g, (target_lanes // wp) // g * g)
    return h if th >= h else th


def conv7x7_module(x_nchw, weight_oihw, gamma, beta, running_mean, running_var,
                   eps=1e-5, row_tile=None):
    """Forward pass of Conv7x7: (N, Cin, H, W) -> (N, 16, H, W)."""
    N, Cin, H, W = x_nchw.shape
    Cout = weight_oihw.shape[0]
    Cin_p = -(-Cin // 8) * 8               # sublane-align the im2col strips
    Wp = W + 2 * PAD                       # padded width (6 junk cols per output row)

    th = _pick_row_tile(H, Wp) if row_tile is None else min(int(row_tile), H)
    if th < H and (th * Wp) % 128 != 0:
        raise ValueError("row_tile * (W + 6) must be a multiple of 128")
    num_tiles = -(-H // th)
    tile = th * Wp                         # output lanes per grid step

    Hp = num_tiles * th + KH               # PAD top + H + bottom pad (incl. overhang)
    L_tile = (th + KH) * Wp                # per-tile flat window incl. halo rows
    Kc = KW * Cin_p

    # Fold BatchNorm2d (eval mode, running stats) into weight scale + shift.
    scale = gamma / jnp.sqrt(running_var + eps)
    shift_col = (beta - running_mean * scale).reshape(Cout, 1).astype(jnp.float32)

    # (Cout, Cin, KH, KW) -> (KH, Cout, KW, Cin_p) -> (KH, Cout, KW*Cin_p), bf16.
    wt = jnp.transpose(weight_oihw, (2, 0, 3, 1)) * scale[None, :, None, None]
    wt = jnp.pad(wt, ((0, 0), (0, 0), (0, 0), (0, Cin_p - Cin)))
    w3 = wt.reshape(KH, Cout, Kc).astype(jnp.bfloat16)

    # Input prep: zero-pad channels to Cin_p, pad spatially, flatten (rows, Wp),
    # then pre-slice the overlapping halo'd row tiles onto a leading axis so all
    # in-kernel offsets stay static.  bf16 halves the input DMA and slab stores.
    x_pad = jnp.pad(x_nchw, ((0, 0), (0, Cin_p - Cin),
                             (PAD, Hp - PAD - H), (PAD, PAD)))
    x_flat = x_pad.reshape(N, Cin_p, Hp * Wp).astype(jnp.bfloat16)
    x_tiles = jnp.stack([x_flat[:, :, i * tile:i * tile + L_tile]
                         for i in range(num_tiles)], axis=1)  # (N, T, Cin_p, L_tile)

    # VMEM budget from the actual block set (inputs/outputs double-buffered),
    # capped with headroom against the real per-core VMEM capacity.
    block_bytes = (2 * Cin_p * L_tile * 2          # input tile (bf16) x2 buffers
                   + 2 * KH * Cout * Kc * 2        # weights (bf16) x2
                   + 2 * Cout * 4                  # shift x2
                   + 2 * Cout * tile * 4           # output tile (f32) x2
                   + 2 * Kc * tile * 2             # slab scratch (bf16, 2 banks)
                   + Cout * tile * 4)              # f32 accumulator scratch
    try:
        vmem_cap = int(pltpu.get_tpu_info().vmem_capacity_bytes)
    except Exception:                               # conservative fallback (v7x)
        vmem_cap = 64 * 1024 * 1024
    vmem_ceiling = (vmem_cap // 8) * 7
    if block_bytes > vmem_ceiling:
        raise ValueError(f"block set ({block_bytes} B) exceeds the VMEM ceiling "
                         f"({vmem_ceiling} B); use a smaller row_tile")
    vmem_limit = int(min(max(2 * block_bytes, 32 * 1024 * 1024), vmem_ceiling))

    out_flat = pl.pallas_call(
        functools.partial(conv7x7_bn_relu_kernel, wp=Wp),
        out_shape=jax.ShapeDtypeStruct((N, Cout, num_tiles * tile), x_nchw.dtype),
        grid_spec=pltpu.PrefetchScalarGridSpec(
            num_scalar_prefetch=0,
            grid=(N, num_tiles),
            in_specs=[
                pl.BlockSpec((1, 1, Cin_p, L_tile), lambda n, i: (n, i, 0, 0)),
                pl.BlockSpec((KH, Cout, Kc), lambda n, i: (0, 0, 0)),
                pl.BlockSpec((Cout, 1), lambda n, i: (0, 0)),
            ],
            out_specs=pl.BlockSpec((1, Cout, tile), lambda n, i: (n, 0, i)),
            scratch_shapes=[
                pltpu.VMEM((2, Kc, tile), jnp.bfloat16),   # double-buffered slab
                pltpu.VMEM((Cout, tile), jnp.float32),     # f32 accumulator
            ],
        ),
        compiler_params=pltpu.CompilerParams(
            dimension_semantics=("parallel", "parallel"),
            vmem_limit_bytes=vmem_limit,
        ),
    )(x_tiles, w3, shift_col)

    # (N, Cout, T*th*Wp) -> (N, Cout, T*th, Wp) -> crop halo cols / overhang rows.
    return out_flat.reshape(N, Cout, num_tiles * th, Wp)[:, :, :H, :W]


def _reference_f32(x, weight, gamma, beta, mean, var, eps=1e-5):
    """Pure-f32 reference of the original module."""
    y = jax.lax.conv_general_dilated(
        x, weight, (1, 1), ((PAD, PAD), (PAD, PAD)),
        dimension_numbers=("NCHW", "OIHW", "NCHW"),
        precision=jax.lax.Precision.HIGHEST)
    scale = (gamma / jnp.sqrt(var + eps)).reshape(1, -1, 1, 1)
    shift = (beta - mean * gamma / jnp.sqrt(var + eps)).reshape(1, -1, 1, 1)
    return jnp.maximum(y * scale + shift, 0.0)


def _reference_bf16(x, weight, gamma, beta, mean, var, eps=1e-5):
    """Matches the kernel numerics: bf16 inputs / scale-folded bf16 weights,
    f32 accumulation, f32 shift + ReLU."""
    scale = gamma / jnp.sqrt(var + eps)
    shift = (beta - mean * scale).reshape(1, -1, 1, 1)
    w_eff = (weight * scale[:, None, None, None]).astype(jnp.bfloat16).astype(jnp.float32)
    xr = x.astype(jnp.bfloat16).astype(jnp.float32)
    y = jax.lax.conv_general_dilated(
        xr, w_eff, (1, 1), ((PAD, PAD), (PAD, PAD)),
        dimension_numbers=("NCHW", "OIHW", "NCHW"),
        precision=jax.lax.Precision.HIGHEST)
    return jnp.maximum(y + shift, 0.0)


if __name__ == "__main__":
    key = jax.random.PRNGKey(0)

    def make_params(k, cin):
        kw_, kg, kb, km, kv = jax.random.split(k, 5)
        weight = 0.1 * jax.random.normal(kw_, (COUT, cin, KH, KW), jnp.float32)
        gamma = 1.0 + 0.1 * jax.random.normal(kg, (COUT,), jnp.float32)
        beta = 0.1 * jax.random.normal(kb, (COUT,), jnp.float32)
        mean = 0.05 * jax.random.normal(km, (COUT,), jnp.float32)
        var = 1.0 + 0.1 * jax.random.uniform(kv, (COUT,), jnp.float32)
        return weight, gamma, beta, mean, var

    k1, k2, kp1, kp2 = jax.random.split(key, 4)

    # Test 1: module-sized small input (single row tile per image).
    N, CIN, H, W = 2, 4, 16, 16
    x = jax.random.normal(k1, (N, CIN, H, W), dtype=jnp.float32)
    params = make_params(kp1, CIN)
    out = jax.block_until_ready(conv7x7_module(x, *params))
    assert out.shape == (N, COUT, H, W), out.shape
    ref_b = _reference_bf16(x, *params)
    ref_f = _reference_f32(x, *params)
    assert jnp.allclose(out, ref_b, atol=5e-3, rtol=5e-3), \
        float(jnp.max(jnp.abs(out - ref_b)))
    assert jnp.allclose(out, ref_f, atol=1e-1, rtol=1e-1), \
        float(jnp.max(jnp.abs(out - ref_f)))

    # Test 2: force the multi-row-tile (halo) path and Cin padding (3 -> 8).
    N2, CIN2, H2, W2 = 1, 3, 24, 26          # Wp=32 -> row_tile=8 gives 256-lane tiles
    x2 = jax.random.normal(k2, (N2, CIN2, H2, W2), dtype=jnp.float32)
    params2 = make_params(kp2, CIN2)
    out2 = jax.block_until_ready(conv7x7_module(x2, *params2, row_tile=8))
    assert out2.shape == (N2, COUT, H2, W2), out2.shape
    ref2 = _reference_bf16(x2, *params2)
    assert jnp.allclose(out2, ref2, atol=5e-3, rtol=5e-3), \
        float(jnp.max(jnp.abs(out2 - ref2)))

    print("KERNEL_OK")
</pallas_src>

<mosaic_0001>
module attributes {stable_mosaic.version = 11 : i64} {
  func.func @conv7x7_bn_relu_kernel(%arg0: i32, %arg1: i32, %arg2: memref<1x1x8x506xbf16, #tpu.memory_space<vmem>>, %arg3: memref<7x16x56xbf16, #tpu.memory_space<vmem>>, %arg4: memref<16x1xf32, #tpu.memory_space<vmem>>, %arg5: memref<1x16x352xf32, #tpu.memory_space<vmem>>, %arg6: memref<2x56x352xbf16, #tpu.memory_space<vmem>>, %arg7: memref<16x352xf32, #tpu.memory_space<vmem>>) attributes {dimension_semantics = [#tpu.dimension_semantics<parallel>, #tpu.dimension_semantics<parallel>], iteration_bounds = array<i64: 2, 1>, scalar_prefetch = 0 : i64, scratch_operands = 2 : i64, tpu.core_type = #tpu.core_type<tc>, window_params = [{transform_indices = @transform_0, window_bounds = array<i64: 1, 1, 8, 506>}, {pipeline_mode = #tpu.pipeline_mode<synchronous>, transform_indices = @transform_1, window_bounds = array<i64: 7, 16, 56>}, {pipeline_mode = #tpu.pipeline_mode<synchronous>, transform_indices = @transform_2, window_bounds = array<i64: 16, 1>}, {transform_indices = @transform_3, window_bounds = array<i64: 1, 16, 352>}]} {
    %c0 = arith.constant 0 : index
    %c0_0 = arith.constant 0 : index
    %c0_1 = arith.constant 0 : index
    %c0_2 = arith.constant 0 : index
    %0 = vector.load %arg2[%c0, %c0_0, %c0_1, %c0_2] : memref<1x1x8x506xbf16, #tpu.memory_space<vmem>>, vector<1x1x8x352xbf16>
    %1 = vector.shape_cast %0 : vector<1x1x8x352xbf16> to vector<8x352xbf16>
    %c0_3 = arith.constant 0 : index
    %c0_4 = arith.constant 0 : index
    %c0_5 = arith.constant 0 : index
    %2 = vector.load %arg6[%c0_3, %c0_4, %c0_5] : memref<2x56x352xbf16, #tpu.memory_space<vmem>>, vector<1x8x352xbf16>
    %3 = vector.shape_cast %2 : vector<1x8x352xbf16> to vector<8x352xbf16>
    %4 = vector.shape_cast %1 : vector<8x352xbf16> to vector<1x8x352xbf16>
    tpu.vector_store %arg6[%c0_3, %c0_4, %c0_5], %4 {strides = array<i32>} : memref<2x56x352xbf16, #tpu.memory_space<vmem>>, vector<1x8x352xbf16>,
    %c0_6 = arith.constant 0 : index
    %c0_7 = arith.constant 0 : index
    %c0_8 = arith.constant 0 : index
    %c1 = arith.constant 1 : index
    %5 = vector.load %arg2[%c0_6, %c0_7, %c0_8, %c1] : memref<1x1x8x506xbf16, #tpu.memory_space<vmem>>, vector<1x1x8x352xbf16>
    %6 = vector.shape_cast %5 : vector<1x1x8x352xbf16> to vector<8x352xbf16>
    %c0_9 = arith.constant 0 : index
    %c8 = arith.constant 8 : index
    %c0_10 = arith.constant 0 : index
    %7 = vector.load %arg6[%c0_9, %c8, %c0_10] : memref<2x56x352xbf16, #tpu.memory_space<vmem>>, vector<1x8x352xbf16>
    %8 = vector.shape_cast %7 : vector<1x8x352xbf16> to vector<8x352xbf16>
    %9 = vector.shape_cast %6 : vector<8x352xbf16> to vector<1x8x352xbf16>
    tpu.vector_store %arg6[%c0_9, %c8, %c0_10], %9 {strides = array<i32>} : memref<2x56x352xbf16, #tpu.memory_space<vmem>>, vector<1x8x352xbf16>,
    %c0_11 = arith.constant 0 : index
    %c0_12 = arith.constant 0 : index
    %c0_13 = arith.constant 0 : index
    %c2 = arith.constant 2 : index
    %10 = vector.load %arg2[%c0_11, %c0_12, %c0_13, %c2] : memref<1x1x8x506xbf16, #tpu.memory_space<vmem>>, vector<1x1x8x352xbf16>
    %11 = vector.shape_cast %10 : vector<1x1x8x352xbf16> to vector<8x352xbf16>
    %c0_14 = arith.constant 0 : index
    %c16 = arith.constant 16 : index
    %c0_15 = arith.constant 0 : index
    %12 = vector.load %arg6[%c0_14, %c16, %c0_15] : memref<2x56x352xbf16, #tpu.memory_space<vmem>>, vector<1x8x352xbf16>
    %13 = vector.shape_cast %12 : vector<1x8x352xbf16> to vector<8x352xbf16>
    %14 = vector.shape_cast %11 : vector<8x352xbf16> to vector<1x8x352xbf16>
    tpu.vector_store %arg6[%c0_14, %c16, %c0_15], %14 {strides = array<i32>} : memref<2x56x352xbf16, #tpu.memory_space<vmem>>, vector<1x8x352xbf16>,
    %c0_16 = arith.constant 0 : index
    %c0_17 = arith.constant 0 : index
    %c0_18 = arith.constant 0 : index
    %c3 = arith.constant 3 : index
    %15 = vector.load %arg2[%c0_16, %c0_17, %c0_18, %c3] : memref<1x1x8x506xbf16, #tpu.memory_space<vmem>>, vector<1x1x8x352xbf16>
    %16 = vector.shape_cast %15 : vector<1x1x8x352xbf16> to vector<8x352xbf16>
    %c0_19 = arith.constant 0 : index
    %c24 = arith.constant 24 : index
    %c0_20 = arith.constant 0 : index
    %17 = vector.load %arg6[%c0_19, %c24, %c0_20] : memref<2x56x352xbf16, #tpu.memory_space<vmem>>, vector<1x8x352xbf16>
    %18 = vector.shape_cast %17 : vector<1x8x352xbf16> to vector<8x352xbf16>
    %19 = vector.shape_cast %16 : vector<8x352xbf16> to vector<1x8x352xbf16>
    tpu.vector_store %arg6[%c0_19, %c24, %c0_20], %19 {strides = array<i32>} : memref<2x56x352xbf16, #tpu.memory_space<vmem>>, vector<1x8x352xbf16>,
    %c0_21 = arith.constant 0 : index
    %c0_22 = arith.constant 0 : index
    %c0_23 = arith.constant 0 : index
    %c4 = arith.constant 4 : index
    %20 = vector.load %arg2[%c0_21, %c0_22, %c0_23, %c4] : memref<1x1x8x506xbf16, #tpu.memory_space<vmem>>, vector<1x1x8x352xbf16>
    %21 = vector.shape_cast %20 : vector<1x1x8x352xbf16> to vector<8x352xbf16>
    %c0_24 = arith.constant 0 : index
    %c32 = arith.constant 32 : index
    %c0_25 = arith.constant 0 : index
    %22 = vector.load %arg6[%c0_24, %c32, %c0_25] : memref<2x56x352xbf16, #tpu.memory_space<vmem>>, vector<1x8x352xbf16>
    %23 = vector.shape_cast %22 : vector<1x8x352xbf16> to vector<8x352xbf16>
    %24 = vector.shape_cast %21 : vector<8x352xbf16> to vector<1x8x352xbf16>
    tpu.vector_store %arg6[%c0_24, %c32, %c0_25], %24 {strides = array<i32>} : memref<2x56x352xbf16, #tpu.memory_space<vmem>>, vector<1x8x352xbf16>,
    %c0_26 = arith.constant 0 : index
    %c0_27 = arith.constant 0 : index
    %c0_28 = arith.constant 0 : index
    %c5 = arith.constant 5 : index
    %25 = vector.load %arg2[%c0_26, %c0_27, %c0_28, %c5] : memref<1x1x8x506xbf16, #tpu.memory_space<vmem>>, vector<1x1x8x352xbf16>
    %26 = vector.shape_cast %25 : vector<1x1x8x352xbf16> to vector<8x352xbf16>
    %c0_29 = arith.constant 0 : index
    %c40 = arith.constant 40 : index
    %c0_30 = arith.constant 0 : index
    %27 = vector.load %arg6[%c0_29, %c40, %c0_30] : memref<2x56x352xbf16, #tpu.memory_space<vmem>>, vector<1x8x352xbf16>
    %28 = vector.shape_cast %27 : vector<1x8x352xbf16> to vector<8x352xbf16>
    %29 = vector.shape_cast %26 : vector<8x352xbf16> to vector<1x8x352xbf16>
    tpu.vector_store %arg6[%c0_29, %c40, %c0_30], %29 {strides = array<i32>} : memref<2x56x352xbf16, #tpu.memory_space<vmem>>, vector<1x8x352xbf16>,
    %c0_31 = arith.constant 0 : index
    %c0_32 = arith.constant 0 : index
    %c0_33 = arith.constant 0 : index
    %c6 = arith.constant 6 : index
    %30 = vector.load %arg2[%c0_31, %c0_32, %c0_33, %c6] : memref<1x1x8x506xbf16, #tpu.memory_space<vmem>>, vector<1x1x8x352xbf16>
    %31 = vector.shape_cast %30 : vector<1x1x8x352xbf16> to vector<8x352xbf16>
    %c0_34 = arith.constant 0 : index
    %c48 = arith.constant 48 : index
    %c0_35 = arith.constant 0 : index
    %32 = vector.load %arg6[%c0_34, %c48, %c0_35] : memref<2x56x352xbf16, #tpu.memory_space<vmem>>, vector<1x8x352xbf16>
    %33 = vector.shape_cast %32 : vector<1x8x352xbf16> to vector<8x352xbf16>
    %34 = vector.shape_cast %31 : vector<8x352xbf16> to vector<1x8x352xbf16>
    tpu.vector_store %arg6[%c0_34, %c48, %c0_35], %34 {strides = array<i32>} : memref<2x56x352xbf16, #tpu.memory_space<vmem>>, vector<1x8x352xbf16>,
    %c0_36 = arith.constant 0 : index
    %c0_37 = arith.constant 0 : index
    %c0_38 = arith.constant 0 : index
    %35 = vector.load %arg3[%c0_36, %c0_37, %c0_38] : memref<7x16x56xbf16, #tpu.memory_space<vmem>>, vector<1x16x56xbf16>
    %36 = vector.shape_cast %35 : vector<1x16x56xbf16> to vector<16x56xbf16>
    %c0_39 = arith.constant 0 : index
    %c0_40 = arith.constant 0 : index
    %c0_41 = arith.constant 0 : index
    %37 = vector.load %arg6[%c0_39, %c0_40, %c0_41] : memref<2x56x352xbf16, #tpu.memory_space<vmem>>, vector<1x56x352xbf16>
    %38 = vector.shape_cast %37 : vector<1x56x352xbf16> to vector<56x352xbf16>
    %cst = arith.constant dense<0.000000e+00> : vector<16x352xf32>
    %39 = tpu.matmul %36, %38, %cst {dimension_numbers = #tpu.dot_dimension_numbers<[1], [0], [0], [1], [0, 0, 1, 1], [], []>} : vector<16x56xbf16>, vector<56x352xbf16>, vector<16x352xf32> -> vector<16x352xf32>
    %c0_42 = arith.constant 0 : index
    %c0_43 = arith.constant 0 : index
    %40 = vector.load %arg7[%c0_42, %c0_43] : memref<16x352xf32, #tpu.memory_space<vmem>>, vector<16x352xf32>
    tpu.vector_store %arg7[%c0_42, %c0_43], %39 {strides = array<i32>} : memref<16x352xf32, #tpu.memory_space<vmem>>, vector<16x352xf32>,
    %c0_44 = arith.constant 0 : index
    %c0_45 = arith.constant 0 : index
    %c0_46 = arith.constant 0 : index
    %c22 = arith.constant 22 : index
    %41 = vector.load %arg2[%c0_44, %c0_45, %c0_46, %c22] : memref<1x1x8x506xbf16, #tpu.memory_space<vmem>>, vector<1x1x8x352xbf16>
    %42 = vector.shape_cast %41 : vector<1x1x8x352xbf16> to vector<8x352xbf16>
    %c1_47 = arith.constant 1 : index
    %c0_48 = arith.constant 0 : index
    %c0_49 = arith.constant 0 : index
    %43 = vector.load %arg6[%c1_47, %c0_48, %c0_49] : memref<2x56x352xbf16, #tpu.memory_space<vmem>>, vector<1x8x352xbf16>
    %44 = vector.shape_cast %43 : vector<1x8x352xbf16> to vector<8x352xbf16>
    %45 = vector.shape_cast %42 : vector<8x352xbf16> to vector<1x8x352xbf16>
    tpu.vector_store %arg6[%c1_47, %c0_48, %c0_49], %45 {strides = array<i32>} : memref<2x56x352xbf16, #tpu.memory_space<vmem>>, vector<1x8x352xbf16>,
    %c0_50 = arith.constant 0 : index
    %c0_51 = arith.constant 0 : index
    %c0_52 = arith.constant 0 : index
    %c23 = arith.constant 23 : index
    %46 = vector.load %arg2[%c0_50, %c0_51, %c0_52, %c23] : memref<1x1x8x506xbf16, #tpu.memory_space<vmem>>, vector<1x1x8x352xbf16>
    %47 = vector.shape_cast %46 : vector<1x1x8x352xbf16> to vector<8x352xbf16>
    %c1_53 = arith.constant 1 : index
    %c8_54 = arith.constant 8 : index
    %c0_55 = arith.constant 0 : index
    %48 = vector.load %arg6[%c1_53, %c8_54, %c0_55] : memref<2x56x352xbf16, #tpu.memory_space<vmem>>, vector<1x8x352xbf16>
    %49 = vector.shape_cast %48 : vector<1x8x352xbf16> to vector<8x352xbf16>
    %50 = vector.shape_cast %47 : vector<8x352xbf16> to vector<1x8x352xbf16>
    tpu.vector_store %arg6[%c1_53, %c8_54, %c0_55], %50 {strides = array<i32>} : memref<2x56x352xbf16, #tpu.memory_space<vmem>>, vector<1x8x352xbf16>,
    %c0_56 = arith.constant 0 : index
    %c0_57 = arith.constant 0 : index
    %c0_58 = arith.constant 0 : index
    %c24_59 = arith.constant 24 : index
    %51 = vector.load %arg2[%c0_56, %c0_57, %c0_58, %c24_59] : memref<1x1x8x506xbf16, #tpu.memory_space<vmem>>, vector<1x1x8x352xbf16>
    %52 = vector.shape_cast %51 : vector<1x1x8x352xbf16> to vector<8x352xbf16>
    %c1_60 = arith.constant 1 : index
    %c16_61 = arith.constant 16 : index
    %c0_62 = arith.constant 0 : index
    %53 = vector.load %arg6[%c1_60, %c16_61, %c0_62] : memref<2x56x352xbf16, #tpu.memory_space<vmem>>, vector<1x8x352xbf16>
    %54 = vector.shape_cast %53 : vector<1x8x352xbf16> to vector<8x352xbf16>
    %55 = vector.shape_cast %52 : vector<8x352xbf16> to vector<1x8x352xbf16>
    tpu.vector_store %arg6[%c1_60, %c16_61, %c0_62], %55 {strides = array<i32>} : memref<2x56x352xbf16, #tpu.memory_space<vmem>>, vector<1x8x352xbf16>,
    %c0_63 = arith.constant 0 : index
    %c0_64 = arith.constant 0 : index
    %c0_65 = arith.constant 0 : index
    %c25 = arith.constant 25 : index
    %56 = vector.load %arg2[%c0_63, %c0_64, %c0_65, %c25] : memref<1x1x8x506xbf16, #tpu.memory_space<vmem>>, vector<1x1x8x352xbf16>
    %57 = vector.shape_cast %56 : vector<1x1x8x352xbf16> to vector<8x352xbf16>
    %c1_66 = arith.constant 1 : index
    %c24_67 = arith.constant 24 : index
    %c0_68 = arith.constant 0 : index
    %58 = vector.load %arg6[%c1_66, %c24_67, %c0_68] : memref<2x56x352xbf16, #tpu.memory_space<vmem>>, vector<1x8x352xbf16>
    %59 = vector.shape_cast %58 : vector<1x8x352xbf16> to vector<8x352xbf16>
    %60 = vector.shape_cast %57 : vector<8x352xbf16> to vector<1x8x352xbf16>
    tpu.vector_store %arg6[%c1_66, %c24_67, %c0_68], %60 {strides = array<i32>} : memref<2x56x352xbf16, #tpu.memory_space<vmem>>, vector<1x8x352xbf16>,
    %c0_69 = arith.constant 0 : index
    %c0_70 = arith.constant 0 : index
    %c0_71 = arith.constant 0 : index
    %c26 = arith.constant 26 : index
    %61 = vector.load %arg2[%c0_69, %c0_70, %c0_71, %c26] : memref<1x1x8x506xbf16, #tpu.memory_space<vmem>>, vector<1x1x8x352xbf16>
    %62 = vector.shape_cast %61 : vector<1x1x8x352xbf16> to vector<8x352xbf16>
    %c1_72 = arith.constant 1 : index
    %c32_73 = arith.constant 32 : index
    %c0_74 = arith.constant 0 : index
    %63 = vector.load %arg6[%c1_72, %c32_73, %c0_74] : memref<2x56x352xbf16, #tpu.memory_space<vmem>>, vector<1x8x352xbf16>
    %64 = vector.shape_cast %63 : vector<1x8x352xbf16> to vector<8x352xbf16>
    %65 = vector.shape_cast %62 : vector<8x352xbf16> to vector<1x8x352xbf16>
    tpu.vector_store %arg6[%c1_72, %c32_73, %c0_74], %65 {strides = array<i32>} : memref<2x56x352xbf16, #tpu.memory_space<vmem>>, vector<1x8x352xbf16>,
    %c0_75 = arith.constant 0 : index
    %c0_76 = arith.constant 0 : index
    %c0_77 = arith.constant 0 : index
    %c27 = arith.constant 27 : index
    %66 = vector.load %arg2[%c0_75, %c0_76, %c0_77, %c27] : memref<1x1x8x506xbf16, #tpu.memory_space<vmem>>, vector<1x1x8x352xbf16>
    %67 = vector.shape_cast %66 : vector<1x1x8x352xbf16> to vector<8x352xbf16>
    %c1_78 = arith.constant 1 : index
    %c40_79 = arith.constant 40 : index
    %c0_80 = arith.constant 0 : index
    %68 = vector.load %arg6[%c1_78, %c40_79, %c0_80] : memref<2x56x352xbf16, #tpu.memory_space<vmem>>, vector<1x8x352xbf16>
    %69 = vector.shape_cast %68 : vector<1x8x352xbf16> to vector<8x352xbf16>
    %70 = vector.shape_cast %67 : vector<8x352xbf16> to vector<1x8x352xbf16>
    tpu.vector_store %arg6[%c1_78, %c40_79, %c0_80], %70 {strides = array<i32>} : memref<2x56x352xbf16, #tpu.memory_space<vmem>>, vector<1x8x352xbf16>,
    %c0_81 = arith.constant 0 : index
    %c0_82 = arith.constant 0 : index
    %c0_83 = arith.constant 0 : index
    %c28 = arith.constant 28 : index
    %71 = vector.load %arg2[%c0_81, %c0_82, %c0_83, %c28] : memref<1x1x8x506xbf16, #tpu.memory_space<vmem>>, vector<1x1x8x352xbf16>
    %72 = vector.shape_cast %71 : vector<1x1x8x352xbf16> to vector<8x352xbf16>
    %c1_84 = arith.constant 1 : index
    %c48_85 = arith.constant 48 : index
    %c0_86 = arith.constant 0 : index
    %73 = vector.load %arg6[%c1_84, %c48_85, %c0_86] : memref<2x56x352xbf16, #tpu.memory_space<vmem>>, vector<1x8x352xbf16>
    %74 = vector.shape_cast %73 : vector<1x8x352xbf16> to vector<8x352xbf16>
    %75 = vector.shape_cast %72 : vector<8x352xbf16> to vector<1x8x352xbf16>
    tpu.vector_store %arg6[%c1_84, %c48_85, %c0_86], %75 {strides = array<i32>} : memref<2x56x352xbf16, #tpu.memory_space<vmem>>, vector<1x8x352xbf16>,
    %c1_87 = arith.constant 1 : index
    %c0_88 = arith.constant 0 : index
    %c0_89 = arith.constant 0 : index
    %76 = vector.load %arg3[%c1_87, %c0_88, %c0_89] : memref<7x16x56xbf16, #tpu.memory_space<vmem>>, vector<1x16x56xbf16>
    %77 = vector.shape_cast %76 : vector<1x16x56xbf16> to vector<16x56xbf16>
    %c1_90 = arith.constant 1 : index
    %c0_91 = arith.constant 0 : index
    %c0_92 = arith.constant 0 : index
    %78 = vector.load %arg6[%c1_90, %c0_91, %c0_92] : memref<2x56x352xbf16, #tpu.memory_space<vmem>>, vector<1x56x352xbf16>
    %79 = vector.shape_cast %78 : vector<1x56x352xbf16> to vector<56x352xbf16>
    %cst_93 = arith.constant dense<0.000000e+00> : vector<16x352xf32>
    %80 = tpu.matmul %77, %79, %cst_93 {dimension_numbers = #tpu.dot_dimension_numbers<[1], [0], [0], [1], [0, 0, 1, 1], [], []>} : vector<16x56xbf16>, vector<56x352xbf16>, vector<16x352xf32> -> vector<16x352xf32>
    %c0_94 = arith.constant 0 : index
    %c0_95 = arith.constant 0 : index
    %81 = vector.load %arg7[%c0_94, %c0_95] : memref<16x352xf32, #tpu.memory_space<vmem>>, vector<16x352xf32>
    %82 = arith.addf %81, %80 : vector<16x352xf32>
    %c0_96 = arith.constant 0 : index
    %c0_97 = arith.constant 0 : index
    %83 = vector.load %arg7[%c0_96, %c0_97] : memref<16x352xf32, #tpu.memory_space<vmem>>, vector<16x352xf32>
    tpu.vector_store %arg7[%c0_96, %c0_97], %82 {strides = array<i32>} : memref<16x352xf32, #tpu.memory_space<vmem>>, vector<16x352xf32>,
    %c0_98 = arith.constant 0 : index
    %c0_99 = arith.constant 0 : index
    %c0_100 = arith.constant 0 : index
    %c44 = arith.constant 44 : index
    %84 = vector.load %arg2[%c0_98, %c0_99, %c0_100, %c44] : memref<1x1x8x506xbf16, #tpu.memory_space<vmem>>, vector<1x1x8x352xbf16>
    %85 = vector.shape_cast %84 : vector<1x1x8x352xbf16> to vector<8x352xbf16>
    %c0_101 = arith.constant 0 : index
    %c0_102 = arith.constant 0 : index
    %c0_103 = arith.constant 0 : index
    %86 = vector.load %arg6[%c0_101, %c0_102, %c0_103] : memref<2x56x352xbf16, #tpu.memory_space<vmem>>, vector<1x8x352xbf16>
    %87 = vector.shape_cast %86 : vector<1x8x352xbf16> to vector<8x352xbf16>
    %88 = vector.shape_cast %85 : vector<8x352xbf16> to vector<1x8x352xbf16>
    tpu.vector_store %arg6[%c0_101, %c0_102, %c0_103], %88 {strides = array<i32>} : memref<2x56x352xbf16, #tpu.memory_space<vmem>>, vector<1x8x352xbf16>,
    %c0_104 = arith.constant 0 : index
    %c0_105 = arith.constant 0 : index
    %c0_106 = arith.constant 0 : index
    %c45 = arith.constant 45 : index
    %89 = vector.load %arg2[%c0_104, %c0_105, %c0_106, %c45] : memref<1x1x8x506xbf16, #tpu.memory_space<vmem>>, vector<1x1x8x352xbf16>
    %90 = vector.shape_cast %89 : vector<1x1x8x352xbf16> to vector<8x352xbf16>
    %c0_107 = arith.constant 0 : index
    %c8_108 = arith.constant 8 : index
    %c0_109 = arith.constant 0 : index
    %91 = vector.load %arg6[%c0_107, %c8_108, %c0_109] : memref<2x56x352xbf16, #tpu.memory_space<vmem>>, vector<1x8x352xbf16>
    %92 = vector.shape_cast %91 : vector<1x8x352xbf16> to vector<8x352xbf16>
    %93 = vector.shape_cast %90 : vector<8x352xbf16> to vector<1x8x352xbf16>
    tpu.vector_store %arg6[%c0_107, %c8_108, %c0_109], %93 {strides = array<i32>} : memref<2x56x352xbf16, #tpu.memory_space<vmem>>, vector<1x8x352xbf16>,
    %c0_110 = arith.constant 0 : index
    %c0_111 = arith.constant 0 : index
    %c0_112 = arith.constant 0 : index
    %c46 = arith.constant 46 : index
    %94 = vector.load %arg2[%c0_110, %c0_111, %c0_112, %c46] : memref<1x1x8x506xbf16, #tpu.memory_space<vmem>>, vector<1x1x8x352xbf16>
    %95 = vector.shape_cast %94 : vector<1x1x8x352xbf16> to vector<8x352xbf16>
    %c0_113 = arith.constant 0 : index
    %c16_114 = arith.constant 16 : index
    %c0_115 = arith.constant 0 : index
    %96 = vector.load %arg6[%c0_113, %c16_114, %c0_115] : memref<2x56x352xbf16, #tpu.memory_space<vmem>>, vector<1x8x352xbf16>
    %97 = vector.shape_cast %96 : vector<1x8x352xbf16> to vector<8x352xbf16>
    %98 = vector.shape_cast %95 : vector<8x352xbf16> to vector<1x8x352xbf16>
    tpu.vector_store %arg6[%c0_113, %c16_114, %c0_115], %98 {strides = array<i32>} : memref<2x56x352xbf16, #tpu.memory_space<vmem>>, vector<1x8x352xbf16>,
    %c0_116 = arith.constant 0 : index
    %c0_117 = arith.constant 0 : index
    %c0_118 = arith.constant 0 : index
    %c47 = arith.constant 47 : index
    %99 = vector.load %arg2[%c0_116, %c0_117, %c0_118, %c47] : memref<1x1x8x506xbf16, #tpu.memory_space<vmem>>, vector<1x1x8x352xbf16>
    %100 = vector.shape_cast %99 : vector<1x1x8x352xbf16> to vector<8x352xbf16>
    %c0_119 = arith.constant 0 : index
    %c24_120 = arith.constant 24 : index
    %c0_121 = arith.constant 0 : index
    %101 = vector.load %arg6[%c0_119, %c24_120, %c0_121] : memref<2x56x352xbf16, #tpu.memory_space<vmem>>, vector<1x8x352xbf16>
    %102 = vector.shape_cast %101 : vector<1x8x352xbf16> to vector<8x352xbf16>
    %103 = vector.shape_cast %100 : vector<8x352xbf16> to vector<1x8x352xbf16>
    tpu.vector_store %arg6[%c0_119, %c24_120, %c0_121], %103 {strides = array<i32>} : memref<2x56x352xbf16, #tpu.memory_space<vmem>>, vector<1x8x352xbf16>,
    %c0_122 = arith.constant 0 : index
    %c0_123 = arith.constant 0 : index
    %c0_124 = arith.constant 0 : index
    %c48_125 = arith.constant 48 : index
    %104 = vector.load %arg2[%c0_122, %c0_123, %c0_124, %c48_125] : memref<1x1x8x506xbf16, #tpu.memory_space<vmem>>, vector<1x1x8x352xbf16>
    %105 = vector.shape_cast %104 : vector<1x1x8x352xbf16> to vector<8x352xbf16>
    %c0_126 = arith.constant 0 : index
    %c32_127 = arith.constant 32 : index
    %c0_128 = arith.constant 0 : index
    %106 = vector.load %arg6[%c0_126, %c32_127, %c0_128] : memref<2x56x352xbf16, #tpu.memory_space<vmem>>, vector<1x8x352xbf16>
    %107 = vector.shape_cast %106 : vector<1x8x352xbf16> to vector<8x352xbf16>
    %108 = vector.shape_cast %105 : vector<8x352xbf16> to vector<1x8x352xbf16>
    tpu.vector_store %arg6[%c0_126, %c32_127, %c0_128], %108 {strides = array<i32>} : memref<2x56x352xbf16, #tpu.memory_space<vmem>>, vector<1x8x352xbf16>,
    %c0_129 = arith.constant 0 : index
    %c0_130 = arith.constant 0 : index
    %c0_131 = arith.constant 0 : index
    %c49 = arith.constant 49 : index
    %109 = vector.load %arg2[%c0_129, %c0_130, %c0_131, %c49] : memref<1x1x8x506xbf16, #tpu.memory_space<vmem>>, vector<1x1x8x352xbf16>
    %110 = vector.shape_cast %109 : vector<1x1x8x352xbf16> to vector<8x352xbf16>
    %c0_132 = arith.constant 0 : index
    %c40_133 = arith.constant 40 : index
    %c0_134 = arith.constant 0 : index
    %111 = vector.load %arg6[%c0_132, %c40_133, %c0_134] : memref<2x56x352xbf16, #tpu.memory_space<vmem>>, vector<1x8x352xbf16>
    %112 = vector.shape_cast %111 : vector<1x8x352xbf16> to vector<8x352xbf16>
    %113 = vector.shape_cast %110 : vector<8x352xbf16> to vector<1x8x352xbf16>
    tpu.vector_store %arg6[%c0_132, %c40_133, %c0_134], %113 {strides = array<i32>} : memref<2x56x352xbf16, #tpu.memory_space<vmem>>, vector<1x8x352xbf16>,
    %c0_135 = arith.constant 0 : index
    %c0_136 = arith.constant 0 : index
    %c0_137 = arith.constant 0 : index
    %c50 = arith.constant 50 : index
    %114 = vector.load %arg2[%c0_135, %c0_136, %c0_137, %c50] : memref<1x1x8x506xbf16, #tpu.memory_space<vmem>>, vector<1x1x8x352xbf16>
    %115 = vector.shape_cast %114 : vector<1x1x8x352xbf16> to vector<8x352xbf16>
    %c0_138 = arith.constant 0 : index
    %c48_139 = arith.constant 48 : index
    %c0_140 = arith.constant 0 : index
    %116 = vector.load %arg6[%c0_138, %c48_139, %c0_140] : memref<2x56x352xbf16, #tpu.memory_space<vmem>>, vector<1x8x352xbf16>
    %117 = vector.shape_cast %116 : vector<1x8x352xbf16> to vector<8x352xbf16>
    %118 = vector.shape_cast %115 : vector<8x352xbf16> to vector<1x8x352xbf16>
    tpu.vector_store %arg6[%c0_138, %c48_139, %c0_140], %118 {strides = array<i32>} : memref<2x56x352xbf16, #tpu.memory_space<vmem>>, vector<1x8x352xbf16>,
    %c2_141 = arith.constant 2 : index
    %c0_142 = arith.constant 0 : index
    %c0_143 = arith.constant 0 : index
    %119 = vector.load %arg3[%c2_141, %c0_142, %c0_143] : memref<7x16x56xbf16, #tpu.memory_space<vmem>>, vector<1x16x56xbf16>
    %120 = vector.shape_cast %119 : vector<1x16x56xbf16> to vector<16x56xbf16>
    %c0_144 = arith.constant 0 : index
    %c0_145 = arith.constant 0 : index
    %c0_146 = arith.constant 0 : index
    %121 = vector.load %arg6[%c0_144, %c0_145, %c0_146] : memref<2x56x352xbf16, #tpu.memory_space<vmem>>, vector<1x56x352xbf16>
    %122 = vector.shape_cast %121 : vector<1x56x352xbf16> to vector<56x352xbf16>
    %cst_147 = arith.constant dense<0.000000e+00> : vector<16x352xf32>
    %123 = tpu.matmul %120, %122, %cst_147 {dimension_numbers = #tpu.dot_dimension_numbers<[1], [0], [0], [1], [0, 0, 1, 1], [], []>} : vector<16x56xbf16>, vector<56x352xbf16>, vector<16x352xf32> -> vector<16x352xf32>
    %c0_148 = arith.constant 0 : index
    %c0_149 = arith.constant 0 : index
    %124 = vector.load %arg7[%c0_148, %c0_149] : memref<16x352xf32, #tpu.memory_space<vmem>>, vector<16x352xf32>
    %125 = arith.addf %124, %123 : vector<16x352xf32>
    %c0_150 = arith.constant 0 : index
    %c0_151 = arith.constant 0 : index
    %126 = vector.load %arg7[%c0_150, %c0_151] : memref<16x352xf32, #tpu.memory_space<vmem>>, vector<16x352xf32>
    tpu.vector_store %arg7[%c0_150, %c0_151], %125 {strides = array<i32>} : memref<16x352xf32, #tpu.memory_space<vmem>>, vector<16x352xf32>,
    %c0_152 = arith.constant 0 : index
    %c0_153 = arith.constant 0 : index
    %c0_154 = arith.constant 0 : index
    %c66 = arith.constant 66 : index
    %127 = vector.load %arg2[%c0_152, %c0_153, %c0_154, %c66] : memref<1x1x8x506xbf16, #tpu.memory_space<vmem>>, vector<1x1x8x352xbf16>
    %128 = vector.shape_cast %127 : vector<1x1x8x352xbf16> to vector<8x352xbf16>
    %c1_155 = arith.constant 1 : index
    %c0_156 = arith.constant 0 : index
    %c0_157 = arith.constant 0 : index
    %129 = vector.load %arg6[%c1_155, %c0_156, %c0_157] : memref<2x56x352xbf16, #tpu.memory_space<vmem>>, vector<1x8x352xbf16>
    %130 = vector.shape_cast %129 : vector<1x8x352xbf16> to vector<8x352xbf16>
    %131 = vector.shape_cast %128 : vector<8x352xbf16> to vector<1x8x352xbf16>
    tpu.vector_store %arg6[%c1_155, %c0_156, %c0_157], %131 {strides = array<i32>} : memref<2x56x352xbf16, #tpu.memory_space<vmem>>, vector<1x8x352xbf16>,
    %c0_158 = arith.constant 0 : index
    %c0_159 = arith.constant 0 : index
    %c0_160 = arith.constant 0 : index
    %c67 = arith.constant 67 : index
    %132 = vector.load %arg2[%c0_158, %c0_159, %c0_160, %c67] : memref<1x1x8x506xbf16, #tpu.memory_space<vmem>>, vector<1x1x8x352xbf16>
    %133 = vector.shape_cast %132 : vector<1x1x8x352xbf16> to vector<8x352xbf16>
    %c1_161 = arith.constant 1 : index
    %c8_162 = arith.constant 8 : index
    %c0_163 = arith.constant 0 : index
    %134 = vector.load %arg6[%c1_161, %c8_162, %c0_163] : memref<2x56x352xbf16, #tpu.memory_space<vmem>>, vector<1x8x352xbf16>
    %135 = vector.shape_cast %134 : vector<1x8x352xbf16> to vector<8x352xbf16>
    %136 = vector.shape_cast %133 : vector<8x352xbf16> to vector<1x8x352xbf16>
    tpu.vector_store %arg6[%c1_161, %c8_162, %c0_163], %136 {strides = array<i32>} : memref<2x56x352xbf16, #tpu.memory_space<vmem>>, vector<1x8x352xbf16>,
    %c0_164 = arith.constant 0 : index
    %c0_165 = arith.constant 0 : index
    %c0_166 = arith.constant 0 : index
    %c68 = arith.constant 68 : index
    %137 = vector.load %arg2[%c0_164, %c0_165, %c0_166, %c68] : memref<1x1x8x506xbf16, #tpu.memory_space<vmem>>, vector<1x1x8x352xbf16>
    %138 = vector.shape_cast %137 : vector<1x1x8x352xbf16> to vector<8x352xbf16>
    %c1_167 = arith.constant 1 : index
    %c16_168 = arith.constant 16 : index
    %c0_169 = arith.constant 0 : index
    %139 = vector.load %arg6[%c1_167, %c16_168, %c0_169] : memref<2x56x352xbf16, #tpu.memory_space<vmem>>, vector<1x8x352xbf16>
    %140 = vector.shape_cast %139 : vector<1x8x352xbf16> to vector<8x352xbf16>
    %141 = vector.shape_cast %138 : vector<8x352xbf16> to vector<1x8x352xbf16>
    tpu.vector_store %arg6[%c1_167, %c16_168, %c0_169], %141 {strides = array<i32>} : memref<2x56x352xbf16, #tpu.memory_space<vmem>>, vector<1x8x352xbf16>,
    %c0_170 = arith.constant 0 : index
    %c0_171 = arith.constant 0 : index
    %c0_172 = arith.constant 0 : index
    %c69 = arith.constant 69 : index
    %142 = vector.load %arg2[%c0_170, %c0_171, %c0_172, %c69] : memref<1x1x8x506xbf16, #tpu.memory_space<vmem>>, vector<1x1x8x352xbf16>
    %143 = vector.shape_cast %142 : vector<1x1x8x352xbf16> to vector<8x352xbf16>
    %c1_173 = arith.constant 1 : index
    %c24_174 = arith.constant 24 : index
    %c0_175 = arith.constant 0 : index
    %144 = vector.load %arg6[%c1_173, %c24_174, %c0_175] : memref<2x56x352xbf16, #tpu.memory_space<vmem>>, vector<1x8x352xbf16>
    %145 = vector.shape_cast %144 : vector<1x8x352xbf16> to vector<8x352xbf16>
    %146 = vector.shape_cast %143 : vector<8x352xbf16> to vector<1x8x352xbf16>
    tpu.vector_store %arg6[%c1_173, %c24_174, %c0_175], %146 {strides = array<i32>} : memref<2x56x352xbf16, #tpu.memory_space<vmem>>, vector<1x8x352xbf16>,
    %c0_176 = arith.constant 0 : index
    %c0_177 = arith.constant 0 : index
    %c0_178 = arith.constant 0 : index
    %c70 = arith.constant 70 : index
    %147 = vector.load %arg2[%c0_176, %c0_177, %c0_178, %c70] : memref<1x1x8x506xbf16, #tpu.memory_space<vmem>>, vector<1x1x8x352xbf16>
    %148 = vector.shape_cast %147 : vector<1x1x8x352xbf16> to vector<8x352xbf16>
    %c1_179 = arith.constant 1 : index
    %c32_180 = arith.constant 32 : index
    %c0_181 = arith.constant 0 : index
    %149 = vector.load %arg6[%c1_179, %c32_180, %c0_181] : memref<2x56x352xbf16, #tpu.memory_space<vmem>>, vector<1x8x352xbf16>
    %150 = vector.shape_cast %149 : vector<1x8x352xbf16> to vector<8x352xbf16>
    %151 = vector.shape_cast %148 : vector<8x352xbf16> to vector<1x8x352xbf16>
    tpu.vector_store %arg6[%c1_179, %c32_180, %c0_181], %151 {strides = array<i32>} : memref<2x56x352xbf16, #tpu.memory_space<vmem>>, vector<1x8x352xbf16>,
    %c0_182 = arith.constant 0 : index
    %c0_183 = arith.constant 0 : index
    %c0_184 = arith.constant 0 : index
    %c71 = arith.constant 71 : index
    %152 = vector.load %arg2[%c0_182, %c0_183, %c0_184, %c71] : memref<1x1x8x506xbf16, #tpu.memory_space<vmem>>, vector<1x1x8x352xbf16>
    %153 = vector.shape_cast %152 : vector<1x1x8x352xbf16> to vector<8x352xbf16>
    %c1_185 = arith.constant 1 : index
    %c40_186 = arith.constant 40 : index
    %c0_187 = arith.constant 0 : index
    %154 = vector.load %arg6[%c1_185, %c40_186, %c0_187] : memref<2x56x352xbf16, #tpu.memory_space<vmem>>, vector<1x8x352xbf16>
    %155 = vector.shape_cast %154 : vector<1x8x352xbf16> to vector<8x352xbf16>
    %156 = vector.shape_cast %153 : vector<8x352xbf16> to vector<1x8x352xbf16>
    tpu.vector_store %arg6[%c1_185, %c40_186, %c0_187], %156 {strides = array<i32>} : memref<2x56x352xbf16, #tpu.memory_space<vmem>>, vector<1x8x352xbf16>,
    %c0_188 = arith.constant 0 : index
    %c0_189 = arith.constant 0 : index
    %c0_190 = arith.constant 0 : index
    %c72 = arith.constant 72 : index
    %157 = vector.load %arg2[%c0_188, %c0_189, %c0_190, %c72] : memref<1x1x8x506xbf16, #tpu.memory_space<vmem>>, vector<1x1x8x352xbf16>
    %158 = vector.shape_cast %157 : vector<1x1x8x352xbf16> to vector<8x352xbf16>
    %c1_191 = arith.constant 1 : index
    %c48_192 = arith.constant 48 : index
    %c0_193 = arith.constant 0 : index
    %159 = vector.load %arg6[%c1_191, %c48_192, %c0_193] : memref<2x56x352xbf16, #tpu.memory_space<vmem>>, vector<1x8x352xbf16>
    %160 = vector.shape_cast %159 : vector<1x8x352xbf16> to vector<8x352xbf16>
    %161 = vector.shape_cast %158 : vector<8x352xbf16> to vector<1x8x352xbf16>
    tpu.vector_store %arg6[%c1_191, %c48_192, %c0_193], %161 {strides = array<i32>} : memref<2x56x352xbf16, #tpu.memory_space<vmem>>, vector<1x8x352xbf16>,
    %c3_194 = arith.constant 3 : index
    %c0_195 = arith.constant 0 : index
    %c0_196 = arith.constant 0 : index
    %162 = vector.load %arg3[%c3_194, %c0_195, %c0_196] : memref<7x16x56xbf16, #tpu.memory_space<vmem>>, vector<1x16x56xbf16>
    %163 = vector.shape_cast %162 : vector<1x16x56xbf16> to vector<16x56xbf16>
    %c1_197 = arith.constant 1 : index
    %c0_198 = arith.constant 0 : index
    %c0_199 = arith.constant 0 : index
    %164 = vector.load %arg6[%c1_197, %c0_198, %c0_199] : memref<2x56x352xbf16, #tpu.memory_space<vmem>>, vector<1x56x352xbf16>
    %165 = vector.shape_cast %164 : vector<1x56x352xbf16> to vector<56x352xbf16>
    %cst_200 = arith.constant dense<0.000000e+00> : vector<16x352xf32>
    %166 = tpu.matmul %163, %165, %cst_200 {dimension_numbers = #tpu.dot_dimension_numbers<[1], [0], [0], [1], [0, 0, 1, 1], [], []>} : vector<16x56xbf16>, vector<56x352xbf16>, vector<16x352xf32> -> vector<16x352xf32>
    %c0_201 = arith.constant 0 : index
    %c0_202 = arith.constant 0 : index
    %167 = vector.load %arg7[%c0_201, %c0_202] : memref<16x352xf32, #tpu.memory_space<vmem>>, vector<16x352xf32>
    %168 = arith.addf %167, %166 : vector<16x352xf32>
    %c0_203 = arith.constant 0 : index
    %c0_204 = arith.constant 0 : index
    %169 = vector.load %arg7[%c0_203, %c0_204] : memref<16x352xf32, #tpu.memory_space<vmem>>, vector<16x352xf32>
    tpu.vector_store %arg7[%c0_203, %c0_204], %168 {strides = array<i32>} : memref<16x352xf32, #tpu.memory_space<vmem>>, vector<16x352xf32>,
    %c0_205 = arith.constant 0 : index
    %c0_206 = arith.constant 0 : index
    %c0_207 = arith.constant 0 : index
    %c88 = arith.constant 88 : index
    %170 = vector.load %arg2[%c0_205, %c0_206, %c0_207, %c88] : memref<1x1x8x506xbf16, #tpu.memory_space<vmem>>, vector<1x1x8x352xbf16>
    %171 = vector.shape_cast %170 : vector<1x1x8x352xbf16> to vector<8x352xbf16>
    %c0_208 = arith.constant 0 : index
    %c0_209 = arith.constant 0 : index
    %c0_210 = arith.constant 0 : index
    %172 = vector.load %arg6[%c0_208, %c0_209, %c0_210] : memref<2x56x352xbf16, #tpu.memory_space<vmem>>, vector<1x8x352xbf16>
    %173 = vector.shape_cast %172 : vector<1x8x352xbf16> to vector<8x352xbf16>
    %174 = vector.shape_cast %171 : vector<8x352xbf16> to vector<1x8x352xbf16>
    tpu.vector_store %arg6[%c0_208, %c0_209, %c0_210], %174 {strides = array<i32>} : memref<2x56x352xbf16, #tpu.memory_space<vmem>>, vector<1x8x352xbf16>,
    %c0_211 = arith.constant 0 : index
    %c0_212 = arith.constant 0 : index
    %c0_213 = arith.constant 0 : index
    %c89 = arith.constant 89 : index
    %175 = vector.load %arg2[%c0_211, %c0_212, %c0_213, %c89] : memref<1x1x8x506xbf16, #tpu.memory_space<vmem>>, vector<1x1x8x352xbf16>
    %176 = vector.shape_cast %175 : vector<1x1x8x352xbf16> to vector<8x352xbf16>
    %c0_214 = arith.constant 0 : index
    %c8_215 = arith.constant 8 : index
    %c0_216 = arith.constant 0 : index
    %177 = vector.load %arg6[%c0_214, %c8_215, %c0_216] : memref<2x56x352xbf16, #tpu.memory_space<vmem>>, vector<1x8x352xbf16>
    %178 = vector.shape_cast %177 : vector<1x8x352xbf16> to vector<8x352xbf16>
    %179 = vector.shape_cast %176 : vector<8x352xbf16> to vector<1x8x352xbf16>
    tpu.vector_store %arg6[%c0_214, %c8_215, %c0_216], %179 {strides = array<i32>} : memref<2x56x352xbf16, #tpu.memory_space<vmem>>, vector<1x8x352xbf16>,
    %c0_217 = arith.constant 0 : index
    %c0_218 = arith.constant 0 : index
    %c0_219 = arith.constant 0 : index
    %c90 = arith.constant 90 : index
    %180 = vector.load %arg2[%c0_217, %c0_218, %c0_219, %c90] : memref<1x1x8x506xbf16, #tpu.memory_space<vmem>>, vector<1x1x8x352xbf16>
    %181 = vector.shape_cast %180 : vector<1x1x8x352xbf16> to vector<8x352xbf16>
    %c0_220 = arith.constant 0 : index
    %c16_221 = arith.constant 16 : index
    %c0_222 = arith.constant 0 : index
    %182 = vector.load %arg6[%c0_220, %c16_221, %c0_222] : memref<2x56x352xbf16, #tpu.memory_space<vmem>>, vector<1x8x352xbf16>
    %183 = vector.shape_cast %182 : vector<1x8x352xbf16> to vector<8x352xbf16>
    %184 = vector.shape_cast %181 : vector<8x352xbf16> to vector<1x8x352xbf16>
    tpu.vector_store %arg6[%c0_220, %c16_221, %c0_222], %184 {strides = array<i32>} : memref<2x56x352xbf16, #tpu.memory_space<vmem>>, vector<1x8x352xbf16>,
    %c0_223 = arith.constant 0 : index
    %c0_224 = arith.constant 0 : index
    %c0_225 = arith.constant 0 : index
    %c91 = arith.constant 91 : index
    %185 = vector.load %arg2[%c0_223, %c0_224, %c0_225, %c91] : memref<1x1x8x506xbf16, #tpu.memory_space<vmem>>, vector<1x1x8x352xbf16>
    %186 = vector.shape_cast %185 : vector<1x1x8x352xbf16> to vector<8x352xbf16>
    %c0_226 = arith.constant 0 : index
    %c24_227 = arith.constant 24 : index
    %c0_228 = arith.constant 0 : index
    %187 = vector.load %arg6[%c0_226, %c24_227, %c0_228] : memref<2x56x352xbf16, #tpu.memory_space<vmem>>, vector<1x8x352xbf16>
    %188 = vector.shape_cast %187 : vector<1x8x352xbf16> to vector<8x352xbf16>
    %189 = vector.shape_cast %186 : vector<8x352xbf16> to vector<1x8x352xbf16>
    tpu.vector_store %arg6[%c0_226, %c24_227, %c0_228], %189 {strides = array<i32>} : memref<2x56x352xbf16, #tpu.memory_space<vmem>>, vector<1x8x352xbf16>,
    %c0_229 = arith.constant 0 : index
    %c0_230 = arith.constant 0 : index
    %c0_231 = arith.constant 0 : index
    %c92 = arith.constant 92 : index
    %190 = vector.load %arg2[%c0_229, %c0_230, %c0_231, %c92] : memref<1x1x8x506xbf16, #tpu.memory_space<vmem>>, vector<1x1x8x352xbf16>
    %191 = vector.shape_cast %190 : vector<1x1x8x352xbf16> to vector<8x352xbf16>
    %c0_232 = arith.constant 0 : index
    %c32_233 = arith.constant 32 : index
    %c0_234 = arith.constant 0 : index
    %192 = vector.load %arg6[%c0_232, %c32_233, %c0_234] : memref<2x56x352xbf16, #tpu.memory_space<vmem>>, vector<1x8x352xbf16>
    %193 = vector.shape_cast %192 : vector<1x8x352xbf16> to vector<8x352xbf16>
    %194 = vector.shape_cast %191 : vector<8x352xbf16> to vector<1x8x352xbf16>
    tpu.vector_store %arg6[%c0_232, %c32_233, %c0_234], %194 {strides = array<i32>} : memref<2x56x352xbf16, #tpu.memory_space<vmem>>, vector<1x8x352xbf16>,
    %c0_235 = arith.constant 0 : index
    %c0_236 = arith.constant 0 : index
    %c0_237 = arith.constant 0 : index
    %c93 = arith.constant 93 : index
    %195 = vector.load %arg2[%c0_235, %c0_236, %c0_237, %c93] : memref<1x1x8x506xbf16, #tpu.memory_space<vmem>>, vector<1x1x8x352xbf16>
    %196 = vector.shape_cast %195 : vector<1x1x8x352xbf16> to vector<8x352xbf16>
    %c0_238 = arith.constant 0 : index
    %c40_239 = arith.constant 40 : index
    %c0_240 = arith.constant 0 : index
    %197 = vector.load %arg6[%c0_238, %c40_239, %c0_240] : memref<2x56x352xbf16, #tpu.memory_space<vmem>>, vector<1x8x352xbf16>
    %198 = vector.shape_cast %197 : vector<1x8x352xbf16> to vector<8x352xbf16>
    %199 = vector.shape_cast %196 : vector<8x352xbf16> to vector<1x8x352xbf16>
    tpu.vector_store %arg6[%c0_238, %c40_239, %c0_240], %199 {strides = array<i32>} : memref<2x56x352xbf16, #tpu.memory_space<vmem>>, vector<1x8x352xbf16>,
    %c0_241 = arith.constant 0 : index
    %c0_242 = arith.constant 0 : index
    %c0_243 = arith.constant 0 : index
    %c94 = arith.constant 94 : index
    %200 = vector.load %arg2[%c0_241, %c0_242, %c0_243, %c94] : memref<1x1x8x506xbf16, #tpu.memory_space<vmem>>, vector<1x1x8x352xbf16>
    %201 = vector.shape_cast %200 : vector<1x1x8x352xbf16> to vector<8x352xbf16>
    %c0_244 = arith.constant 0 : index
    %c48_245 = arith.constant 48 : index
    %c0_246 = arith.constant 0 : index
    %202 = vector.load %arg6[%c0_244, %c48_245, %c0_246] : memref<2x56x352xbf16, #tpu.memory_space<vmem>>, vector<1x8x352xbf16>
    %203 = vector.shape_cast %202 : vector<1x8x352xbf16> to vector<8x352xbf16>
    %204 = vector.shape_cast %201 : vector<8x352xbf16> to vector<1x8x352xbf16>
    tpu.vector_store %arg6[%c0_244, %c48_245, %c0_246], %204 {strides = array<i32>} : memref<2x56x352xbf16, #tpu.memory_space<vmem>>, vector<1x8x352xbf16>,
    %c4_247 = arith.constant 4 : index
    %c0_248 = arith.constant 0 : index
    %c0_249 = arith.constant 0 : index
    %205 = vector.load %arg3[%c4_247, %c0_248, %c0_249] : memref<7x16x56xbf16, #tpu.memory_space<vmem>>, vector<1x16x56xbf16>
    %206 = vector.shape_cast %205 : vector<1x16x56xbf16> to vector<16x56xbf16>
    %c0_250 = arith.constant 0 : index
    %c0_251 = arith.constant 0 : index
    %c0_252 = arith.constant 0 : index
    %207 = vector.load %arg6[%c0_250, %c0_251, %c0_252] : memref<2x56x352xbf16, #tpu.memory_space<vmem>>, vector<1x56x352xbf16>
    %208 = vector.shape_cast %207 : vector<1x56x352xbf16> to vector<56x352xbf16>
    %cst_253 = arith.constant dense<0.000000e+00> : vector<16x352xf32>
    %209 = tpu.matmul %206, %208, %cst_253 {dimension_numbers = #tpu.dot_dimension_numbers<[1], [0], [0], [1], [0, 0, 1, 1], [], []>} : vector<16x56xbf16>, vector<56x352xbf16>, vector<16x352xf32> -> vector<16x352xf32>
    %c0_254 = arith.constant 0 : index
    %c0_255 = arith.constant 0 : index
    %210 = vector.load %arg7[%c0_254, %c0_255] : memref<16x352xf32, #tpu.memory_space<vmem>>, vector<16x352xf32>
    %211 = arith.addf %210, %209 : vector<16x352xf32>
    %c0_256 = arith.constant 0 : index
    %c0_257 = arith.constant 0 : index
    %212 = vector.load %arg7[%c0_256, %c0_257] : memref<16x352xf32, #tpu.memory_space<vmem>>, vector<16x352xf32>
    tpu.vector_store %arg7[%c0_256, %c0_257], %211 {strides = array<i32>} : memref<16x352xf32, #tpu.memory_space<vmem>>, vector<16x352xf32>,
    %c0_258 = arith.constant 0 : index
    %c0_259 = arith.constant 0 : index
    %c0_260 = arith.constant 0 : index
    %c110 = arith.constant 110 : index
    %213 = vector.load %arg2[%c0_258, %c0_259, %c0_260, %c110] : memref<1x1x8x506xbf16, #tpu.memory_space<vmem>>, vector<1x1x8x352xbf16>
    %214 = vector.shape_cast %213 : vector<1x1x8x352xbf16> to vector<8x352xbf16>
    %c1_261 = arith.constant 1 : index
    %c0_262 = arith.constant 0 : index
    %c0_263 = arith.constant 0 : index
    %215 = vector.load %arg6[%c1_261, %c0_262, %c0_263] : memref<2x56x352xbf16, #tpu.memory_space<vmem>>, vector<1x8x352xbf16>
    %216 = vector.shape_cast %215 : vector<1x8x352xbf16> to vector<8x352xbf16>
    %217 = vector.shape_cast %214 : vector<8x352xbf16> to vector<1x8x352xbf16>
    tpu.vector_store %arg6[%c1_261, %c0_262, %c0_263], %217 {strides = array<i32>} : memref<2x56x352xbf16, #tpu.memory_space<vmem>>, vector<1x8x352xbf16>,
    %c0_264 = arith.constant 0 : index
    %c0_265 = arith.constant 0 : index
    %c0_266 = arith.constant 0 : index
    %c111 = arith.constant 111 : index
    %218 = vector.load %arg2[%c0_264, %c0_265, %c0_266, %c111] : memref<1x1x8x506xbf16, #tpu.memory_space<vmem>>, vector<1x1x8x352xbf16>
    %219 = vector.shape_cast %218 : vector<1x1x8x352xbf16> to vector<8x352xbf16>
    %c1_267 = arith.constant 1 : index
    %c8_268 = arith.constant 8 : index
    %c0_269 = arith.constant 0 : index
    %220 = vector.load %arg6[%c1_267, %c8_268, %c0_269] : memref<2x56x352xbf16, #tpu.memory_space<vmem>>, vector<1x8x352xbf16>
    %221 = vector.shape_cast %220 : vector<1x8x352xbf16> to vector<8x352xbf16>
    %222 = vector.shape_cast %219 : vector<8x352xbf16> to vector<1x8x352xbf16>
    tpu.vector_store %arg6[%c1_267, %c8_268, %c0_269], %222 {strides = array<i32>} : memref<2x56x352xbf16, #tpu.memory_space<vmem>>, vector<1x8x352xbf16>,
    %c0_270 = arith.constant 0 : index
    %c0_271 = arith.constant 0 : index
    %c0_272 = arith.constant 0 : index
    %c112 = arith.constant 112 : index
    %223 = vector.load %arg2[%c0_270, %c0_271, %c0_272, %c112] : memref<1x1x8x506xbf16, #tpu.memory_space<vmem>>, vector<1x1x8x352xbf16>
    %224 = vector.shape_cast %223 : vector<1x1x8x352xbf16> to vector<8x352xbf16>
    %c1_273 = arith.constant 1 : index
    %c16_274 = arith.constant 16 : index
    %c0_275 = arith.constant 0 : index
    %225 = vector.load %arg6[%c1_273, %c16_274, %c0_275] : memref<2x56x352xbf16, #tpu.memory_space<vmem>>, vector<1x8x352xbf16>
    %226 = vector.shape_cast %225 : vector<1x8x352xbf16> to vector<8x352xbf16>
    %227 = vector.shape_cast %224 : vector<8x352xbf16> to vector<1x8x352xbf16>
    tpu.vector_store %arg6[%c1_273, %c16_274, %c0_275], %227 {strides = array<i32>} : memref<2x56x352xbf16, #tpu.memory_space<vmem>>, vector<1x8x352xbf16>,
    %c0_276 = arith.constant 0 : index
    %c0_277 = arith.constant 0 : index
    %c0_278 = arith.constant 0 : index
    %c113 = arith.constant 113 : index
    %228 = vector.load %arg2[%c0_276, %c0_277, %c0_278, %c113] : memref<1x1x8x506xbf16, #tpu.memory_space<vmem>>, vector<1x1x8x352xbf16>
    %229 = vector.shape_cast %228 : vector<1x1x8x352xbf16> to vector<8x352xbf16>
    %c1_279 = arith.constant 1 : index
    %c24_280 = arith.constant 24 : index
    %c0_281 = arith.constant 0 : index
    %230 = vector.load %arg6[%c1_279, %c24_280, %c0_281] : memref<2x56x352xbf16, #tpu.memory_space<vmem>>, vector<1x8x352xbf16>
    %231 = vector.shape_cast %230 : vector<1x8x352xbf16> to vector<8x352xbf16>
    %232 = vector.shape_cast %229 : vector<8x352xbf16> to vector<1x8x352xbf16>
    tpu.vector_store %arg6[%c1_279, %c24_280, %c0_281], %232 {strides = array<i32>} : memref<2x56x352xbf16, #tpu.memory_space<vmem>>, vector<1x8x352xbf16>,
    %c0_282 = arith.constant 0 : index
    %c0_283 = arith.constant 0 : index
    %c0_284 = arith.constant 0 : index
    %c114 = arith.constant 114 : index
    %233 = vector.load %arg2[%c0_282, %c0_283, %c0_284, %c114] : memref<1x1x8x506xbf16, #tpu.memory_space<vmem>>, vector<1x1x8x352xbf16>
    %234 = vector.shape_cast %233 : vector<1x1x8x352xbf16> to vector<8x352xbf16>
    %c1_285 = arith.constant 1 : index
    %c32_286 = arith.constant 32 : index
    %c0_287 = arith.constant 0 : index
    %235 = vector.load %arg6[%c1_285, %c32_286, %c0_287] : memref<2x56x352xbf16, #tpu.memory_space<vmem>>, vector<1x8x352xbf16>
    %236 = vector.shape_cast %235 : vector<1x8x352xbf16> to vector<8x352xbf16>
    %237 = vector.shape_cast %234 : vector<8x352xbf16> to vector<1x8x352xbf16>
    tpu.vector_store %arg6[%c1_285, %c32_286, %c0_287], %237 {strides = array<i32>} : memref<2x56x352xbf16, #tpu.memory_space<vmem>>, vector<1x8x352xbf16>,
    %c0_288 = arith.constant 0 : index
    %c0_289 = arith.constant 0 : index
    %c0_290 = arith.constant 0 : index
    %c115 = arith.constant 115 : index
    %238 = vector.load %arg2[%c0_288, %c0_289, %c0_290, %c115] : memref<1x1x8x506xbf16, #tpu.memory_space<vmem>>, vector<1x1x8x352xbf16>
    %239 = vector.shape_cast %238 : vector<1x1x8x352xbf16> to vector<8x352xbf16>
    %c1_291 = arith.constant 1 : index
    %c40_292 = arith.constant 40 : index
    %c0_293 = arith.constant 0 : index
    %240 = vector.load %arg6[%c1_291, %c40_292, %c0_293] : memref<2x56x352xbf16, #tpu.memory_space<vmem>>, vector<1x8x352xbf16>
    %241 = vector.shape_cast %240 : vector<1x8x352xbf16> to vector<8x352xbf16>
    %242 = vector.shape_cast %239 : vector<8x352xbf16> to vector<1x8x352xbf16>
    tpu.vector_store %arg6[%c1_291, %c40_292, %c0_293], %242 {strides = array<i32>} : memref<2x56x352xbf16, #tpu.memory_space<vmem>>, vector<1x8x352xbf16>,
    %c0_294 = arith.constant 0 : index
    %c0_295 = arith.constant 0 : index
    %c0_296 = arith.constant 0 : index
    %c116 = arith.constant 116 : index
    %243 = vector.load %arg2[%c0_294, %c0_295, %c0_296, %c116] : memref<1x1x8x506xbf16, #tpu.memory_space<vmem>>, vector<1x1x8x352xbf16>
    %244 = vector.shape_cast %243 : vector<1x1x8x352xbf16> to vector<8x352xbf16>
    %c1_297 = arith.constant 1 : index
    %c48_298 = arith.constant 48 : index
    %c0_299 = arith.constant 0 : index
    %245 = vector.load %arg6[%c1_297, %c48_298, %c0_299] : memref<2x56x352xbf16, #tpu.memory_space<vmem>>, vector<1x8x352xbf16>
    %246 = vector.shape_cast %245 : vector<1x8x352xbf16> to vector<8x352xbf16>
    %247 = vector.shape_cast %244 : vector<8x352xbf16> to vector<1x8x352xbf16>
    tpu.vector_store %arg6[%c1_297, %c48_298, %c0_299], %247 {strides = array<i32>} : memref<2x56x352xbf16, #tpu.memory_space<vmem>>, vector<1x8x352xbf16>,
    %c5_300 = arith.constant 5 : index
    %c0_301 = arith.constant 0 : index
    %c0_302 = arith.constant 0 : index
    %248 = vector.load %arg3[%c5_300, %c0_301, %c0_302] : memref<7x16x56xbf16, #tpu.memory_space<vmem>>, vector<1x16x56xbf16>
    %249 = vector.shape_cast %248 : vector<1x16x56xbf16> to vector<16x56xbf16>
    %c1_303 = arith.constant 1 : index
    %c0_304 = arith.constant 0 : index
    %c0_305 = arith.constant 0 : index
    %250 = vector.load %arg6[%c1_303, %c0_304, %c0_305] : memref<2x56x352xbf16, #tpu.memory_space<vmem>>, vector<1x56x352xbf16>
    %251 = vector.shape_cast %250 : vector<1x56x352xbf16> to vector<56x352xbf16>
    %cst_306 = arith.constant dense<0.000000e+00> : vector<16x352xf32>
    %252 = tpu.matmul %249, %251, %cst_306 {dimension_numbers = #tpu.dot_dimension_numbers<[1], [0], [0], [1], [0, 0, 1, 1], [], []>} : vector<16x56xbf16>, vector<56x352xbf16>, vector<16x352xf32> -> vector<16x352xf32>
    %c0_307 = arith.constant 0 : index
    %c0_308 = arith.constant 0 : index
    %253 = vector.load %arg7[%c0_307, %c0_308] : memref<16x352xf32, #tpu.memory_space<vmem>>, vector<16x352xf32>
    %254 = arith.addf %253, %252 : vector<16x352xf32>
    %c0_309 = arith.constant 0 : index
    %c0_310 = arith.constant 0 : index
    %255 = vector.load %arg7[%c0_309, %c0_310] : memref<16x352xf32, #tpu.memory_space<vmem>>, vector<16x352xf32>
    tpu.vector_store %arg7[%c0_309, %c0_310], %254 {strides = array<i32>} : memref<16x352xf32, #tpu.memory_space<vmem>>, vector<16x352xf32>,
    %c0_311 = arith.constant 0 : index
    %c0_312 = arith.constant 0 : index
    %c0_313 = arith.constant 0 : index
    %c132 = arith.constant 132 : index
    %256 = vector.load %arg2[%c0_311, %c0_312, %c0_313, %c132] : memref<1x1x8x506xbf16, #tpu.memory_space<vmem>>, vector<1x1x8x352xbf16>
    %257 = vector.shape_cast %256 : vector<1x1x8x352xbf16> to vector<8x352xbf16>
    %c0_314 = arith.constant 0 : index
    %c0_315 = arith.constant 0 : index
    %c0_316 = arith.constant 0 : index
    %258 = vector.load %arg6[%c0_314, %c0_315, %c0_316] : memref<2x56x352xbf16, #tpu.memory_space<vmem>>, vector<1x8x352xbf16>
    %259 = vector.shape_cast %258 : vector<1x8x352xbf16> to vector<8x352xbf16>
    %260 = vector.shape_cast %257 : vector<8x352xbf16> to vector<1x8x352xbf16>
    tpu.vector_store %arg6[%c0_314, %c0_315, %c0_316], %260 {strides = array<i32>} : memref<2x56x352xbf16, #tpu.memory_space<vmem>>, vector<1x8x352xbf16>,
    %c0_317 = arith.constant 0 : index
    %c0_318 = arith.constant 0 : index
    %c0_319 = arith.constant 0 : index
    %c133 = arith.constant 133 : index
    %261 = vector.load %arg2[%c0_317, %c0_318, %c0_319, %c133] : memref<1x1x8x506xbf16, #tpu.memory_space<vmem>>, vector<1x1x8x352xbf16>
    %262 = vector.shape_cast %261 : vector<1x1x8x352xbf16> to vector<8x352xbf16>
    %c0_320 = arith.constant 0 : index
    %c8_321 = arith.constant 8 : index
    %c0_322 = arith.constant 0 : index
    %263 = vector.load %arg6[%c0_320, %c8_321, %c0_322] : memref<2x56x352xbf16, #tpu.memory_space<vmem>>, vector<1x8x352xbf16>
    %264 = vector.shape_cast %263 : vector<1x8x352xbf16> to vector<8x352xbf16>
    %265 = vector.shape_cast %262 : vector<8x352xbf16> to vector<1x8x352xbf16>
    tpu.vector_store %arg6[%c0_320, %c8_321, %c0_322], %265 {strides = array<i32>} : memref<2x56x352xbf16, #tpu.memory_space<vmem>>, vector<1x8x352xbf16>,
    %c0_323 = arith.constant 0 : index
    %c0_324 = arith.constant 0 : index
    %c0_325 = arith.constant 0 : index
    %c134 = arith.constant 134 : index
    %266 = vector.load %arg2[%c0_323, %c0_324, %c0_325, %c134] : memref<1x1x8x506xbf16, #tpu.memory_space<vmem>>, vector<1x1x8x352xbf16>
    %267 = vector.shape_cast %266 : vector<1x1x8x352xbf16> to vector<8x352xbf16>
    %c0_326 = arith.constant 0 : index
    %c16_327 = arith.constant 16 : index
    %c0_328 = arith.constant 0 : index
    %268 = vector.load %arg6[%c0_326, %c16_327, %c0_328] : memref<2x56x352xbf16, #tpu.memory_space<vmem>>, vector<1x8x352xbf16>
    %269 = vector.shape_cast %268 : vector<1x8x352xbf16> to vector<8x352xbf16>
    %270 = vector.shape_cast %267 : vector<8x352xbf16> to vector<1x8x352xbf16>
    tpu.vector_store %arg6[%c0_326, %c16_327, %c0_328], %270 {strides = array<i32>} : memref<2x56x352xbf16, #tpu.memory_space<vmem>>, vector<1x8x352xbf16>,
    %c0_329 = arith.constant 0 : index
    %c0_330 = arith.constant 0 : index
    %c0_331 = arith.constant 0 : index
    %c135 = arith.constant 135 : index
    %271 = vector.load %arg2[%c0_329, %c0_330, %c0_331, %c135] : memref<1x1x8x506xbf16, #tpu.memory_space<vmem>>, vector<1x1x8x352xbf16>
    %272 = vector.shape_cast %271 : vector<1x1x8x352xbf16> to vector<8x352xbf16>
    %c0_332 = arith.constant 0 : index
    %c24_333 = arith.constant 24 : index
    %c0_334 = arith.constant 0 : index
    %273 = vector.load %arg6[%c0_332, %c24_333, %c0_334] : memref<2x56x352xbf16, #tpu.memory_space<vmem>>, vector<1x8x352xbf16>
    %274 = vector.shape_cast %273 : vector<1x8x352xbf16> to vector<8x352xbf16>
    %275 = vector.shape_cast %272 : vector<8x352xbf16> to vector<1x8x352xbf16>
    tpu.vector_store %arg6[%c0_332, %c24_333, %c0_334], %275 {strides = array<i32>} : memref<2x56x352xbf16, #tpu.memory_space<vmem>>, vector<1x8x352xbf16>,
    %c0_335 = arith.constant 0 : index
    %c0_336 = arith.constant 0 : index
    %c0_337 = arith.constant 0 : index
    %c136 = arith.constant 136 : index
    %276 = vector.load %arg2[%c0_335, %c0_336, %c0_337, %c136] : memref<1x1x8x506xbf16, #tpu.memory_space<vmem>>, vector<1x1x8x352xbf16>
    %277 = vector.shape_cast %276 : vector<1x1x8x352xbf16> to vector<8x352xbf16>
    %c0_338 = arith.constant 0 : index
    %c32_339 = arith.constant 32 : index
    %c0_340 = arith.constant 0 : index
    %278 = vector.load %arg6[%c0_338, %c32_339, %c0_340] : memref<2x56x352xbf16, #tpu.memory_space<vmem>>, vector<1x8x352xbf16>
    %279 = vector.shape_cast %278 : vector<1x8x352xbf16> to vector<8x352xbf16>
    %280 = vector.shape_cast %277 : vector<8x352xbf16> to vector<1x8x352xbf16>
    tpu.vector_store %arg6[%c0_338, %c32_339, %c0_340], %280 {strides = array<i32>} : memref<2x56x352xbf16, #tpu.memory_space<vmem>>, vector<1x8x352xbf16>,
    %c0_341 = arith.constant 0 : index
    %c0_342 = arith.constant 0 : index
    %c0_343 = arith.constant 0 : index
    %c137 = arith.constant 137 : index
    %281 = vector.load %arg2[%c0_341, %c0_342, %c0_343, %c137] : memref<1x1x8x506xbf16, #tpu.memory_space<vmem>>, vector<1x1x8x352xbf16>
    %282 = vector.shape_cast %281 : vector<1x1x8x352xbf16> to vector<8x352xbf16>
    %c0_344 = arith.constant 0 : index
    %c40_345 = arith.constant 40 : index
    %c0_346 = arith.constant 0 : index
    %283 = vector.load %arg6[%c0_344, %c40_345, %c0_346] : memref<2x56x352xbf16, #tpu.memory_space<vmem>>, vector<1x8x352xbf16>
    %284 = vector.shape_cast %283 : vector<1x8x352xbf16> to vector<8x352xbf16>
    %285 = vector.shape_cast %282 : vector<8x352xbf16> to vector<1x8x352xbf16>
    tpu.vector_store %arg6[%c0_344, %c40_345, %c0_346], %285 {strides = array<i32>} : memref<2x56x352xbf16, #tpu.memory_space<vmem>>, vector<1x8x352xbf16>,
    %c0_347 = arith.constant 0 : index
    %c0_348 = arith.constant 0 : index
    %c0_349 = arith.constant 0 : index
    %c138 = arith.constant 138 : index
    %286 = vector.load %arg2[%c0_347, %c0_348, %c0_349, %c138] : memref<1x1x8x506xbf16, #tpu.memory_space<vmem>>, vector<1x1x8x352xbf16>
    %287 = vector.shape_cast %286 : vector<1x1x8x352xbf16> to vector<8x352xbf16>
    %c0_350 = arith.constant 0 : index
    %c48_351 = arith.constant 48 : index
    %c0_352 = arith.constant 0 : index
    %288 = vector.load %arg6[%c0_350, %c48_351, %c0_352] : memref<2x56x352xbf16, #tpu.memory_space<vmem>>, vector<1x8x352xbf16>
    %289 = vector.shape_cast %288 : vector<1x8x352xbf16> to vector<8x352xbf16>
    %290 = vector.shape_cast %287 : vector<8x352xbf16> to vector<1x8x352xbf16>
    tpu.vector_store %arg6[%c0_350, %c48_351, %c0_352], %290 {strides = array<i32>} : memref<2x56x352xbf16, #tpu.memory_space<vmem>>, vector<1x8x352xbf16>,
    %c6_353 = arith.constant 6 : index
    %c0_354 = arith.constant 0 : index
    %c0_355 = arith.constant 0 : index
    %291 = vector.load %arg3[%c6_353, %c0_354, %c0_355] : memref<7x16x56xbf16, #tpu.memory_space<vmem>>, vector<1x16x56xbf16>
    %292 = vector.shape_cast %291 : vector<1x16x56xbf16> to vector<16x56xbf16>
    %c0_356 = arith.constant 0 : index
    %c0_357 = arith.constant 0 : index
    %c0_358 = arith.constant 0 : index
    %293 = vector.load %arg6[%c0_356, %c0_357, %c0_358] : memref<2x56x352xbf16, #tpu.memory_space<vmem>>, vector<1x56x352xbf16>
    %294 = vector.shape_cast %293 : vector<1x56x352xbf16> to vector<56x352xbf16>
    %cst_359 = arith.constant dense<0.000000e+00> : vector<16x352xf32>
    %295 = tpu.matmul %292, %294, %cst_359 {dimension_numbers = #tpu.dot_dimension_numbers<[1], [0], [0], [1], [0, 0, 1, 1], [], []>} : vector<16x56xbf16>, vector<56x352xbf16>, vector<16x352xf32> -> vector<16x352xf32>
    %c0_360 = arith.constant 0 : index
    %c0_361 = arith.constant 0 : index
    %296 = vector.load %arg7[%c0_360, %c0_361] : memref<16x352xf32, #tpu.memory_space<vmem>>, vector<16x352xf32>
    %297 = arith.addf %296, %295 : vector<16x352xf32>
    %c0_362 = arith.constant 0 : index
    %c0_363 = arith.constant 0 : index
    %298 = vector.load %arg7[%c0_362, %c0_363] : memref<16x352xf32, #tpu.memory_space<vmem>>, vector<16x352xf32>
    tpu.vector_store %arg7[%c0_362, %c0_363], %297 {strides = array<i32>} : memref<16x352xf32, #tpu.memory_space<vmem>>, vector<16x352xf32>,
    %c0_364 = arith.constant 0 : index
    %c0_365 = arith.constant 0 : index
    %299 = vector.load %arg7[%c0_364, %c0_365] : memref<16x352xf32, #tpu.memory_space<vmem>>, vector<16x352xf32>
    %c0_366 = arith.constant 0 : index
    %c0_367 = arith.constant 0 : index
    %300 = vector.load %arg4[%c0_366, %c0_367] : memref<16x1xf32, #tpu.memory_space<vmem>>, vector<16x1xf32>
    %301 = vector.broadcast %300 : vector<16x1xf32> to vector<16x352xf32>
    %302 = arith.addf %299, %301 : vector<16x352xf32>
    %cst_368 = arith.constant 0.000000e+00 : f32
    %303 = vector.broadcast %cst_368 : f32 to vector<16x352xf32>
    %304 = arith.maximumf %302, %303 : vector<16x352xf32>
    %c0_369 = arith.constant 0 : index
    %c0_370 = arith.constant 0 : index
    %c0_371 = arith.constant 0 : index
    %305 = vector.load %arg5[%c0_369, %c0_370, %c0_371] : memref<1x16x352xf32, #tpu.memory_space<vmem>>, vector<1x16x352xf32>
    %306 = vector.shape_cast %305 : vector<1x16x352xf32> to vector<16x352xf32>
    %307 = vector.shape_cast %304 : vector<16x352xf32> to vector<1x16x352xf32>
    tpu.vector_store %arg5[%c0_369, %c0_370, %c0_371], %307 {strides = array<i32>} : memref<1x16x352xf32, #tpu.memory_space<vmem>>, vector<1x16x352xf32>,
    return
  }
  func.func @transform_0(%arg0: i32, %arg1: i32) -> (i32, i32, i32, i32) {
    %c0_i32 = arith.constant 0 : i32
    %c0_i32_0 = arith.constant 0 : i32
    %c0_i32_1 = arith.constant 0 : i32
    return %arg0, %arg1, %c0_i32, %c0_i32_0 : i32, i32, i32, i32
  }
  func.func @transform_1(%arg0: i32, %arg1: i32) -> (i32, i32, i32) {
    %c0_i32 = arith.constant 0 : i32
    %c0_i32_0 = arith.constant 0 : i32
    %c0_i32_1 = arith.constant 0 : i32
    %c0_i32_2 = arith.constant 0 : i32
    return %c0_i32, %c0_i32_0, %c0_i32_1 : i32, i32, i32
  }
  func.func @transform_2(%arg0: i32, %arg1: i32) -> (i32, i32) {
    %c0_i32 = arith.constant 0 : i32
    %c0_i32_0 = arith.constant 0 : i32
    %c0_i32_1 = arith.constant 0 : i32
    return %c0_i32, %c0_i32_0 : i32, i32
  }
  func.func @transform_3(%arg0: i32, %arg1: i32) -> (i32, i32, i32) {
    %c0_i32 = arith.constant 0 : i32
    %c0_i32_0 = arith.constant 0 : i32
    return %arg0, %c0_i32, %arg1 : i32, i32, i32
  }
}

</mosaic_0001>

<llo_original>
// kernel: tpu_custom_call.1
$region0: #{tpu_custom_call.1}
  #allocation0 [shape = 'u32[]', space=smem, size = 0x4, offset = 0x4, fixed_abs, tag = 'smem constant byte address 0x4 - core index']
  #allocation1 [shape = 'u32[144,128]{1,0:T(1,128)}', space=vmem, size = 0x12000, scoped, tag = 'internal scratch']
  #allocation2 [shape = 'bf16[2,56,352]{2,1,0:T(8,128)(2,1)}', space=vmem, size = 0x15000, scoped, tag = 'scratch operand']
  #allocation3 [shape = 'f32[16,352]{1,0:T(8,128)}', space=vmem, size = 0x6000, scoped, tag = 'scratch operand']
  %s0 = inlined_call_operand.hbm [shape: bf16[2,1,8,506], index: 0, kind: input, shape index: {}]
  %s1 = inlined_call_operand.hbm [shape: bf16[7,16,56], index: 1, kind: input, shape index: {}]
  %s2 = inlined_call_operand.vmem [shape: f32[16,1], index: 2, kind: input, shape index: {}]
  %s3 = inlined_call_operand.hbm [shape: f32[2,16,352], index: 3, kind: output, shape index: {}]
  %s4 = sld [smem:[#allocation0]]
  $region53: #{tpu_custom_call.1} parent=0
    _
  %s6 = ssub.s32 1, %s4
  %s7 = scalar_select 0, %s6, %s4
  $region1: #{tpu_custom_call.1} parent=0
    #allocation4 [shape = 'u8[16384]{0}', space=vmem, size = 0x4000, scoped, tag = 'input window, operand 0']
    #allocation5 [shape = 's32[2]{0}', space=sflag, size = 0x8, scoped, tag = 'scoped memory for tpu_custom_call.1']
    #allocation6 [shape = 's32[2]{0}', space=sflag, size = 0x8, scoped, tag = 'scoped memory for tpu_custom_call.1']
    #allocation7 [shape = 'u8[28672]{0}', space=vmem, size = 0x7000, scoped, tag = 'input window, operand 1, single buffered']
    #allocation8 [shape = 's32[1]{0}', space=sflag, size = 0x4, scoped, tag = 'scoped memory for tpu_custom_call.1']
    #allocation9 [shape = 'u8[49152]{0}', space=vmem, size = 0xc000, scoped, tag = 'output window, operand 0']
    %8 = vsyncpa [#allocation5], 0
    %s9 = scalar_lea.sflag [#allocation5], 1
    %10 = vsyncpa %s9, 0
    %11 = vsyncpa [#allocation8], 0
    %12 = vsyncpa [#allocation6], 0
    %s13 = scalar_lea.sflag [#allocation6], 1
    %14 = vsyncpa %s13, 0
    loop: start=0, step=1, limit=4
    $region2: #{tpu_custom_call.1} parent=1 // loop_pre_header
      _
    $region3: #{tpu_custom_call.1} parent=1 // loop_header
      %s16 = sphi 0, %s20
      %p17 = scmp.ge.s32.totalorder %s16, 4
      %s23 = sphi 0, %s35
      %s24 = sphi 0, %s31
      %s25 = sphi 0, %s23
      %s26 = sphi 0, %s24
      %s27 = sphi 0, %s25
      %s28 = sphi 0, %s26
      %s40 = sphi 0, %s42
      %s43 = sphi 0, %s40
      %s44 = sphi 0, %s43
      %s60 = sphi 0, %s44
      %s64 = sphi 0, %s64
      %s66 = sphi 0, %s64
      %s67 = sphi 0, %s66
      %s81 = sphi 0, %s67
      %s85 = sphi 0, %s85
      %s87 = sphi 0, %s85
      %s88 = sphi 0, %s87
      %s102 = sphi 0, %s88
      %s110 = sphi 0, %s112
      %s113 = sphi 0, %s110
      %s114 = sphi 0, %s113
      %s130 = sphi 0, %s114
    $region4: #{tpu_custom_call.1} parent=1 // loop_header_branch
      %19 = sbr.rel (%p17) target = $region8
    $region5: #{tpu_custom_call.1} parent=1 // loop_body
      %s21 = ssub.s32 %s16, 1
      %s22 = ssub.s32 %s16, 2
      %s29 = sadd.s32 1, %s24
      %p30 = scmp.ge.s32.totalorder %s29, 1
      %s31 = scalar_select %p30, 0, %s29
      %s32 = sadd.s32 1, %s23
      %s33 = scalar_select %p30, %s32, %s23
      %p34 = scmp.ge.s32.totalorder %s33, 2
      %s35 = scalar_select %p34, 0, %s33
      %s36 = ssub.s32 %s23, %s35
      %s37 = ssub.s32 %s24, %s31
      %s38 = sor.u32 %s36, %s37
      %p39 = scmp.eq.s32.totalorder %s38, 0
      %s41 = sadd.s32 %s40, 1
      %s42 = scalar_select %p39, %s40, %s41
      %p45 = pneg %p39
      %p46 = scmp.eq.s32.totalorder %s16, 1
      %p47 = por %p45, %p46
      %p48 = scmp.ne.s32.totalorder %s40, %s43
      %p49 = scmp.eq.s32.totalorder %s16, 0
      %p50 = por %p48, %p49
      %p51 = scmp.ne.s32.totalorder %s40, %s43
      %p52 = scmp.eq.s32.totalorder %s21, 1
      %p53 = por %p51, %p52
      %p54 = scmp.ne.s32.totalorder %s43, %s44
      %p55 = scmp.eq.s32.totalorder %s21, 0
      %p56 = por %p54, %p55
      %p57 = scmp.ne.s32.totalorder %s43, %s44
      %p58 = scmp.eq.s32.totalorder %s22, 1
      %p59 = por %p57, %p58
      %p61 = scmp.ne.s32.totalorder %s44, %s60
      %p62 = scmp.eq.s32.totalorder %s22, 0
      %p63 = por %p61, %p62
      %s65 = sadd.s32 %s64, 1
      %p68 = scmp.eq.s32.totalorder %s16, 1
      %p69 = scmp.ne.s32.totalorder %s64, %s66
      %p70 = scmp.eq.s32.totalorder %s16, 0
      %p71 = por %p69, %p70
      %p72 = scmp.ne.s32.totalorder %s64, %s66
      %p73 = scmp.eq.s32.totalorder %s21, 1
      %p74 = por %p72, %p73
      %p75 = scmp.ne.s32.totalorder %s66, %s67
      %p76 = scmp.eq.s32.totalorder %s21, 0
      %p77 = por %p75, %p76
      %p78 = scmp.ne.s32.totalorder %s66, %s67
      %p79 = scmp.eq.s32.totalorder %s22, 1
      %p80 = por %p78, %p79
      %p82 = scmp.ne.s32.totalorder %s67, %s81
      %p83 = scmp.eq.s32.totalorder %s22, 0
      %p84 = por %p82, %p83
      %s86 = sadd.s32 %s85, 1
      %p89 = scmp.eq.s32.totalorder %s16, 1
      %p90 = scmp.ne.s32.totalorder %s85, %s87
      %p91 = scmp.eq.s32.totalorder %s16, 0
      %p92 = por %p90, %p91
      %p93 = scmp.ne.s32.totalorder %s85, %s87
      %p94 = scmp.eq.s32.totalorder %s21, 1
      %p95 = por %p93, %p94
      %p96 = scmp.ne.s32.totalorder %s87, %s88
      %p97 = scmp.eq.s32.totalorder %s21, 0
      %p98 = por %p96, %p97
      %p99 = scmp.ne.s32.totalorder %s87, %s88
      %p100 = scmp.eq.s32.totalorder %s22, 1
      %p101 = por %p99, %p100
      %p103 = scmp.ne.s32.totalorder %s88, %s102
      %p104 = scmp.eq.s32.totalorder %s22, 0
      %p105 = por %p103, %p104
      %s106 = ssub.s32 %s23, %s35
      %s107 = ssub.s32 %s24, %s31
      %s108 = sor.u32 %s106, %s107
      %p109 = scmp.eq.s32.totalorder %s108, 0
      %s111 = sadd.s32 %s110, 1
      %s112 = scalar_select %p109, %s110, %s111
      %p115 = pneg %p109
      %p116 = scmp.eq.s32.totalorder %s16, 1
      %p117 = por %p115, %p116
      %p118 = scmp.ne.s32.totalorder %s110, %s113
      %p119 = scmp.eq.s32.totalorder %s16, 0
      %p120 = por %p118, %p119
      %p121 = scmp.ne.s32.totalorder %s110, %s113
      %p122 = scmp.eq.s32.totalorder %s21, 1
      %p123 = por %p121, %p122
      %p124 = scmp.ne.s32.totalorder %s113, %s114
      %p125 = scmp.eq.s32.totalorder %s21, 0
      %p126 = por %p124, %p125
      %p127 = scmp.ne.s32.totalorder %s113, %s114
      %p128 = scmp.eq.s32.totalorder %s22, 1
      %p129 = por %p127, %p128
      %p131 = scmp.ne.s32.totalorder %s114, %s130
      %p132 = scmp.eq.s32.totalorder %s22, 0
      %p133 = por %p131, %p132
      %p134 = scmp.le.s32.totalorder 1, %s16
      %p135 = scmp.lt.s32.totalorder %s16, 3
      %p136 = pnand %p134, %p135
      %p137 = pneg %p136
      // Predicated region
      $region9: #{tpu_custom_call.1} parent=5 // pred_check
        _
      $region10: #{tpu_custom_call.1} parent=5 // pred_check_branch
        %139 = sbr.rel (%p136) target = $region12
      $region11: #{tpu_custom_call.1} parent=5 // pred_region
        %s140 = ssub.s32 %s16, 1
        // Predicated region
        $region13: #{tpu_custom_call.1} parent=11 // pred_check
          %p141 = pneg %p77
        $region14: #{tpu_custom_call.1} parent=11 // pred_check_branch
          %143 = sbr.rel (%p141) target = $region16
        $region15: #{tpu_custom_call.1} parent=11 // pred_region
          %s145 = ssub.s32 896, 896
          %146 = vsyncadd [#allocation8], %s145
          %s147 = sshll.u32 [#allocation7], 4
          %s148 = int_to_ptr.vmem [resolvable:$true] %s147
          %153 = dma.hbm_to_vmem [thread:$0]  %s1, 896, %s148, [#allocation8], 64, 64, 4
        $region16: #{tpu_custom_call.1} parent=11 // pred_fallthru
          _
        // Predicated region
        $region17: #{tpu_custom_call.1} parent=11 // pred_check
          %p154 = pneg %p98
        $region18: #{tpu_custom_call.1} parent=11 // pred_check_branch
          %156 = sbr.rel (%p154) target = $region20
        $region19: #{tpu_custom_call.1} parent=11 // pred_region
          _
        $region20: #{tpu_custom_call.1} parent=11 // pred_fallthru
          _
      $region12: #{tpu_custom_call.1} parent=5 // pred_fallthru
        _
      %p157 = scmp.lt.s32.totalorder %s16, 2
      // Predicated region
      $region21: #{tpu_custom_call.1} parent=5 // pred_check
        %p158 = pneg %p157
      $region22: #{tpu_custom_call.1} parent=5 // pred_check_branch
        %160 = sbr.rel (%p158) target = $region24
      $region23: #{tpu_custom_call.1} parent=5 // pred_region
        // Predicated region
        $region25: #{tpu_custom_call.1} parent=23 // pred_check
          %p161 = pneg %p50
        $region26: #{tpu_custom_call.1} parent=23 // pred_check_branch
          %163 = sbr.rel (%p161) target = $region28
        $region27: #{tpu_custom_call.1} parent=23 // pred_region
          %s164 = sand.u32 %s40, 1
          %s165 = scalar_lea.sflag [#allocation5], %s164
          %s166 = sand.u32 %s40, 1
          %s167 = smul.addr %s166, 16
          %s168 = scalar_lea.vmem [#allocation4], %s167
          %s170 = ssub.s32 256, 256
          %171 = vsyncadd %s165, %s170
          %s172 = smul.addr %s24, 4
          %s173 = smul.addr %s23, 4
          %s174 = sadd.s32 %s172, %s173
          %s175 = smul.addr %s174, 64
          %s176 = scalar_lea.hbm %s0, %s175
          %s178 = sshll.u32 %s168, 4
          %s179 = int_to_ptr.vmem [resolvable:$true] %s178
          %181 = dma.hbm_to_vmem [thread:$0]  %s176, 256, %s179, %s165
        $region28: #{tpu_custom_call.1} parent=23 // pred_fallthru
          _
      $region24: #{tpu_custom_call.1} parent=5 // pred_fallthru
        _
      %p182 = scmp.le.s32.totalorder 1, %s16
      %p183 = scmp.lt.s32.totalorder %s16, 3
      %p184 = pnand %p182, %p183
      %p185 = pneg %p184
      // Predicated region
      $region29: #{tpu_custom_call.1} parent=5 // pred_check
        _
      $region30: #{tpu_custom_call.1} parent=5 // pred_check_branch
        %187 = sbr.rel (%p184) target = $region32
      $region31: #{tpu_custom_call.1} parent=5 // pred_region
        %s188 = ssub.s32 %s16, 1
        %s189 = sand.u32 %s43, 1
        %s190 = scalar_lea.sflag [#allocation5], %s189
        %s191 = sand.u32 %s43, 1
        %s192 = smul.addr %s191, 16
        %s193 = scalar_lea.vmem [#allocation4], %s192
        // Predicated region
        $region33: #{tpu_custom_call.1} parent=31 // pred_check
          %p194 = pneg %p56
        $region34: #{tpu_custom_call.1} parent=31 // pred_check_branch
          %196 = sbr.rel (%p194) target = $region36
        $region35: #{tpu_custom_call.1} parent=31 // pred_region
          %197 = dma.done %s190, 256
        $region36: #{tpu_custom_call.1} parent=31 // pred_fallthru
          _
        // Predicated region
        $region37: #{tpu_custom_call.1} parent=31 // pred_check
          %p198 = pneg %p77
        $region38: #{tpu_custom_call.1} parent=31 // pred_check_branch
          %200 = sbr.rel (%p198) target = $region40
        $region39: #{tpu_custom_call.1} parent=31 // pred_region
          %201 = dma.done [#allocation8], 896
        $region40: #{tpu_custom_call.1} parent=31 // pred_fallthru
          _
        %s202 = sand.u32 %s43, 1
        %s203 = scalar_lea.sflag [#allocation5], %s202
        %s204 = sand.u32 %s43, 1
        %s205 = smul.addr %s204, 16
        %s206 = scalar_lea.vmem [#allocation4], %s205
        %p207 = pneg %p56
        %p208 = pneg %p53
        %p209 = pneg %p77
        %p210 = pneg %p74
        %p211 = pneg %p98
        %p212 = pneg %p95
        %p213 = pneg %p126
        %p214 = pneg %p123
        %s215 = sand.u32 %s113, 1
        %s216 = scalar_lea.sflag [#allocation6], %s215
        %s217 = sand.u32 %s113, 1
        %s218 = smul.addr %s217, 48
        %s219 = scalar_lea.vmem [#allocation9], %s218
        %s220 = smul.u32 3, %s26
        %v222 = vld [vmem:[%s193] sm:$0xff]
        %v223 = vld [vmem:[%s193 + $0x8] sm:$0xf]
        %224 = vst [vmem:[#allocation2] sm:$0xff] %v222
        %vm225 = vcmask 781312
        %226 = vst.msk [vmem:[#allocation2 + $0x8] sm:$0xf] %vm225, %v223
        %v227 = vld [vmem:[%s193] sm:$0xff]
        %v228 = vld [vmem:[%s193 + $0x8] sm:$0xf]
        %231 = vrot.lane.b32.xlu0 %v227, 127
        %v232 = vpop.permute.xlu0 %231
        %233 = vrot.lane.b32.xlu0 %v228, 127
        %v234 = vpop.permute.xlu0 %233
        %v235 = vrot.slane %v232, 4
        %v236 = vrot.slane %v234, 4
        %vm237 = vcmask 1043456
        %v238 = vsel %vm237, %v235, %v236
        %vm239 = vcmask 1039360
        %v240 = vsel %vm239, %v232, %v238
        %243 = vst [vmem:[#allocation2 + $0xc] sm:$0xff] %v240
        %244 = vst.msk [vmem:[#allocation2 + $0x14] sm:$0xf] %vm225, %v234
        %v245 = vld [vmem:[%s193] sm:$0xff]
        %v246 = vld [vmem:[%s193 + $0x8] sm:$0xf]
        %249 = vrot.lane.b32.xlu0 %v245, 126
        %v250 = vpop.permute.xlu0 %249
        %251 = vrot.lane.b32.xlu0 %v246, 126
        %v252 = vpop.permute.xlu0 %251
        %v253 = vrot.slane %v250, 4
        %v254 = vrot.slane %v252, 4
        %v255 = vsel %vm237, %v253, %v254
        %vm256 = vcmask 1031168
        %v257 = vsel %vm256, %v250, %v255
        %260 = vst [vmem:[#allocation2 + $0x18] sm:$0xff] %v257
        %261 = vst.msk [vmem:[#allocation2 + $0x20] sm:$0xf] %vm225, %v252
        %v262 = vld [vmem:[%s193] sm:$0xff]
        %v263 = vld [vmem:[%s193 + $0x8] sm:$0xf]
        %266 = vrot.lane.b32.xlu0 %v262, 125
        %v267 = vpop.permute.xlu0 %266
        %268 = vrot.lane.b32.xlu0 %v263, 125
        %v269 = vpop.permute.xlu0 %268
        %v270 = vrot.slane %v267, 4
        %v271 = vrot.slane %v269, 4
        %v272 = vsel %vm237, %v270, %v271
        %vm273 = vcmask 1022976
        %v274 = vsel %vm273, %v267, %v272
        %277 = vst [vmem:[#allocation2 + $0x24] sm:$0xff] %v274
        %278 = vst.msk [vmem:[#allocation2 + $0x2c] sm:$0xf] %vm225, %v269
        %v279 = vld [vmem:[%s193] sm:$0xff]
        %v280 = vld [vmem:[%s193 + $0x8] sm:$0xf]
        %283 = vrot.lane.b32.xlu0 %v279, 124
        %v284 = vpop.permute.xlu0 %283
        %285 = vrot.lane.b32.xlu0 %v280, 124
        %v286 = vpop.permute.xlu0 %285
        %v287 = vrot.slane %v284, 4
        %v288 = vrot.slane %v286, 4
        %v289 = vsel %vm237, %v287, %v288
        %vm290 = vcmask 1014784
        %v291 = vsel %vm290, %v284, %v289
        %294 = vst [vmem:[#allocation2 + $0x30] sm:$0xff] %v291
        %295 = vst.msk [vmem:[#allocation2 + $0x38] sm:$0xf] %vm225, %v286
        %v296 = vld [vmem:[%s193] sm:$0xff]
        %v297 = vld [vmem:[%s193 + $0x8] sm:$0xf]
        %300 = vrot.lane.b32.xlu0 %v296, 123
        %v301 = vpop.permute.xlu0 %300
        %302 = vrot.lane.b32.xlu0 %v297, 123
        %v303 = vpop.permute.xlu0 %302
        %v304 = vrot.slane %v301, 4
        %v305 = vrot.slane %v303, 4
        %v306 = vsel %vm237, %v304, %v305
        %vm307 = vcmask 1006592
        %v308 = vsel %vm307, %v301, %v306
        %311 = vst [vmem:[#allocation2 + $0x3c] sm:$0xff] %v308
        %312 = vst.msk [vmem:[#allocation2 + $0x44] sm:$0xf] %vm225, %v303
        %v313 = vld [vmem:[%s193] sm:$0xff]
        %v314 = vld [vmem:[%s193 + $0x8] sm:$0xf]
        %317 = vrot.lane.b32.xlu0 %v313, 122
        %v318 = vpop.permute.xlu0 %317
        %319 = vrot.lane.b32.xlu0 %v314, 122
        %v320 = vpop.permute.xlu0 %319
        %v321 = vrot.slane %v318, 4
        %v322 = vrot.slane %v320, 4
        %v323 = vsel %vm237, %v321, %v322
        %vm324 = vcmask 998400
        %v325 = vsel %vm324, %v318, %v323
        %328 = vst [vmem:[#allocation2 + $0x48] sm:$0xff] %v325
        %329 = vst.msk [vmem:[#allocation2 + $0x50] sm:$0xf] %vm225, %v320
        %v330 = vld [vmem:[#allocation7] sm:$0xf]
        %v331 = vld [vmem:[#allocation7 + $0x4] sm:$0xf]
        %v332 = vld [vmem:[#allocation2] sm:$0xff]
        %v333 = vld [vmem:[#allocation2 + $0x8] sm:$0xf]
        %v334 = vld [vmem:[#allocation2 + $0xc] sm:$0xff]
        %v335 = vld [vmem:[#allocation2 + $0x14] sm:$0xf]
        %v336 = vld [vmem:[#allocation2 + $0x18] sm:$0xff]
        %v337 = vld [vmem:[#allocation2 + $0x20] sm:$0xf]
        %v338 = vld [vmem:[#allocation2 + $0x24] sm:$0xff]
        %v339 = vld [vmem:[#allocation2 + $0x2c] sm:$0xf]
        %v340 = vld [vmem:[#allocation2 + $0x30] sm:$0xff]
        %v341 = vld [vmem:[#allocation2 + $0x38] sm:$0xf]
        %v342 = vld [vmem:[#allocation2 + $0x3c] sm:$0xff]
        %v343 = vld [vmem:[#allocation2 + $0x44] sm:$0xf]
        %v344 = vld [vmem:[#allocation2 + $0x48] sm:$0xff]
        %v345 = vld [vmem:[#allocation2 + $0x50] sm:$0xf]
        %v348 = vunpack.c.l.b16 %v330
        %v349 = vunpack.c.l.b16 %v331
        %v350 = vpack.c.b16 %v349, %v348
        %v365 = vunpack.c.l.b16 %v332
        %v366 = vunpack.c.h.b16 %v332
        %v367 = vunpack.c.l.b16 %v333
        %v368 = vunpack.c.l.b16 %v334
        %v369 = vunpack.c.h.b16 %v334
        %v370 = vunpack.c.l.b16 %v335
        %v371 = vunpack.c.l.b16 %v336
        %v372 = vunpack.c.h.b16 %v336
        %v373 = vunpack.c.l.b16 %v337
        %v374 = vunpack.c.l.b16 %v338
        %v375 = vunpack.c.h.b16 %v338
        %v376 = vunpack.c.l.b16 %v339
        %v377 = vunpack.c.l.b16 %v340
        %v378 = vunpack.c.h.b16 %v340
        %v379 = vunpack.c.l.b16 %v341
        %v380 = vunpack.c.l.b16 %v342
        %v381 = vunpack.c.h.b16 %v342
        %v382 = vunpack.c.l.b16 %v343
        %v383 = vunpack.c.l.b16 %v344
        %v384 = vunpack.c.h.b16 %v344
        %v385 = vunpack.c.l.b16 %v345
        %v386 = vpack.c.b16 %v368, %v365
        %v387 = vpack.c.b16 %v369, %v366
        %v388 = vpack.c.b16 %v370, %v367
        %v389 = vpack.c.b16 %v374, %v371
        %v390 = vpack.c.b16 %v375, %v372
        %v391 = vpack.c.b16 %v376, %v373
        %v392 = vpack.c.b16 %v380, %v377
        %v393 = vpack.c.b16 %v381, %v378
        %v394 = vpack.c.b16 %v382, %v379
        %v395 = vpack.c.b16 %v383, %v383
        %v396 = vpack.c.b16 %v384, %v384
        %v397 = vpack.c.b16 %v385, %v385
        %vm407 = vcmask 457728
        %v409 = vsel %vm407, %v350, 0
        %vm411 = vcmask 1043456
        %v413 = vsel %vm411, %v395, 0
        %v416 = vsel %vm411, %v396, 0
        %v419 = vsel %vm411, %v397, 0
        %421 = vmatprep.subr.bf16.mxu0 %v387
        %422 = vmatpush1.bf16.msra.mxu0 %v386
        %423 = vmatprep.subr.bf16.mxu0 %v390
        %424 = vmatpush1.bf16.msra.mxu0 %v389
        %425 = vmatprep.subr.bf16.mxu0 %v393
        %426 = vmatpush1.bf16.msra.mxu0 %v392
        %427 = vmatprep.subr.bf16.mxu0 %v416
        %428 = vmatpush1.bf16.msra.mxu0 %v413
        %429 = vmatprep.subr.bf16.mxu0 0
        %430 = vmatpush1.bf16.msra.mxu0 0
        %431 = vmatprep.subr.bf16.mxu0 0
        %432 = vmatpush1.bf16.msra.mxu0 0
        %433 = vmatprep.subr.bf16.mxu0 0
        %434 = vmatpush1.bf16.msra.mxu0 0
        %435 = vmatprep.subr.bf16.mxu0 0
        %436 = vmatpush1.bf16.msra.mxu0 0
        %437 = vmatprep.subr.bf16.mxu0 0
        %438 = vmatpush1.bf16.msra.mxu0 0
        %439 = vmatprep.subr.bf16.mxu0 0
        %440 = vmatpush1.bf16.msra.mxu0 0
        %441 = vmatprep.subr.bf16.mxu0 0
        %442 = vmatpush1.bf16.msra.mxu0 0
        %443 = vmatprep.subr.bf16.mxu0 0
        %444 = vmatpush1.bf16.msra.mxu0 0
        %445 = vmatprep.subr.bf16.mxu0 0
        %446 = vmatpush1.bf16.msra.mxu0 0
        %447 = vmatprep.subr.bf16.mxu0 0
        %448 = vmatpush1.bf16.msra.mxu0 0
        %449 = vmatprep.subr.bf16.mxu0 0
        %450 = vmatpush1.bf16.msra.mxu0 0
        %451 = vmatprep.subr.bf16.mxu0 0
        %452 = vmatpush1.bf16.msra.mxu0 0
        %453 = vmatprep.mubr.bf16.mxu0 0
        %454 = vmatmul.mubr.bf16.gmra.mrb[0].mxu0 %v409
        %v455 = vpop.f32.mrb[0].mxu0
        %v456 = vadd.f32 0.0, %v455
        %v457 = vpop.f32.mrb[0].mxu0
        %v458 = vadd.f32 0.0, %v457
        %v459 = vpop.f32.mrb[0].mxu0
        %v460 = vadd.f32 0.0, %v459
        %v461 = vpop.f32.mrb[0].mxu0
        %v462 = vadd.f32 0.0, %v461
        %463 = vdwg.mxu0
        %464 = vmatprep.subr.bf16.mxu0 0
        %465 = vmatpush1.bf16.msra.mxu0 %v388
        %466 = vmatprep.subr.bf16.mxu0 0
        %467 = vmatpush1.bf16.msra.mxu0 %v391
        %468 = vmatprep.subr.bf16.mxu0 0
        %469 = vmatpush1.bf16.msra.mxu0 %v394
        %470 = vmatprep.subr.bf16.mxu0 0
        %471 = vmatpush1.bf16.msra.mxu0 %v419
        %472 = vmatprep.subr.bf16.mxu0 0
        %473 = vmatpush1.bf16.msra.mxu0 0
        %474 = vmatprep.subr.bf16.mxu0 0
        %475 = vmatpush1.bf16.msra.mxu0 0
        %476 = vmatprep.subr.bf16.mxu0 0
        %477 = vmatpush1.bf16.msra.mxu0 0
        %478 = vmatprep.subr.bf16.mxu0 0
        %479 = vmatpush1.bf16.msra.mxu0 0
        %480 = vmatprep.subr.bf16.mxu0 0
        %481 = vmatpush1.bf16.msra.mxu0 0
        %482 = vmatprep.subr.bf16.mxu0 0
        %483 = vmatpush1.bf16.msra.mxu0 0
        %484 = vmatprep.subr.bf16.mxu0 0
        %485 = vmatpush1.bf16.msra.mxu0 0
        %486 = vmatprep.subr.bf16.mxu0 0
        %487 = vmatpush1.bf16.msra.mxu0 0
        %488 = vmatprep.subr.bf16.mxu0 0
        %489 = vmatpush1.bf16.msra.mxu0 0
        %490 = vmatprep.subr.bf16.mxu0 0
        %491 = vmatpush1.bf16.msra.mxu0 0
        %492 = vmatprep.subr.bf16.mxu0 0
        %493 = vmatpush1.bf16.msra.mxu0 0
        %494 = vmatprep.subr.bf16.mxu0 0
        %495 = vmatpush1.bf16.msra.mxu0 0
        %496 = vmatprep.mubr.bf16.mxu0 0
        %497 = vmatmul.mubr.bf16.gmra.mrb[0].mxu0 %v409
        %v498 = vpop.f32.mrb[0].mxu0
        %v499 = vadd.f32 0.0, %v498
        %v500 = vpop.f32.mrb[0].mxu0
        %v501 = vpop.f32.mrb[0].mxu0
        %v502 = vadd.f32 0.0, %v501
        %v503 = vpop.f32.mrb[0].mxu0
        %504 = vdwg.mxu0
        %505 = vst [vmem:[#allocation3] sm:$0xff] %v456
        %506 = vst [vmem:[#allocation3 + $0x8] sm:$0xff] %v458
        %vm507 = vcmask 785408
        %508 = vst.msk [vmem:[#allocation3 + $0x10] sm:$0xff] %vm507, %v499
        %509 = vst [vmem:[#allocation3 + $0x18] sm:$0xff] %v460
        %510 = vst [vmem:[#allocation3 + $0x20] sm:$0xff] %v462
        %511 = vst.msk [vmem:[#allocation3 + $0x28] sm:$0xff] %vm507, %v502
        %v512 = vld [vmem:[%s193] sm:$0xff]
        %v513 = vld [vmem:[%s193 + $0x8] sm:$0xf]
        %516 = vrot.lane.b32.xlu0 %v512, 106
        %v517 = vpop.permute.xlu0 %516
        %518 = vrot.lane.b32.xlu0 %v513, 106
        %v519 = vpop.permute.xlu0 %518
        %v520 = vrot.slane %v517, 4
        %v521 = vrot.slane %v519, 4
        %v522 = vsel %vm237, %v520, %v521
        %vm523 = vcmask 867328
        %v524 = vsel %vm523, %v517, %v522
        %s527 = scalar_lea.vmem [#allocation2], 84
        %528 = vst [vmem:[%s527] sm:$0xff] %v524
        %529 = vst.msk [vmem:[%s527 + $0x8] sm:$0xf] %vm225, %v519
        %v530 = vld [vmem:[%s193] sm:$0xff]
        %v531 = vld [vmem:[%s193 + $0x8] sm:$0xf]
        %534 = vrot.lane.b32.xlu0 %v530, 105
        %v535 = vpop.permute.xlu0 %534
        %536 = vrot.lane.b32.xlu0 %v531, 105
        %v537 = vpop.permute.xlu0 %536
        %v538 = vrot.slane %v535, 4
        %v539 = vrot.slane %v537, 4
        %v540 = vsel %vm237, %v538, %v539
        %vm541 = vcmask 859136
        %v542 = vsel %vm541, %v535, %v540
        %545 = vst [vmem:[%s527 + $0xc] sm:$0xff] %v542
        %546 = vst.msk [vmem:[%s527 + $0x14] sm:$0xf] %vm225, %v537
        %v547 = vld [vmem:[%s193] sm:$0xff]
        %v548 = vld [vmem:[%s193 + $0x8] sm:$0xf]
        %551 = vrot.lane.b32.xlu0 %v547, 104
        %v552 = vpop.permute.xlu0 %551
        %553 = vrot.lane.b32.xlu0 %v548, 104
        %v554 = vpop.permute.xlu0 %553
        %v555 = vrot.slane %v552, 4
        %v556 = vrot.slane %v554, 4
        %v557 = vsel %vm237, %v555, %v556
        %vm558 = vcmask 850944
        %v559 = vsel %vm558, %v552, %v557
        %562 = vst [vmem:[%s527 + $0x18] sm:$0xff] %v559
        %563 = vst.msk [vmem:[%s527 + $0x20] sm:$0xf] %vm225, %v554
        %v564 = vld [vmem:[%s193] sm:$0xff]
        %v565 = vld [vmem:[%s193 + $0x8] sm:$0xf]
        %568 = vrot.lane.b32.xlu0 %v564, 103
        %v569 = vpop.permute.xlu0 %568
        %570 = vrot.lane.b32.xlu0 %v565, 103
        %v571 = vpop.permute.xlu0 %570
        %v572 = vrot.slane %v569, 4
        %v573 = vrot.slane %v571, 4
        %v574 = vsel %vm237, %v572, %v573
        %vm575 = vcmask 842752
        %v576 = vsel %vm575, %v569, %v574
        %579 = vst [vmem:[%s527 + $0x24] sm:$0xff] %v576
        %580 = vst.msk [vmem:[%s527 + $0x2c] sm:$0xf] %vm225, %v571
        %v581 = vld [vmem:[%s193] sm:$0xff]
        %v582 = vld [vmem:[%s193 + $0x8] sm:$0xf]
        %585 = vrot.lane.b32.xlu0 %v581, 102
        %v586 = vpop.permute.xlu0 %585
        %587 = vrot.lane.b32.xlu0 %v582, 102
        %v588 = vpop.permute.xlu0 %587
        %v589 = vrot.slane %v586, 4
        %v590 = vrot.slane %v588, 4
        %v591 = vsel %vm237, %v589, %v590
        %vm592 = vcmask 834560
        %v593 = vsel %vm592, %v586, %v591
        %596 = vst [vmem:[%s527 + $0x30] sm:$0xff] %v593
        %597 = vst.msk [vmem:[%s527 + $0x38] sm:$0xf] %vm225, %v588
        %v598 = vld [vmem:[%s193] sm:$0xff]
        %v599 = vld [vmem:[%s193 + $0x8] sm:$0xf]
        %602 = vrot.lane.b32.xlu0 %v598, 101
        %v603 = vpop.permute.xlu0 %602
        %604 = vrot.lane.b32.xlu0 %v599, 101
        %v605 = vpop.permute.xlu0 %604
        %v606 = vrot.slane %v603, 4
        %v607 = vrot.slane %v605, 4
        %v608 = vsel %vm237, %v606, %v607
        %vm609 = vcmask 826368
        %v610 = vsel %vm609, %v603, %v608
        %613 = vst [vmem:[%s527 + $0x3c] sm:$0xff] %v610
        %614 = vst.msk [vmem:[%s527 + $0x44] sm:$0xf] %vm225, %v605
        %v615 = vld [vmem:[%s193] sm:$0xff]
        %v616 = vld [vmem:[%s193 + $0x8] sm:$0xf]
        %619 = vrot.lane.b32.xlu0 %v615, 100
        %v620 = vpop.permute.xlu0 %619
        %621 = vrot.lane.b32.xlu0 %v616, 100
        %v622 = vpop.permute.xlu0 %621
        %v623 = vrot.slane %v620, 4
        %v624 = vrot.slane %v622, 4
        %v625 = vsel %vm237, %v623, %v624
        %vm626 = vcmask 818176
        %v627 = vsel %vm626, %v620, %v625
        %630 = vst [vmem:[%s527 + $0x48] sm:$0xff] %v627
        %631 = vst.msk [vmem:[%s527 + $0x50] sm:$0xf] %vm225, %v622
        %s632 = scalar_lea.vmem [#allocation7], 8
        %v633 = vld [vmem:[%s632] sm:$0xf]
        %v634 = vld [vmem:[%s632 + $0x4] sm:$0xf]
        %v635 = vld [vmem:[%s527] sm:$0xff]
        %v636 = vld [vmem:[%s527 + $0x8] sm:$0xf]
        %v637 = vld [vmem:[%s527 + $0xc] sm:$0xff]
        %v638 = vld [vmem:[%s527 + $0x14] sm:$0xf]
        %v639 = vld [vmem:[%s527 + $0x18] sm:$0xff]
        %v640 = vld [vmem:[%s527 + $0x20] sm:$0xf]
        %v641 = vld [vmem:[%s527 + $0x24] sm:$0xff]
        %v642 = vld [vmem:[%s527 + $0x2c] sm:$0xf]
        %v643 = vld [vmem:[%s527 + $0x30] sm:$0xff]
        %v644 = vld [vmem:[%s527 + $0x38] sm:$0xf]
        %v645 = vld [vmem:[%s527 + $0x3c] sm:$0xff]
        %v646 = vld [vmem:[%s527 + $0x44] sm:$0xf]
        %v647 = vld [vmem:[%s527 + $0x48] sm:$0xff]
        %v648 = vld [vmem:[%s527 + $0x50] sm:$0xf]
        %v651 = vunpack.c.l.b16 %v633
        %v652 = vunpack.c.l.b16 %v634
        %v653 = vpack.c.b16 %v652, %v651
        %v668 = vunpack.c.l.b16 %v635
        %v669 = vunpack.c.h.b16 %v635
        %v670 = vunpack.c.l.b16 %v636
        %v671 = vunpack.c.l.b16 %v637
        %v672 = vunpack.c.h.b16 %v637
        %v673 = vunpack.c.l.b16 %v638
        %v674 = vunpack.c.l.b16 %v639
        %v675 = vunpack.c.h.b16 %v639
        %v676 = vunpack.c.l.b16 %v640
        %v677 = vunpack.c.l.b16 %v641
        %v678 = vunpack.c.h.b16 %v641
        %v679 = vunpack.c.l.b16 %v642
        %v680 = vunpack.c.l.b16 %v643
        %v681 = vunpack.c.h.b16 %v643
        %v682 = vunpack.c.l.b16 %v644
        %v683 = vunpack.c.l.b16 %v645
        %v684 = vunpack.c.h.b16 %v645
        %v685 = vunpack.c.l.b16 %v646
        %v686 = vunpack.c.l.b16 %v647
        %v687 = vunpack.c.h.b16 %v647
        %v688 = vunpack.c.l.b16 %v648
        %v689 = vpack.c.b16 %v671, %v668
        %v690 = vpack.c.b16 %v672, %v669
        %v691 = vpack.c.b16 %v673, %v670
        %v692 = vpack.c.b16 %v677, %v674
        %v693 = vpack.c.b16 %v678, %v675
        %v694 = vpack.c.b16 %v679, %v676
        %v695 = vpack.c.b16 %v683, %v680
        %v696 = vpack.c.b16 %v684, %v681
        %v697 = vpack.c.b16 %v685, %v682
        %v698 = vpack.c.b16 %v686, %v686
        %v699 = vpack.c.b16 %v687, %v687
        %v700 = vpack.c.b16 %v688, %v688
        %v711 = vsel %vm407, %v653, 0
        %v714 = vsel %vm411, %v698, 0
        %v717 = vsel %vm411, %v699, 0
        %v720 = vsel %vm411, %v700, 0
        %722 = vmatprep.subr.bf16.mxu0 %v690
        %723 = vmatpush1.bf16.msra.mxu0 %v689
        %724 = vmatprep.subr.bf16.mxu0 %v693
        %725 = vmatpush1.bf16.msra.mxu0 %v692
        %726 = vmatprep.subr.bf16.mxu0 %v696
        %727 = vmatpush1.bf16.msra.mxu0 %v695
        %728 = vmatprep.subr.bf16.mxu0 %v717
        %729 = vmatpush1.bf16.msra.mxu0 %v714
        %730 = vmatprep.subr.bf16.mxu0 0
        %731 = vmatpush1.bf16.msra.mxu0 0
        %732 = vmatprep.subr.bf16.mxu0 0
        %733 = vmatpush1.bf16.msra.mxu0 0
        %734 = vmatprep.subr.bf16.mxu0 0
        %735 = vmatpush1.bf16.msra.mxu0 0
        %736 = vmatprep.subr.bf16.mxu0 0
        %737 = vmatpush1.bf16.msra.mxu0 0
        %738 = vmatprep.subr.bf16.mxu0 0
        %739 = vmatpush1.bf16.msra.mxu0 0
        %740 = vmatprep.subr.bf16.mxu0 0
        %741 = vmatpush1.bf16.msra.mxu0 0
        %742 = vmatprep.subr.bf16.mxu0 0
        %743 = vmatpush1.bf16.msra.mxu0 0
        %744 = vmatprep.subr.bf16.mxu0 0
        %745 = vmatpush1.bf16.msra.mxu0 0
        %746 = vmatprep.subr.bf16.mxu0 0
        %747 = vmatpush1.bf16.msra.mxu0 0
        %748 = vmatprep.subr.bf16.mxu0 0
        %749 = vmatpush1.bf16.msra.mxu0 0
        %750 = vmatprep.subr.bf16.mxu0 0
        %751 = vmatpush1.bf16.msra.mxu0 0
        %752 = vmatprep.subr.bf16.mxu0 0
        %753 = vmatpush1.bf16.msra.mxu0 0
        %754 = vmatprep.mubr.bf16.mxu0 0
        %755 = vmatmul.mubr.bf16.gmra.mrb[0].mxu0 %v711
        %v756 = vpop.f32.mrb[0].mxu0
        %v757 = vadd.f32 0.0, %v756
        %v758 = vpop.f32.mrb[0].mxu0
        %v759 = vadd.f32 0.0, %v758
        %v760 = vpop.f32.mrb[0].mxu0
        %v761 = vadd.f32 0.0, %v760
        %v762 = vpop.f32.mrb[0].mxu0
        %v763 = vadd.f32 0.0, %v762
        %764 = vdwg.mxu0
        %765 = vmatprep.subr.bf16.mxu0 0
        %766 = vmatpush1.bf16.msra.mxu0 %v691
        %767 = vmatprep.subr.bf16.mxu0 0
        %768 = vmatpush1.bf16.msra.mxu0 %v694
        %769 = vmatprep.subr.bf16.mxu0 0
        %770 = vmatpush1.bf16.msra.mxu0 %v697
        %771 = vmatprep.subr.bf16.mxu0 0
        %772 = vmatpush1.bf16.msra.mxu0 %v720
        %773 = vmatprep.subr.bf16.mxu0 0
        %774 = vmatpush1.bf16.msra.mxu0 0
        %775 = vmatprep.subr.bf16.mxu0 0
        %776 = vmatpush1.bf16.msra.mxu0 0
        %777 = vmatprep.subr.bf16.mxu0 0
        %778 = vmatpush1.bf16.msra.mxu0 0
        %779 = vmatprep.subr.bf16.mxu0 0
        %780 = vmatpush1.bf16.msra.mxu0 0
        %781 = vmatprep.subr.bf16.mxu0 0
        %782 = vmatpush1.bf16.msra.mxu0 0
        %783 = vmatprep.subr.bf16.mxu0 0
        %784 = vmatpush1.bf16.msra.mxu0 0
        %785 = vmatprep.subr.bf16.mxu0 0
        %786 = vmatpush1.bf16.msra.mxu0 0
        %787 = vmatprep.subr.bf16.mxu0 0
        %788 = vmatpush1.bf16.msra.mxu0 0
        %789 = vmatprep.subr.bf16.mxu0 0
        %790 = vmatpush1.bf16.msra.mxu0 0
        %791 = vmatprep.subr.bf16.mxu0 0
        %792 = vmatpush1.bf16.msra.mxu0 0
        %793 = vmatprep.subr.bf16.mxu0 0
        %794 = vmatpush1.bf16.msra.mxu0 0
        %795 = vmatprep.subr.bf16.mxu0 0
        %796 = vmatpush1.bf16.msra.mxu0 0
        %797 = vmatprep.mubr.bf16.mxu0 0
        %798 = vmatmul.mubr.bf16.gmra.mrb[0].mxu0 %v711
        %v799 = vpop.f32.mrb[0].mxu0
        %v800 = vadd.f32 0.0, %v799
        %v801 = vpop.f32.mrb[0].mxu0
        %v802 = vpop.f32.mrb[0].mxu0
        %v803 = vadd.f32 0.0, %v802
        %v804 = vpop.f32.mrb[0].mxu0
        %805 = vdwg.mxu0
        %v806 = vld [vmem:[#allocation3] sm:$0xff]
        %v807 = vld [vmem:[#allocation3 + $0x8] sm:$0xff]
        %v808 = vld [vmem:[#allocation3 + $0x10] sm:$0xff]
        %v809 = vld [vmem:[#allocation3 + $0x18] sm:$0xff]
        %v810 = vld [vmem:[#allocation3 + $0x20] sm:$0xff]
        %v811 = vld [vmem:[#allocation3 + $0x28] sm:$0xff]
        %v812 = vadd.f32 %v806, %v757
        %v813 = vadd.f32 %v807, %v759
        %v814 = vadd.f32 %v808, %v800
        %v815 = vadd.f32 %v809, %v761
        %v816 = vadd.f32 %v810, %v763
        %v817 = vadd.f32 %v811, %v803
        %818 = vst [vmem:[#allocation3] sm:$0xff] %v812
        %819 = vst [vmem:[#allocation3 + $0x8] sm:$0xff] %v813
        %820 = vst.msk [vmem:[#allocation3 + $0x10] sm:$0xff] %vm507, %v814
        %821 = vst [vmem:[#allocation3 + $0x18] sm:$0xff] %v815
        %822 = vst [vmem:[#allocation3 + $0x20] sm:$0xff] %v816
        %823 = vst.msk [vmem:[#allocation3 + $0x28] sm:$0xff] %vm507, %v817
        %v824 = vld [vmem:[%s193] sm:$0xff]
        %v825 = vld [vmem:[%s193 + $0x8] sm:$0xff]
        %828 = vrot.lane.b32.xlu0 %v824, 84
        %v829 = vpop.permute.xlu0 %828
        %830 = vrot.lane.b32.xlu0 %v825, 84
        %v831 = vpop.permute.xlu0 %830
        %v832 = vrot.slane %v829, 4
        %v833 = vrot.slane %v831, 4
        %v834 = vsel %vm237, %v832, %v833
        %vm835 = vcmask 687104
        %v836 = vsel %vm835, %v829, %v834
        %v837 = vsel %vm835, %v831, %v833
        %840 = vst [vmem:[#allocation2] sm:$0xff] %v836
        %841 = vst.msk [vmem:[#allocation2 + $0x8] sm:$0xf] %vm225, %v837
        %v842 = vld [vmem:[%s193] sm:$0xff]
        %v843 = vld [vmem:[%s193 + $0x8] sm:$0xff]
        %846 = vrot.lane.b32.xlu0 %v842, 83
        %v847 = vpop.permute.xlu0 %846
        %848 = vrot.lane.b32.xlu0 %v843, 83
        %v849 = vpop.permute.xlu0 %848
        %v850 = vrot.slane %v847, 4
        %v851 = vrot.slane %v849, 4
        %v852 = vsel %vm237, %v850, %v851
        %vm853 = vcmask 678912
        %v854 = vsel %vm853, %v847, %v852
        %v855 = vsel %vm853, %v849, %v851
        %858 = vst [vmem:[#allocation2 + $0xc] sm:$0xff] %v854
        %859 = vst.msk [vmem:[#allocation2 + $0x14] sm:$0xf] %vm225, %v855
        %v860 = vld [vmem:[%s193] sm:$0xff]
        %v861 = vld [vmem:[%s193 + $0x8] sm:$0xff]
        %864 = vrot.lane.b32.xlu0 %v860, 82
        %v865 = vpop.permute.xlu0 %864
        %866 = vrot.lane.b32.xlu0 %v861, 82
        %v867 = vpop.permute.xlu0 %866
        %v868 = vrot.slane %v865, 4
        %v869 = vrot.slane %v867, 4
        %v870 = vsel %vm237, %v868, %v869
        %vm871 = vcmask 670720
        %v872 = vsel %vm871, %v865, %v870
        %v873 = vsel %vm871, %v867, %v869
        %876 = vst [vmem:[#allocation2 + $0x18] sm:$0xff] %v872
        %877 = vst.msk [vmem:[#allocation2 + $0x20] sm:$0xf] %vm225, %v873
        %v878 = vld [vmem:[%s193] sm:$0xff]
        %v879 = vld [vmem:[%s193 + $0x8] sm:$0xff]
        %882 = vrot.lane.b32.xlu0 %v878, 81
        %v883 = vpop.permute.xlu0 %882
        %884 = vrot.lane.b32.xlu0 %v879, 81
        %v885 = vpop.permute.xlu0 %884
        %v886 = vrot.slane %v883, 4
        %v887 = vrot.slane %v885, 4
        %v888 = vsel %vm237, %v886, %v887
        %vm889 = vcmask 662528
        %v890 = vsel %vm889, %v883, %v888
        %v891 = vsel %vm889, %v885, %v887
        %894 = vst [vmem:[#allocation2 + $0x24] sm:$0xff] %v890
        %895 = vst.msk [vmem:[#allocation2 + $0x2c] sm:$0xf] %vm225, %v891
        %v896 = vld [vmem:[%s193] sm:$0xff]
        %v897 = vld [vmem:[%s193 + $0x8] sm:$0xff]
        %900 = vrot.lane.b32.xlu0 %v896, 80
        %v901 = vpop.permute.xlu0 %900
        %902 = vrot.lane.b32.xlu0 %v897, 80
        %v903 = vpop.permute.xlu0 %902
        %v904 = vrot.slane %v901, 4
        %v905 = vrot.slane %v903, 4
        %v906 = vsel %vm237, %v904, %v905
        %vm907 = vcmask 654336
        %v908 = vsel %vm907, %v901, %v906
        %v909 = vsel %vm907, %v903, %v905
        %912 = vst [vmem:[#allocation2 + $0x30] sm:$0xff] %v908
        %913 = vst.msk [vmem:[#allocation2 + $0x38] sm:$0xf] %vm225, %v909
        %v914 = vld [vmem:[%s193] sm:$0xff]
        %v915 = vld [vmem:[%s193 + $0x8] sm:$0xff]
        %918 = vrot.lane.b32.xlu0 %v914, 79
        %v919 = vpop.permute.xlu0 %918
        %920 = vrot.lane.b32.xlu0 %v915, 79
        %v921 = vpop.permute.xlu0 %920
        %v922 = vrot.slane %v919, 4
        %v923 = vrot.slane %v921, 4
        %v924 = vsel %vm237, %v922, %v923
        %vm925 = vcmask 646144
        %v926 = vsel %vm925, %v919, %v924
        %v927 = vsel %vm925, %v921, %v923
        %930 = vst [vmem:[#allocation2 + $0x3c] sm:$0xff] %v926
        %931 = vst.msk [vmem:[#allocation2 + $0x44] sm:$0xf] %vm225, %v927
        %v932 = vld [vmem:[%s193] sm:$0xff]
        %v933 = vld [vmem:[%s193 + $0x8] sm:$0xff]
        %936 = vrot.lane.b32.xlu0 %v932, 78
        %v937 = vpop.permute.xlu0 %936
        %938 = vrot.lane.b32.xlu0 %v933, 78
        %v939 = vpop.permute.xlu0 %938
        %v940 = vrot.slane %v937, 4
        %v941 = vrot.slane %v939, 4
        %v942 = vsel %vm237, %v940, %v941
        %vm943 = vcmask 637952
        %v944 = vsel %vm943, %v937, %v942
        %v945 = vsel %vm943, %v939, %v941
        %948 = vst [vmem:[#allocation2 + $0x48] sm:$0xff] %v944
        %949 = vst.msk [vmem:[#allocation2 + $0x50] sm:$0xf] %vm225, %v945
        %s950 = scalar_lea.vmem [#allocation7], 16
        %v951 = vld [vmem:[%s950] sm:$0xf]
        %v952 = vld [vmem:[%s950 + $0x4] sm:$0xf]
        %v953 = vld [vmem:[#allocation2] sm:$0xff]
        %v954 = vld [vmem:[#allocation2 + $0x8] sm:$0xf]
        %v955 = vld [vmem:[#allocation2 + $0xc] sm:$0xff]
        %v956 = vld [vmem:[#allocation2 + $0x14] sm:$0xf]
        %v957 = vld [vmem:[#allocation2 + $0x18] sm:$0xff]
        %v958 = vld [vmem:[#allocation2 + $0x20] sm:$0xf]
        %v959 = vld [vmem:[#allocation2 + $0x24] sm:$0xff]
        %v960 = vld [vmem:[#allocation2 + $0x2c] sm:$0xf]
        %v961 = vld [vmem:[#allocation2 + $0x30] sm:$0xff]
        %v962 = vld [vmem:[#allocation2 + $0x38] sm:$0xf]
        %v963 = vld [vmem:[#allocation2 + $0x3c] sm:$0xff]
        %v964 = vld [vmem:[#allocation2 + $0x44] sm:$0xf]
        %v965 = vld [vmem:[#allocation2 + $0x48] sm:$0xff]
        %v966 = vld [vmem:[#allocation2 + $0x50] sm:$0xf]
        %v969 = vunpack.c.l.b16 %v951
        %v970 = vunpack.c.l.b16 %v952
        %v971 = vpack.c.b16 %v970, %v969
        %v986 = vunpack.c.l.b16 %v953
        %v987 = vunpack.c.h.b16 %v953
        %v988 = vunpack.c.l.b16 %v954
        %v989 = vunpack.c.l.b16 %v955
        %v990 = vunpack.c.h.b16 %v955
        %v991 = vunpack.c.l.b16 %v956
        %v992 = vunpack.c.l.b16 %v957
        %v993 = vunpack.c.h.b16 %v957
        %v994 = vunpack.c.l.b16 %v958
        %v995 = vunpack.c.l.b16 %v959
        %v996 = vunpack.c.h.b16 %v959
        %v997 = vunpack.c.l.b16 %v960
        %v998 = vunpack.c.l.b16 %v961
        %v999 = vunpack.c.h.b16 %v961
        %v1000 = vunpack.c.l.b16 %v962
        %v1001 = vunpack.c.l.b16 %v963
        %v1002 = vunpack.c.h.b16 %v963
        %v1003 = vunpack.c.l.b16 %v964
        %v1004 = vunpack.c.l.b16 %v965
        %v1005 = vunpack.c.h.b16 %v965
        %v1006 = vunpack.c.l.b16 %v966
        %v1007 = vpack.c.b16 %v989, %v986
        %v1008 = vpack.c.b16 %v990, %v987
        %v1009 = vpack.c.b16 %v991, %v988
        %v1010 = vpack.c.b16 %v995, %v992
        %v1011 = vpack.c.b16 %v996, %v993
        %v1012 = vpack.c.b16 %v997, %v994
        %v1013 = vpack.c.b16 %v1001, %v998
        %v1014 = vpack.c.b16 %v1002, %v999
        %v1015 = vpack.c.b16 %v1003, %v1000
        %v1016 = vpack.c.b16 %v1004, %v1004
        %v1017 = vpack.c.b16 %v1005, %v1005
        %v1018 = vpack.c.b16 %v1006, %v1006
        %v1029 = vsel %vm407, %v971, 0
        %v1032 = vsel %vm411, %v1016, 0
        %v1035 = vsel %vm411, %v1017, 0
        %v1038 = vsel %vm411, %v1018, 0
        %1040 = vmatprep.subr.bf16.mxu0 %v1008
        %1041 = vmatpush1.bf16.msra.mxu0 %v1007
        %1042 = vmatprep.subr.bf16.mxu0 %v1011
        %1043 = vmatpush1.bf16.msra.mxu0 %v1010
        %1044 = vmatprep.subr.bf16.mxu0 %v1014
        %1045 = vmatpush1.bf16.msra.mxu0 %v1013
        %1046 = vmatprep.subr.bf16.mxu0 %v1035
        %1047 = vmatpush1.bf16.msra.mxu0 %v1032
        %1048 = vmatprep.subr.bf16.mxu0 0
        %1049 = vmatpush1.bf16.msra.mxu0 0
        %1050 = vmatprep.subr.bf16.mxu0 0
        %1051 = vmatpush1.bf16.msra.mxu0 0
        %1052 = vmatprep.subr.bf16.mxu0 0
        %1053 = vmatpush1.bf16.msra.mxu0 0
        %1054 = vmatprep.subr.bf16.mxu0 0
        %1055 = vmatpush1.bf16.msra.mxu0 0
        %1056 = vmatprep.subr.bf16.mxu0 0
        %1057 = vmatpush1.bf16.msra.mxu0 0
        %1058 = vmatprep.subr.bf16.mxu0 0
        %1059 = vmatpush1.bf16.msra.mxu0 0
        %1060 = vmatprep.subr.bf16.mxu0 0
        %1061 = vmatpush1.bf16.msra.mxu0 0
        %1062 = vmatprep.subr.bf16.mxu0 0
        %1063 = vmatpush1.bf16.msra.mxu0 0
        %1064 = vmatprep.subr.bf16.mxu0 0
        %1065 = vmatpush1.bf16.msra.mxu0 0
        %1066 = vmatprep.subr.bf16.mxu0 0
        %1067 = vmatpush1.bf16.msra.mxu0 0
        %1068 = vmatprep.subr.bf16.mxu0 0
        %1069 = vmatpush1.bf16.msra.mxu0 0
        %1070 = vmatprep.subr.bf16.mxu0 0
        %1071 = vmatpush1.bf16.msra.mxu0 0
        %1072 = vmatprep.mubr.bf16.mxu0 0
        %1073 = vmatmul.mubr.bf16.gmra.mrb[0].mxu0 %v1029
        %v1074 = vpop.f32.mrb[0].mxu0
        %v1075 = vadd.f32 0.0, %v1074
        %v1076 = vpop.f32.mrb[0].mxu0
        %v1077 = vadd.f32 0.0, %v1076
        %v1078 = vpop.f32.mrb[0].mxu0
        %v1079 = vadd.f32 0.0, %v1078
        %v1080 = vpop.f32.mrb[0].mxu0
        %v1081 = vadd.f32 0.0, %v1080
        %1082 = vdwg.mxu0
        %1083 = vmatprep.subr.bf16.mxu0 0
        %1084 = vmatpush1.bf16.msra.mxu0 %v1009
        %1085 = vmatprep.subr.bf16.mxu0 0
        %1086 = vmatpush1.bf16.msra.mxu0 %v1012
        %1087 = vmatprep.subr.bf16.mxu0 0
        %1088 = vmatpush1.bf16.msra.mxu0 %v1015
        %1089 = vmatprep.subr.bf16.mxu0 0
        %1090 = vmatpush1.bf16.msra.mxu0 %v1038
        %1091 = vmatprep.subr.bf16.mxu0 0
        %1092 = vmatpush1.bf16.msra.mxu0 0
        %1093 = vmatprep.subr.bf16.mxu0 0
        %1094 = vmatpush1.bf16.msra.mxu0 0
        %1095 = vmatprep.subr.bf16.mxu0 0
        %1096 = vmatpush1.bf16.msra.mxu0 0
        %1097 = vmatprep.subr.bf16.mxu0 0
        %1098 = vmatpush1.bf16.msra.mxu0 0
        %1099 = vmatprep.subr.bf16.mxu0 0
        %1100 = vmatpush1.bf16.msra.mxu0 0
        %1101 = vmatprep.subr.bf16.mxu0 0
        %1102 = vmatpush1.bf16.msra.mxu0 0
        %1103 = vmatprep.subr.bf16.mxu0 0
        %1104 = vmatpush1.bf16.msra.mxu0 0
        %1105 = vmatprep.subr.bf16.mxu0 0
        %1106 = vmatpush1.bf16.msra.mxu0 0
        %1107 = vmatprep.subr.bf16.mxu0 0
        %1108 = vmatpush1.bf16.msra.mxu0 0
        %1109 = vmatprep.subr.bf16.mxu0 0
        %1110 = vmatpush1.bf16.msra.mxu0 0
        %1111 = vmatprep.subr.bf16.mxu0 0
        %1112 = vmatpush1.bf16.msra.mxu0 0
        %1113 = vmatprep.subr.bf16.mxu0 0
        %1114 = vmatpush1.bf16.msra.mxu0 0
        %1115 = vmatprep.mubr.bf16.mxu0 0
        %1116 = vmatmul.mubr.bf16.gmra.mrb[0].mxu0 %v1029
        %v1117 = vpop.f32.mrb[0].mxu0
        %v1118 = vadd.f32 0.0, %v1117
        %v1119 = vpop.f32.mrb[0].mxu0
        %v1120 = vpop.f32.mrb[0].mxu0
        %v1121 = vadd.f32 0.0, %v1120
        %v1122 = vpop.f32.mrb[0].mxu0
        %1123 = vdwg.mxu0
        %v1124 = vld [vmem:[#allocation3] sm:$0xff]
        %v1125 = vld [vmem:[#allocation3 + $0x8] sm:$0xff]
        %v1126 = vld [vmem:[#allocation3 + $0x10] sm:$0xff]
        %v1127 = vld [vmem:[#allocation3 + $0x18] sm:$0xff]
        %v1128 = vld [vmem:[#allocation3 + $0x20] sm:$0xff]
        %v1129 = vld [vmem:[#allocation3 + $0x28] sm:$0xff]
        %v1130 = vadd.f32 %v1124, %v1075
        %v1131 = vadd.f32 %v1125, %v1077
        %v1132 = vadd.f32 %v1126, %v1118
        %v1133 = vadd.f32 %v1127, %v1079
        %v1134 = vadd.f32 %v1128, %v1081
        %v1135 = vadd.f32 %v1129, %v1121
        %1136 = vst [vmem:[#allocation3] sm:$0xff] %v1130
        %1137 = vst [vmem:[#allocation3 + $0x8] sm:$0xff] %v1131
        %1138 = vst.msk [vmem:[#allocation3 + $0x10] sm:$0xff] %vm507, %v1132
        %1139 = vst [vmem:[#allocation3 + $0x18] sm:$0xff] %v1133
        %1140 = vst [vmem:[#allocation3 + $0x20] sm:$0xff] %v1134
        %1141 = vst.msk [vmem:[#allocation3 + $0x28] sm:$0xff] %vm507, %v1135
        %v1142 = vld [vmem:[%s193] sm:$0xff]
        %v1143 = vld [vmem:[%s193 + $0x8] sm:$0xff]
        %1146 = vrot.lane.b32.xlu0 %v1142, 62
        %v1147 = vpop.permute.xlu0 %1146
        %1148 = vrot.lane.b32.xlu0 %v1143, 62
        %v1149 = vpop.permute.xlu0 %1148
        %v1150 = vrot.slane %v1147, 4
        %v1151 = vrot.slane %v1149, 4
        %v1152 = vsel %vm237, %v1150, %v1151
        %vm1153 = vcmask 506880
        %v1154 = vsel %vm1153, %v1147, %v1152
        %v1155 = vsel %vm1153, %v1149, %v1151
        %1158 = vst [vmem:[%s527] sm:$0xff] %v1154
        %1159 = vst.msk [vmem:[%s527 + $0x8] sm:$0xf] %vm225, %v1155
        %v1160 = vld [vmem:[%s193] sm:$0xff]
        %v1161 = vld [vmem:[%s193 + $0x8] sm:$0xff]
        %1164 = vrot.lane.b32.xlu0 %v1160, 61
        %v1165 = vpop.permute.xlu0 %1164
        %1166 = vrot.lane.b32.xlu0 %v1161, 61
        %v1167 = vpop.permute.xlu0 %1166
        %v1168 = vrot.slane %v1165, 4
        %v1169 = vrot.slane %v1167, 4
        %v1170 = vsel %vm237, %v1168, %v1169
        %vm1171 = vcmask 498688
        %v1172 = vsel %vm1171, %v1165, %v1170
        %v1173 = vsel %vm1171, %v1167, %v1169
        %1176 = vst [vmem:[%s527 + $0xc] sm:$0xff] %v1172
        %1177 = vst.msk [vmem:[%s527 + $0x14] sm:$0xf] %vm225, %v1173
        %v1178 = vld [vmem:[%s193] sm:$0xff]
        %v1179 = vld [vmem:[%s193 + $0x8] sm:$0xff]
        %1182 = vrot.lane.b32.xlu0 %v1178, 60
        %v1183 = vpop.permute.xlu0 %1182
        %1184 = vrot.lane.b32.xlu0 %v1179, 60
        %v1185 = vpop.permute.xlu0 %1184
        %v1186 = vrot.slane %v1183, 4
        %v1187 = vrot.slane %v1185, 4
        %v1188 = vsel %vm237, %v1186, %v1187
        %vm1189 = vcmask 490496
        %v1190 = vsel %vm1189, %v1183, %v1188
        %v1191 = vsel %vm1189, %v1185, %v1187
        %1194 = vst [vmem:[%s527 + $0x18] sm:$0xff] %v1190
        %1195 = vst.msk [vmem:[%s527 + $0x20] sm:$0xf] %vm225, %v1191
        %v1196 = vld [vmem:[%s193] sm:$0xff]
        %v1197 = vld [vmem:[%s193 + $0x8] sm:$0xff]
        %1200 = vrot.lane.b32.xlu0 %v1196, 59
        %v1201 = vpop.permute.xlu0 %1200
        %1202 = vrot.lane.b32.xlu0 %v1197, 59
        %v1203 = vpop.permute.xlu0 %1202
        %v1204 = vrot.slane %v1201, 4
        %v1205 = vrot.slane %v1203, 4
        %v1206 = vsel %vm237, %v1204, %v1205
        %vm1207 = vcmask 482304
        %v1208 = vsel %vm1207, %v1201, %v1206
        %v1209 = vsel %vm1207, %v1203, %v1205
        %1212 = vst [vmem:[%s527 + $0x24] sm:$0xff] %v1208
        %1213 = vst.msk [vmem:[%s527 + $0x2c] sm:$0xf] %vm225, %v1209
        %v1214 = vld [vmem:[%s193] sm:$0xff]
        %v1215 = vld [vmem:[%s193 + $0x8] sm:$0xff]
        %1218 = vrot.lane.b32.xlu0 %v1214, 58
        %v1219 = vpop.permute.xlu0 %1218
        %1220 = vrot.lane.b32.xlu0 %v1215, 58
        %v1221 = vpop.permute.xlu0 %1220
        %v1222 = vrot.slane %v1219, 4
        %v1223 = vrot.slane %v1221, 4
        %v1224 = vsel %vm237, %v1222, %v1223
        %vm1225 = vcmask 474112
        %v1226 = vsel %vm1225, %v1219, %v1224
        %v1227 = vsel %vm1225, %v1221, %v1223
        %1230 = vst [vmem:[%s527 + $0x30] sm:$0xff] %v1226
        %1231 = vst.msk [vmem:[%s527 + $0x38] sm:$0xf] %vm225, %v1227
        %v1232 = vld [vmem:[%s193] sm:$0xff]
        %v1233 = vld [vmem:[%s193 + $0x8] sm:$0xff]
        %1236 = vrot.lane.b32.xlu0 %v1232, 57
        %v1237 = vpop.permute.xlu0 %1236
        %1238 = vrot.lane.b32.xlu0 %v1233, 57
        %v1239 = vpop.permute.xlu0 %1238
        %v1240 = vrot.slane %v1237, 4
        %v1241 = vrot.slane %v1239, 4
        %v1242 = vsel %vm237, %v1240, %v1241
        %vm1243 = vcmask 465920
        %v1244 = vsel %vm1243, %v1237, %v1242
        %v1245 = vsel %vm1243, %v1239, %v1241
        %1248 = vst [vmem:[%s527 + $0x3c] sm:$0xff] %v1244
        %1249 = vst.msk [vmem:[%s527 + $0x44] sm:$0xf] %vm225, %v1245
        %v1250 = vld [vmem:[%s193] sm:$0xff]
        %v1251 = vld [vmem:[%s193 + $0x8] sm:$0xff]
        %1254 = vrot.lane.b32.xlu0 %v1250, 56
        %v1255 = vpop.permute.xlu0 %1254
        %1256 = vrot.lane.b32.xlu0 %v1251, 56
        %v1257 = vpop.permute.xlu0 %1256
        %v1258 = vrot.slane %v1255, 4
        %v1259 = vrot.slane %v1257, 4
        %v1260 = vsel %vm237, %v1258, %v1259
        %vm1261 = vcmask 457728
        %v1262 = vsel %vm1261, %v1255, %v1260
        %v1263 = vsel %vm1261, %v1257, %v1259
        %1266 = vst [vmem:[%s527 + $0x48] sm:$0xff] %v1262
        %1267 = vst.msk [vmem:[%s527 + $0x50] sm:$0xf] %vm225, %v1263
        %s1268 = scalar_lea.vmem [#allocation7], 24
        %v1269 = vld [vmem:[%s1268] sm:$0xf]
        %v1270 = vld [vmem:[%s1268 + $0x4] sm:$0xf]
        %v1271 = vld [vmem:[%s527] sm:$0xff]
        %v1272 = vld [vmem:[%s527 + $0x8] sm:$0xf]
        %v1273 = vld [vmem:[%s527 + $0xc] sm:$0xff]
        %v1274 = vld [vmem:[%s527 + $0x14] sm:$0xf]
        %v1275 = vld [vmem:[%s527 + $0x18] sm:$0xff]
        %v1276 = vld [vmem:[%s527 + $0x20] sm:$0xf]
        %v1277 = vld [vmem:[%s527 + $0x24] sm:$0xff]
        %v1278 = vld [vmem:[%s527 + $0x2c] sm:$0xf]
        %v1279 = vld [vmem:[%s527 + $0x30] sm:$0xff]
        %v1280 = vld [vmem:[%s527 + $0x38] sm:$0xf]
        %v1281 = vld [vmem:[%s527 + $0x3c] sm:$0xff]
        %v1282 = vld [vmem:[%s527 + $0x44] sm:$0xf]
        %v1283 = vld [vmem:[%s527 + $0x48] sm:$0xff]
        %v1284 = vld [vmem:[%s527 + $0x50] sm:$0xf]
        %v1287 = vunpack.c.l.b16 %v1269
        %v1288 = vunpack.c.l.b16 %v1270
        %v1289 = vpack.c.b16 %v1288, %v1287
        %v1304 = vunpack.c.l.b16 %v1271
        %v1305 = vunpack.c.h.b16 %v1271
        %v1306 = vunpack.c.l.b16 %v1272
        %v1307 = vunpack.c.l.b16 %v1273
        %v1308 = vunpack.c.h.b16 %v1273
        %v1309 = vunpack.c.l.b16 %v1274
        %v1310 = vunpack.c.l.b16 %v1275
        %v1311 = vunpack.c.h.b16 %v1275
        %v1312 = vunpack.c.l.b16 %v1276
        %v1313 = vunpack.c.l.b16 %v1277
        %v1314 = vunpack.c.h.b16 %v1277
        %v1315 = vunpack.c.l.b16 %v1278
        %v1316 = vunpack.c.l.b16 %v1279
        %v1317 = vunpack.c.h.b16 %v1279
        %v1318 = vunpack.c.l.b16 %v1280
        %v1319 = vunpack.c.l.b16 %v1281
        %v1320 = vunpack.c.h.b16 %v1281
        %v1321 = vunpack.c.l.b16 %v1282
        %v1322 = vunpack.c.l.b16 %v1283
        %v1323 = vunpack.c.h.b16 %v1283
        %v1324 = vunpack.c.l.b16 %v1284
        %v1325 = vpack.c.b16 %v1307, %v1304
        %v1326 = vpack.c.b16 %v1308, %v1305
        %v1327 = vpack.c.b16 %v1309, %v1306
        %v1328 = vpack.c.b16 %v1313, %v1310
        %v1329 = vpack.c.b16 %v1314, %v1311
        %v1330 = vpack.c.b16 %v1315, %v1312
        %v1331 = vpack.c.b16 %v1319, %v1316
        %v1332 = vpack.c.b16 %v1320, %v1317
        %v1333 = vpack.c.b16 %v1321, %v1318
        %v1334 = vpack.c.b16 %v1322, %v1322
        %v1335 = vpack.c.b16 %v1323, %v1323
        %v1336 = vpack.c.b16 %v1324, %v1324
        %v1347 = vsel %vm407, %v1289, 0
        %v1350 = vsel %vm411, %v1334, 0
        %v1353 = vsel %vm411, %v1335, 0
        %v1356 = vsel %vm411, %v1336, 0
        %1358 = vmatprep.subr.bf16.mxu0 %v1326
        %1359 = vmatpush1.bf16.msra.mxu0 %v1325
        %1360 = vmatprep.subr.bf16.mxu0 %v1329
        %1361 = vmatpush1.bf16.msra.mxu0 %v1328
        %1362 = vmatprep.subr.bf16.mxu0 %v1332
        %1363 = vmatpush1.bf16.msra.mxu0 %v1331
        %1364 = vmatprep.subr.bf16.mxu0 %v1353
        %1365 = vmatpush1.bf16.msra.mxu0 %v1350
        %1366 = vmatprep.subr.bf16.mxu0 0
        %1367 = vmatpush1.bf16.msra.mxu0 0
        %1368 = vmatprep.subr.bf16.mxu0 0
        %1369 = vmatpush1.bf16.msra.mxu0 0
        %1370 = vmatprep.subr.bf16.mxu0 0
        %1371 = vmatpush1.bf16.msra.mxu0 0
        %1372 = vmatprep.subr.bf16.mxu0 0
        %1373 = vmatpush1.bf16.msra.mxu0 0
        %1374 = vmatprep.subr.bf16.mxu0 0
        %1375 = vmatpush1.bf16.msra.mxu0 0
        %1376 = vmatprep.subr.bf16.mxu0 0
        %1377 = vmatpush1.bf16.msra.mxu0 0
        %1378 = vmatprep.subr.bf16.mxu0 0
        %1379 = vmatpush1.bf16.msra.mxu0 0
        %1380 = vmatprep.subr.bf16.mxu0 0
        %1381 = vmatpush1.bf16.msra.mxu0 0
        %1382 = vmatprep.subr.bf16.mxu0 0
        %1383 = vmatpush1.bf16.msra.mxu0 0
        %1384 = vmatprep.subr.bf16.mxu0 0
        %1385 = vmatpush1.bf16.msra.mxu0 0
        %1386 = vmatprep.subr.bf16.mxu0 0
        %1387 = vmatpush1.bf16.msra.mxu0 0
        %1388 = vmatprep.subr.bf16.mxu0 0
        %1389 = vmatpush1.bf16.msra.mxu0 0
        %1390 = vmatprep.mubr.bf16.mxu0 0
        %1391 = vmatmul.mubr.bf16.gmra.mrb[0].mxu0 %v1347
        %v1392 = vpop.f32.mrb[0].mxu0
        %v1393 = vadd.f32 0.0, %v1392
        %v1394 = vpop.f32.mrb[0].mxu0
        %v1395 = vadd.f32 0.0, %v1394
        %v1396 = vpop.f32.mrb[0].mxu0
        %v1397 = vadd.f32 0.0, %v1396
        %v1398 = vpop.f32.mrb[0].mxu0
        %v1399 = vadd.f32 0.0, %v1398
        %1400 = vdwg.mxu0
        %1401 = vmatprep.subr.bf16.mxu0 0
        %1402 = vmatpush1.bf16.msra.mxu0 %v1327
        %1403 = vmatprep.subr.bf16.mxu0 0
        %1404 = vmatpush1.bf16.msra.mxu0 %v1330
        %1405 = vmatprep.subr.bf16.mxu0 0
        %1406 = vmatpush1.bf16.msra.mxu0 %v1333
        %1407 = vmatprep.subr.bf16.mxu0 0
        %1408 = vmatpush1.bf16.msra.mxu0 %v1356
        %1409 = vmatprep.subr.bf16.mxu0 0
        %1410 = vmatpush1.bf16.msra.mxu0 0
        %1411 = vmatprep.subr.bf16.mxu0 0
        %1412 = vmatpush1.bf16.msra.mxu0 0
        %1413 = vmatprep.subr.bf16.mxu0 0
        %1414 = vmatpush1.bf16.msra.mxu0 0
        %1415 = vmatprep.subr.bf16.mxu0 0
        %1416 = vmatpush1.bf16.msra.mxu0 0
        %1417 = vmatprep.subr.bf16.mxu0 0
        %1418 = vmatpush1.bf16.msra.mxu0 0
        %1419 = vmatprep.subr.bf16.mxu0 0
        %1420 = vmatpush1.bf16.msra.mxu0 0
        %1421 = vmatprep.subr.bf16.mxu0 0
        %1422 = vmatpush1.bf16.msra.mxu0 0
        %1423 = vmatprep.subr.bf16.mxu0 0
        %1424 = vmatpush1.bf16.msra.mxu0 0
        %1425 = vmatprep.subr.bf16.mxu0 0
        %1426 = vmatpush1.bf16.msra.mxu0 0
        %1427 = vmatprep.subr.bf16.mxu0 0
        %1428 = vmatpush1.bf16.msra.mxu0 0
        %1429 = vmatprep.subr.bf16.mxu0 0
        %1430 = vmatpush1.bf16.msra.mxu0 0
        %1431 = vmatprep.subr.bf16.mxu0 0
        %1432 = vmatpush1.bf16.msra.mxu0 0
        %1433 = vmatprep.mubr.bf16.mxu0 0
        %1434 = vmatmul.mubr.bf16.gmra.mrb[0].mxu0 %v1347
        %v1435 = vpop.f32.mrb[0].mxu0
        %v1436 = vadd.f32 0.0, %v1435
        %v1437 = vpop.f32.mrb[0].mxu0
        %v1438 = vpop.f32.mrb[0].mxu0
        %v1439 = vadd.f32 0.0, %v1438
        %v1440 = vpop.f32.mrb[0].mxu0
        %1441 = vdwg.mxu0
        %v1442 = vld [vmem:[#allocation3] sm:$0xff]
        %v1443 = vld [vmem:[#allocation3 + $0x8] sm:$0xff]
        %v1444 = vld [vmem:[#allocation3 + $0x10] sm:$0xff]
        %v1445 = vld [vmem:[#allocation3 + $0x18] sm:$0xff]
        %v1446 = vld [vmem:[#allocation3 + $0x20] sm:$0xff]
        %v1447 = vld [vmem:[#allocation3 + $0x28] sm:$0xff]
        %v1448 = vadd.f32 %v1442, %v1393
        %v1449 = vadd.f32 %v1443, %v1395
        %v1450 = vadd.f32 %v1444, %v1436
        %v1451 = vadd.f32 %v1445, %v1397
        %v1452 = vadd.f32 %v1446, %v1399
        %v1453 = vadd.f32 %v1447, %v1439
        %1454 = vst [vmem:[#allocation3] sm:$0xff] %v1448
        %1455 = vst [vmem:[#allocation3 + $0x8] sm:$0xff] %v1449
        %1456 = vst.msk [vmem:[#allocation3 + $0x10] sm:$0xff] %vm507, %v1450
        %1457 = vst [vmem:[#allocation3 + $0x18] sm:$0xff] %v1451
        %1458 = vst [vmem:[#allocation3 + $0x20] sm:$0xff] %v1452
        %1459 = vst.msk [vmem:[#allocation3 + $0x28] sm:$0xff] %vm507, %v1453
        %v1460 = vld [vmem:[%s193] sm:$0xff]
        %v1461 = vld [vmem:[%s193 + $0x8] sm:$0xff]
        %1464 = vrot.lane.b32.xlu0 %v1460, 40
        %v1465 = vpop.permute.xlu0 %1464
        %1466 = vrot.lane.b32.xlu0 %v1461, 40
        %v1467 = vpop.permute.xlu0 %1466
        %v1468 = vrot.slane %v1465, 4
        %v1469 = vrot.slane %v1467, 4
        %v1470 = vsel %vm237, %v1468, %v1469
        %vm1471 = vcmask 326656
        %v1472 = vsel %vm1471, %v1465, %v1470
        %v1473 = vsel %vm1471, %v1467, %v1469
        %1476 = vst [vmem:[#allocation2] sm:$0xff] %v1472
        %1477 = vst.msk [vmem:[#allocation2 + $0x8] sm:$0xf] %vm225, %v1473
        %v1478 = vld [vmem:[%s193] sm:$0xff]
        %v1479 = vld [vmem:[%s193 + $0x8] sm:$0xff]
        %1482 = vrot.lane.b32.xlu0 %v1478, 39
        %v1483 = vpop.permute.xlu0 %1482
        %1484 = vrot.lane.b32.xlu0 %v1479, 39
        %v1485 = vpop.permute.xlu0 %1484
        %v1486 = vrot.slane %v1483, 4
        %v1487 = vrot.slane %v1485, 4
        %v1488 = vsel %vm237, %v1486, %v1487
        %vm1489 = vcmask 318464
        %v1490 = vsel %vm1489, %v1483, %v1488
        %v1491 = vsel %vm1489, %v1485, %v1487
        %1494 = vst [vmem:[#allocation2 + $0xc] sm:$0xff] %v1490
        %1495 = vst.msk [vmem:[#allocation2 + $0x14] sm:$0xf] %vm225, %v1491
        %v1496 = vld [vmem:[%s193] sm:$0xff]
        %v1497 = vld [vmem:[%s193 + $0x8] sm:$0xff]
        %1500 = vrot.lane.b32.xlu0 %v1496, 38
        %v1501 = vpop.permute.xlu0 %1500
        %1502 = vrot.lane.b32.xlu0 %v1497, 38
        %v1503 = vpop.permute.xlu0 %1502
        %v1504 = vrot.slane %v1501, 4
        %v1505 = vrot.slane %v1503, 4
        %v1506 = vsel %vm237, %v1504, %v1505
        %vm1507 = vcmask 310272
        %v1508 = vsel %vm1507, %v1501, %v1506
        %v1509 = vsel %vm1507, %v1503, %v1505
        %1512 = vst [vmem:[#allocation2 + $0x18] sm:$0xff] %v1508
        %1513 = vst.msk [vmem:[#allocation2 + $0x20] sm:$0xf] %vm225, %v1509
        %v1514 = vld [vmem:[%s193] sm:$0xff]
        %v1515 = vld [vmem:[%s193 + $0x8] sm:$0xff]
        %1518 = vrot.lane.b32.xlu0 %v1514, 37
        %v1519 = vpop.permute.xlu0 %1518
        %1520 = vrot.lane.b32.xlu0 %v1515, 37
        %v1521 = vpop.permute.xlu0 %1520
        %v1522 = vrot.slane %v1519, 4
        %v1523 = vrot.slane %v1521, 4
        %v1524 = vsel %vm237, %v1522, %v1523
        %vm1525 = vcmask 302080
        %v1526 = vsel %vm1525, %v1519, %v1524
        %v1527 = vsel %vm1525, %v1521, %v1523
        %1530 = vst [vmem:[#allocation2 + $0x24] sm:$0xff] %v1526
        %1531 = vst.msk [vmem:[#allocation2 + $0x2c] sm:$0xf] %vm225, %v1527
        %v1532 = vld [vmem:[%s193] sm:$0xff]
        %v1533 = vld [vmem:[%s193 + $0x8] sm:$0xff]
        %1536 = vrot.lane.b32.xlu0 %v1532, 36
        %v1537 = vpop.permute.xlu0 %1536
        %1538 = vrot.lane.b32.xlu0 %v1533, 36
        %v1539 = vpop.permute.xlu0 %1538
        %v1540 = vrot.slane %v1537, 4
        %v1541 = vrot.slane %v1539, 4
        %v1542 = vsel %vm237, %v1540, %v1541
        %vm1543 = vcmask 293888
        %v1544 = vsel %vm1543, %v1537, %v1542
        %v1545 = vsel %vm1543, %v1539, %v1541
        %1548 = vst [vmem:[#allocation2 + $0x30] sm:$0xff] %v1544
        %1549 = vst.msk [vmem:[#allocation2 + $0x38] sm:$0xf] %vm225, %v1545
        %v1550 = vld [vmem:[%s193] sm:$0xff]
        %v1551 = vld [vmem:[%s193 + $0x8] sm:$0xff]
        %1554 = vrot.lane.b32.xlu0 %v1550, 35
        %v1555 = vpop.permute.xlu0 %1554
        %1556 = vrot.lane.b32.xlu0 %v1551, 35
        %v1557 = vpop.permute.xlu0 %1556
        %v1558 = vrot.slane %v1555, 4
        %v1559 = vrot.slane %v1557, 4
        %v1560 = vsel %vm237, %v1558, %v1559
        %vm1561 = vcmask 285696
        %v1562 = vsel %vm1561, %v1555, %v1560
        %v1563 = vsel %vm1561, %v1557, %v1559
        %1566 = vst [vmem:[#allocation2 + $0x3c] sm:$0xff] %v1562
        %1567 = vst.msk [vmem:[#allocation2 + $0x44] sm:$0xf] %vm225, %v1563
        %v1568 = vld [vmem:[%s193] sm:$0xff]
        %v1569 = vld [vmem:[%s193 + $0x8] sm:$0xff]
        %1572 = vrot.lane.b32.xlu0 %v1568, 34
        %v1573 = vpop.permute.xlu0 %1572
        %1574 = vrot.lane.b32.xlu0 %v1569, 34
        %v1575 = vpop.permute.xlu0 %1574
        %v1576 = vrot.slane %v1573, 4
        %v1577 = vrot.slane %v1575, 4
        %v1578 = vsel %vm237, %v1576, %v1577
        %vm1579 = vcmask 277504
        %v1580 = vsel %vm1579, %v1573, %v1578
        %v1581 = vsel %vm1579, %v1575, %v1577
        %1584 = vst [vmem:[#allocation2 + $0x48] sm:$0xff] %v1580
        %1585 = vst.msk [vmem:[#allocation2 + $0x50] sm:$0xf] %vm225, %v1581
        %s1586 = scalar_lea.vmem [#allocation7], 32
        %v1587 = vld [vmem:[%s1586] sm:$0xf]
        %v1588 = vld [vmem:[%s1586 + $0x4] sm:$0xf]
        %v1589 = vld [vmem:[#allocation2] sm:$0xff]
        %v1590 = vld [vmem:[#allocation2 + $0x8] sm:$0xf]
        %v1591 = vld [vmem:[#allocation2 + $0xc] sm:$0xff]
        %v1592 = vld [vmem:[#allocation2 + $0x14] sm:$0xf]
        %v1593 = vld [vmem:[#allocation2 + $0x18] sm:$0xff]
        %v1594 = vld [vmem:[#allocation2 + $0x20] sm:$0xf]
        %v1595 = vld [vmem:[#allocation2 + $0x24] sm:$0xff]
        %v1596 = vld [vmem:[#allocation2 + $0x2c] sm:$0xf]
        %v1597 = vld [vmem:[#allocation2 + $0x30] sm:$0xff]
        %v1598 = vld [vmem:[#allocation2 + $0x38] sm:$0xf]
        %v1599 = vld [vmem:[#allocation2 + $0x3c] sm:$0xff]
        %v1600 = vld [vmem:[#allocation2 + $0x44] sm:$0xf]
        %v1601 = vld [vmem:[#allocation2 + $0x48] sm:$0xff]
        %v1602 = vld [vmem:[#allocation2 + $0x50] sm:$0xf]
        %v1605 = vunpack.c.l.b16 %v1587
        %v1606 = vunpack.c.l.b16 %v1588
        %v1607 = vpack.c.b16 %v1606, %v1605
        %v1622 = vunpack.c.l.b16 %v1589
        %v1623 = vunpack.c.h.b16 %v1589
        %v1624 = vunpack.c.l.b16 %v1590
        %v1625 = vunpack.c.l.b16 %v1591
        %v1626 = vunpack.c.h.b16 %v1591
        %v1627 = vunpack.c.l.b16 %v1592
        %v1628 = vunpack.c.l.b16 %v1593
        %v1629 = vunpack.c.h.b16 %v1593
        %v1630 = vunpack.c.l.b16 %v1594
        %v1631 = vunpack.c.l.b16 %v1595
        %v1632 = vunpack.c.h.b16 %v1595
        %v1633 = vunpack.c.l.b16 %v1596
        %v1634 = vunpack.c.l.b16 %v1597
        %v1635 = vunpack.c.h.b16 %v1597
        %v1636 = vunpack.c.l.b16 %v1598
        %v1637 = vunpack.c.l.b16 %v1599
        %v1638 = vunpack.c.h.b16 %v1599
        %v1639 = vunpack.c.l.b16 %v1600
        %v1640 = vunpack.c.l.b16 %v1601
        %v1641 = vunpack.c.h.b16 %v1601
        %v1642 = vunpack.c.l.b16 %v1602
        %v1643 = vpack.c.b16 %v1625, %v1622
        %v1644 = vpack.c.b16 %v1626, %v1623
        %v1645 = vpack.c.b16 %v1627, %v1624
        %v1646 = vpack.c.b16 %v1631, %v1628
        %v1647 = vpack.c.b16 %v1632, %v1629
        %v1648 = vpack.c.b16 %v1633, %v1630
        %v1649 = vpack.c.b16 %v1637, %v1634
        %v1650 = vpack.c.b16 %v1638, %v1635
        %v1651 = vpack.c.b16 %v1639, %v1636
        %v1652 = vpack.c.b16 %v1640, %v1640
        %v1653 = vpack.c.b16 %v1641, %v1641
        %v1654 = vpack.c.b16 %v1642, %v1642
        %v1665 = vsel %vm407, %v1607, 0
        %v1668 = vsel %vm411, %v1652, 0
        %v1671 = vsel %vm411, %v1653, 0
        %v1674 = vsel %vm411, %v1654, 0
        %1676 = vmatprep.subr.bf16.mxu0 %v1644
        %1677 = vmatpush1.bf16.msra.mxu0 %v1643
        %1678 = vmatprep.subr.bf16.mxu0 %v1647
        %1679 = vmatpush1.bf16.msra.mxu0 %v1646
        %1680 = vmatprep.subr.bf16.mxu0 %v1650
        %1681 = vmatpush1.bf16.msra.mxu0 %v1649
        %1682 = vmatprep.subr.bf16.mxu0 %v1671
        %1683 = vmatpush1.bf16.msra.mxu0 %v1668
        %1684 = vmatprep.subr.bf16.mxu0 0
        %1685 = vmatpush1.bf16.msra.mxu0 0
        %1686 = vmatprep.subr.bf16.mxu0 0
        %1687 = vmatpush1.bf16.msra.mxu0 0
        %1688 = vmatprep.subr.bf16.mxu0 0
        %1689 = vmatpush1.bf16.msra.mxu0 0
        %1690 = vmatprep.subr.bf16.mxu0 0
        %1691 = vmatpush1.bf16.msra.mxu0 0
        %1692 = vmatprep.subr.bf16.mxu0 0
        %1693 = vmatpush1.bf16.msra.mxu0 0
        %1694 = vmatprep.subr.bf16.mxu0 0
        %1695 = vmatpush1.bf16.msra.mxu0 0
        %1696 = vmatprep.subr.bf16.mxu0 0
        %1697 = vmatpush1.bf16.msra.mxu0 0
        %1698 = vmatprep.subr.bf16.mxu0 0
        %1699 = vmatpush1.bf16.msra.mxu0 0
        %1700 = vmatprep.subr.bf16.mxu0 0
        %1701 = vmatpush1.bf16.msra.mxu0 0
        %1702 = vmatprep.subr.bf16.mxu0 0
        %1703 = vmatpush1.bf16.msra.mxu0 0
        %1704 = vmatprep.subr.bf16.mxu0 0
        %1705 = vmatpush1.bf16.msra.mxu0 0
        %1706 = vmatprep.subr.bf16.mxu0 0
        %1707 = vmatpush1.bf16.msra.mxu0 0
        %1708 = vmatprep.mubr.bf16.mxu0 0
        %1709 = vmatmul.mubr.bf16.gmra.mrb[0].mxu0 %v1665
        %v1710 = vpop.f32.mrb[0].mxu0
        %v1711 = vadd.f32 0.0, %v1710
        %v1712 = vpop.f32.mrb[0].mxu0
        %v1713 = vadd.f32 0.0, %v1712
        %v1714 = vpop.f32.mrb[0].mxu0
        %v1715 = vadd.f32 0.0, %v1714
        %v1716 = vpop.f32.mrb[0].mxu0
        %v1717 = vadd.f32 0.0, %v1716
        %1718 = vdwg.mxu0
        %1719 = vmatprep.subr.bf16.mxu0 0
        %1720 = vmatpush1.bf16.msra.mxu0 %v1645
        %1721 = vmatprep.subr.bf16.mxu0 0
        %1722 = vmatpush1.bf16.msra.mxu0 %v1648
        %1723 = vmatprep.subr.bf16.mxu0 0
        %1724 = vmatpush1.bf16.msra.mxu0 %v1651
        %1725 = vmatprep.subr.bf16.mxu0 0
        %1726 = vmatpush1.bf16.msra.mxu0 %v1674
        %1727 = vmatprep.subr.bf16.mxu0 0
        %1728 = vmatpush1.bf16.msra.mxu0 0
        %1729 = vmatprep.subr.bf16.mxu0 0
        %1730 = vmatpush1.bf16.msra.mxu0 0
        %1731 = vmatprep.subr.bf16.mxu0 0
        %1732 = vmatpush1.bf16.msra.mxu0 0
        %1733 = vmatprep.subr.bf16.mxu0 0
        %1734 = vmatpush1.bf16.msra.mxu0 0
        %1735 = vmatprep.subr.bf16.mxu0 0
        %1736 = vmatpush1.bf16.msra.mxu0 0
        %1737 = vmatprep.subr.bf16.mxu0 0
        %1738 = vmatpush1.bf16.msra.mxu0 0
        %1739 = vmatprep.subr.bf16.mxu0 0
        %1740 = vmatpush1.bf16.msra.mxu0 0
        %1741 = vmatprep.subr.bf16.mxu0 0
        %1742 = vmatpush1.bf16.msra.mxu0 0
        %1743 = vmatprep.subr.bf16.mxu0 0
        %1744 = vmatpush1.bf16.msra.mxu0 0
        %1745 = vmatprep.subr.bf16.mxu0 0
        %1746 = vmatpush1.bf16.msra.mxu0 0
        %1747 = vmatprep.subr.bf16.mxu0 0
        %1748 = vmatpush1.bf16.msra.mxu0 0
        %1749 = vmatprep.subr.bf16.mxu0 0
        %1750 = vmatpush1.bf16.msra.mxu0 0
        %1751 = vmatprep.mubr.bf16.mxu0 0
        %1752 = vmatmul.mubr.bf16.gmra.mrb[0].mxu0 %v1665
        %v1753 = vpop.f32.mrb[0].mxu0
        %v1754 = vadd.f32 0.0, %v1753
        %v1755 = vpop.f32.mrb[0].mxu0
        %v1756 = vpop.f32.mrb[0].mxu0
        %v1757 = vadd.f32 0.0, %v1756
        %v1758 = vpop.f32.mrb[0].mxu0
        %1759 = vdwg.mxu0
        %v1760 = vld [vmem:[#allocation3] sm:$0xff]
        %v1761 = vld [vmem:[#allocation3 + $0x8] sm:$0xff]
        %v1762 = vld [vmem:[#allocation3 + $0x10] sm:$0xff]
        %v1763 = vld [vmem:[#allocation3 + $0x18] sm:$0xff]
        %v1764 = vld [vmem:[#allocation3 + $0x20] sm:$0xff]
        %v1765 = vld [vmem:[#allocation3 + $0x28] sm:$0xff]
        %v1766 = vadd.f32 %v1760, %v1711
        %v1767 = vadd.f32 %v1761, %v1713
        %v1768 = vadd.f32 %v1762, %v1754
        %v1769 = vadd.f32 %v1763, %v1715
        %v1770 = vadd.f32 %v1764, %v1717
        %v1771 = vadd.f32 %v1765, %v1757
        %1772 = vst [vmem:[#allocation3] sm:$0xff] %v1766
        %1773 = vst [vmem:[#allocation3 + $0x8] sm:$0xff] %v1767
        %1774 = vst.msk [vmem:[#allocation3 + $0x10] sm:$0xff] %vm507, %v1768
        %1775 = vst [vmem:[#allocation3 + $0x18] sm:$0xff] %v1769
        %1776 = vst [vmem:[#allocation3 + $0x20] sm:$0xff] %v1770
        %1777 = vst.msk [vmem:[#allocation3 + $0x28] sm:$0xff] %vm507, %v1771
        %v1778 = vld [vmem:[%s193] sm:$0xff]
        %v1779 = vld [vmem:[%s193 + $0x8] sm:$0xff]
        %1782 = vrot.lane.b32.xlu0 %v1778, 18
        %v1783 = vpop.permute.xlu0 %1782
        %1784 = vrot.lane.b32.xlu0 %v1779, 18
        %v1785 = vpop.permute.xlu0 %1784
        %v1786 = vrot.slane %v1783, 4
        %v1787 = vrot.slane %v1785, 4
        %v1788 = vsel %vm237, %v1786, %v1787
        %vm1789 = vcmask 146432
        %v1790 = vsel %vm1789, %v1783, %v1788
        %v1791 = vsel %vm1789, %v1785, %v1787
        %1794 = vst [vmem:[%s527] sm:$0xff] %v1790
        %1795 = vst.msk [vmem:[%s527 + $0x8] sm:$0xf] %vm225, %v1791
        %v1796 = vld [vmem:[%s193] sm:$0xff]
        %v1797 = vld [vmem:[%s193 + $0x8] sm:$0xff]
        %1800 = vrot.lane.b32.xlu0 %v1796, 17
        %v1801 = vpop.permute.xlu0 %1800
        %1802 = vrot.lane.b32.xlu0 %v1797, 17
        %v1803 = vpop.permute.xlu0 %1802
        %v1804 = vrot.slane %v1801, 4
        %v1805 = vrot.slane %v1803, 4
        %v1806 = vsel %vm237, %v1804, %v1805
        %vm1807 = vcmask 138240
        %v1808 = vsel %vm1807, %v1801, %v1806
        %v1809 = vsel %vm1807, %v1803, %v1805
        %1812 = vst [vmem:[%s527 + $0xc] sm:$0xff] %v1808
        %1813 = vst.msk [vmem:[%s527 + $0x14] sm:$0xf] %vm225, %v1809
        %v1814 = vld [vmem:[%s193] sm:$0xff]
        %v1815 = vld [vmem:[%s193 + $0x8] sm:$0xff]
        %1818 = vrot.lane.b32.xlu0 %v1814, 16
        %v1819 = vpop.permute.xlu0 %1818
        %1820 = vrot.lane.b32.xlu0 %v1815, 16
        %v1821 = vpop.permute.xlu0 %1820
        %v1822 = vrot.slane %v1819, 4
        %v1823 = vrot.slane %v1821, 4
        %v1824 = vsel %vm237, %v1822, %v1823
        %vm1825 = vcmask 130048
        %v1826 = vsel %vm1825, %v1819, %v1824
        %v1827 = vsel %vm1825, %v1821, %v1823
        %1830 = vst [vmem:[%s527 + $0x18] sm:$0xff] %v1826
        %1831 = vst.msk [vmem:[%s527 + $0x20] sm:$0xf] %vm225, %v1827
        %v1832 = vld [vmem:[%s193] sm:$0xff]
        %v1833 = vld [vmem:[%s193 + $0x8] sm:$0xff]
        %1836 = vrot.lane.b32.xlu0 %v1832, 15
        %v1837 = vpop.permute.xlu0 %1836
        %1838 = vrot.lane.b32.xlu0 %v1833, 15
        %v1839 = vpop.permute.xlu0 %1838
        %v1840 = vrot.slane %v1837, 4
        %v1841 = vrot.slane %v1839, 4
        %v1842 = vsel %vm237, %v1840, %v1841
        %vm1843 = vcmask 121856
        %v1844 = vsel %vm1843, %v1837, %v1842
        %v1845 = vsel %vm1843, %v1839, %v1841
        %1848 = vst [vmem:[%s527 + $0x24] sm:$0xff] %v1844
        %1849 = vst.msk [vmem:[%s527 + $0x2c] sm:$0xf] %vm225, %v1845
        %v1850 = vld [vmem:[%s193] sm:$0xff]
        %v1851 = vld [vmem:[%s193 + $0x8] sm:$0xff]
        %1854 = vrot.lane.b32.xlu0 %v1850, 14
        %v1855 = vpop.permute.xlu0 %1854
        %1856 = vrot.lane.b32.xlu0 %v1851, 14
        %v1857 = vpop.permute.xlu0 %1856
        %v1858 = vrot.slane %v1855, 4
        %v1859 = vrot.slane %v1857, 4
        %v1860 = vsel %vm237, %v1858, %v1859
        %vm1861 = vcmask 113664
        %v1862 = vsel %vm1861, %v1855, %v1860
        %v1863 = vsel %vm1861, %v1857, %v1859
        %1866 = vst [vmem:[%s527 + $0x30] sm:$0xff] %v1862
        %1867 = vst.msk [vmem:[%s527 + $0x38] sm:$0xf] %vm225, %v1863
        %v1868 = vld [vmem:[%s193] sm:$0xff]
        %v1869 = vld [vmem:[%s193 + $0x8] sm:$0xff]
        %1872 = vrot.lane.b32.xlu0 %v1868, 13
        %v1873 = vpop.permute.xlu0 %1872
        %1874 = vrot.lane.b32.xlu0 %v1869, 13
        %v1875 = vpop.permute.xlu0 %1874
        %v1876 = vrot.slane %v1873, 4
        %v1877 = vrot.slane %v1875, 4
        %v1878 = vsel %vm237, %v1876, %v1877
        %vm1879 = vcmask 105472
        %v1880 = vsel %vm1879, %v1873, %v1878
        %v1881 = vsel %vm1879, %v1875, %v1877
        %1884 = vst [vmem:[%s527 + $0x3c] sm:$0xff] %v1880
        %1885 = vst.msk [vmem:[%s527 + $0x44] sm:$0xf] %vm225, %v1881
        %v1886 = vld [vmem:[%s193] sm:$0xff]
        %v1887 = vld [vmem:[%s193 + $0x8] sm:$0xff]
        %1890 = vrot.lane.b32.xlu0 %v1886, 12
        %v1891 = vpop.permute.xlu0 %1890
        %1892 = vrot.lane.b32.xlu0 %v1887, 12
        %v1893 = vpop.permute.xlu0 %1892
        %v1894 = vrot.slane %v1891, 4
        %v1895 = vrot.slane %v1893, 4
        %v1896 = vsel %vm237, %v1894, %v1895
        %vm1897 = vcmask 97280
        %v1898 = vsel %vm1897, %v1891, %v1896
        %v1899 = vsel %vm1897, %v1893, %v1895
        %1902 = vst [vmem:[%s527 + $0x48] sm:$0xff] %v1898
        %1903 = vst.msk [vmem:[%s527 + $0x50] sm:$0xf] %vm225, %v1899
        %s1904 = scalar_lea.vmem [#allocation7], 40
        %v1905 = vld [vmem:[%s1904] sm:$0xf]
        %v1906 = vld [vmem:[%s1904 + $0x4] sm:$0xf]
        %v1907 = vld [vmem:[%s527] sm:$0xff]
        %v1908 = vld [vmem:[%s527 + $0x8] sm:$0xf]
        %v1909 = vld [vmem:[%s527 + $0xc] sm:$0xff]
        %v1910 = vld [vmem:[%s527 + $0x14] sm:$0xf]
        %v1911 = vld [vmem:[%s527 + $0x18] sm:$0xff]
        %v1912 = vld [vmem:[%s527 + $0x20] sm:$0xf]
        %v1913 = vld [vmem:[%s527 + $0x24] sm:$0xff]
        %v1914 = vld [vmem:[%s527 + $0x2c] sm:$0xf]
        %v1915 = vld [vmem:[%s527 + $0x30] sm:$0xff]
        %v1916 = vld [vmem:[%s527 + $0x38] sm:$0xf]
        %v1917 = vld [vmem:[%s527 + $0x3c] sm:$0xff]
        %v1918 = vld [vmem:[%s527 + $0x44] sm:$0xf]
        %v1919 = vld [vmem:[%s527 + $0x48] sm:$0xff]
        %v1920 = vld [vmem:[%s527 + $0x50] sm:$0xf]
        %v1923 = vunpack.c.l.b16 %v1905
        %v1924 = vunpack.c.l.b16 %v1906
        %v1925 = vpack.c.b16 %v1924, %v1923
        %v1940 = vunpack.c.l.b16 %v1907
        %v1941 = vunpack.c.h.b16 %v1907
        %v1942 = vunpack.c.l.b16 %v1908
        %v1943 = vunpack.c.l.b16 %v1909
        %v1944 = vunpack.c.h.b16 %v1909
        %v1945 = vunpack.c.l.b16 %v1910
        %v1946 = vunpack.c.l.b16 %v1911
        %v1947 = vunpack.c.h.b16 %v1911
        %v1948 = vunpack.c.l.b16 %v1912
        %v1949 = vunpack.c.l.b16 %v1913
        %v1950 = vunpack.c.h.b16 %v1913
        %v1951 = vunpack.c.l.b16 %v1914
        %v1952 = vunpack.c.l.b16 %v1915
        %v1953 = vunpack.c.h.b16 %v1915
        %v1954 = vunpack.c.l.b16 %v1916
        %v1955 = vunpack.c.l.b16 %v1917
        %v1956 = vunpack.c.h.b16 %v1917
        %v1957 = vunpack.c.l.b16 %v1918
        %v1958 = vunpack.c.l.b16 %v1919
        %v1959 = vunpack.c.h.b16 %v1919
        %v1960 = vunpack.c.l.b16 %v1920
        %v1961 = vpack.c.b16 %v1943, %v1940
        %v1962 = vpack.c.b16 %v1944, %v1941
        %v1963 = vpack.c.b16 %v1945, %v1942
        %v1964 = vpack.c.b16 %v1949, %v1946
        %v1965 = vpack.c.b16 %v1950, %v1947
        %v1966 = vpack.c.b16 %v1951, %v1948
        %v1967 = vpack.c.b16 %v1955, %v1952
        %v1968 = vpack.c.b16 %v1956, %v1953
        %v1969 = vpack.c.b16 %v1957, %v1954
        %v1970 = vpack.c.b16 %v1958, %v1958
        %v1971 = vpack.c.b16 %v1959, %v1959
        %v1972 = vpack.c.b16 %v1960, %v1960
        %v1983 = vsel %vm407, %v1925, 0
        %v1986 = vsel %vm411, %v1970, 0
        %v1989 = vsel %vm411, %v1971, 0
        %v1992 = vsel %vm411, %v1972, 0
        %1994 = vmatprep.subr.bf16.mxu0 %v1962
        %1995 = vmatpush1.bf16.msra.mxu0 %v1961
        %1996 = vmatprep.subr.bf16.mxu0 %v1965
        %1997 = vmatpush1.bf16.msra.mxu0 %v1964
        %1998 = vmatprep.subr.bf16.mxu0 %v1968
        %1999 = vmatpush1.bf16.msra.mxu0 %v1967
        %2000 = vmatprep.subr.bf16.mxu0 %v1989
        %2001 = vmatpush1.bf16.msra.mxu0 %v1986
        %2002 = vmatprep.subr.bf16.mxu0 0
        %2003 = vmatpush1.bf16.msra.mxu0 0
        %2004 = vmatprep.subr.bf16.mxu0 0
        %2005 = vmatpush1.bf16.msra.mxu0 0
        %2006 = vmatprep.subr.bf16.mxu0 0
        %2007 = vmatpush1.bf16.msra.mxu0 0
        %2008 = vmatprep.subr.bf16.mxu0 0
        %2009 = vmatpush1.bf16.msra.mxu0 0
        %2010 = vmatprep.subr.bf16.mxu0 0
        %2011 = vmatpush1.bf16.msra.mxu0 0
        %2012 = vmatprep.subr.bf16.mxu0 0
        %2013 = vmatpush1.bf16.msra.mxu0 0
        %2014 = vmatprep.subr.bf16.mxu0 0
        %2015 = vmatpush1.bf16.msra.mxu0 0
        %2016 = vmatprep.subr.bf16.mxu0 0
        %2017 = vmatpush1.bf16.msra.mxu0 0
        %2018 = vmatprep.subr.bf16.mxu0 0
        %2019 = vmatpush1.bf16.msra.mxu0 0
        %2020 = vmatprep.subr.bf16.mxu0 0
        %2021 = vmatpush1.bf16.msra.mxu0 0
        %2022 = vmatprep.subr.bf16.mxu0 0
        %2023 = vmatpush1.bf16.msra.mxu0 0
        %2024 = vmatprep.subr.bf16.mxu0 0
        %2025 = vmatpush1.bf16.msra.mxu0 0
        %2026 = vmatprep.mubr.bf16.mxu0 0
        %2027 = vmatmul.mubr.bf16.gmra.mrb[0].mxu0 %v1983
        %v2028 = vpop.f32.mrb[0].mxu0
        %v2029 = vadd.f32 0.0, %v2028
        %v2030 = vpop.f32.mrb[0].mxu0
        %v2031 = vadd.f32 0.0, %v2030
        %v2032 = vpop.f32.mrb[0].mxu0
        %v2033 = vadd.f32 0.0, %v2032
        %v2034 = vpop.f32.mrb[0].mxu0
        %v2035 = vadd.f32 0.0, %v2034
        %2036 = vdwg.mxu0
        %2037 = vmatprep.subr.bf16.mxu0 0
        %2038 = vmatpush1.bf16.msra.mxu0 %v1963
        %2039 = vmatprep.subr.bf16.mxu0 0
        %2040 = vmatpush1.bf16.msra.mxu0 %v1966
        %2041 = vmatprep.subr.bf16.mxu0 0
        %2042 = vmatpush1.bf16.msra.mxu0 %v1969
        %2043 = vmatprep.subr.bf16.mxu0 0
        %2044 = vmatpush1.bf16.msra.mxu0 %v1992
        %2045 = vmatprep.subr.bf16.mxu0 0
        %2046 = vmatpush1.bf16.msra.mxu0 0
        %2047 = vmatprep.subr.bf16.mxu0 0
        %2048 = vmatpush1.bf16.msra.mxu0 0
        %2049 = vmatprep.subr.bf16.mxu0 0
        %2050 = vmatpush1.bf16.msra.mxu0 0
        %2051 = vmatprep.subr.bf16.mxu0 0
        %2052 = vmatpush1.bf16.msra.mxu0 0
        %2053 = vmatprep.subr.bf16.mxu0 0
        %2054 = vmatpush1.bf16.msra.mxu0 0
        %2055 = vmatprep.subr.bf16.mxu0 0
        %2056 = vmatpush1.bf16.msra.mxu0 0
        %2057 = vmatprep.subr.bf16.mxu0 0
        %2058 = vmatpush1.bf16.msra.mxu0 0
        %2059 = vmatprep.subr.bf16.mxu0 0
        %2060 = vmatpush1.bf16.msra.mxu0 0
        %2061 = vmatprep.subr.bf16.mxu0 0
        %2062 = vmatpush1.bf16.msra.mxu0 0
        %2063 = vmatprep.subr.bf16.mxu0 0
        %2064 = vmatpush1.bf16.msra.mxu0 0
        %2065 = vmatprep.subr.bf16.mxu0 0
        %2066 = vmatpush1.bf16.msra.mxu0 0
        %2067 = vmatprep.subr.bf16.mxu0 0
        %2068 = vmatpush1.bf16.msra.mxu0 0
        %2069 = vmatprep.mubr.bf16.mxu0 0
        %2070 = vmatmul.mubr.bf16.gmra.mrb[0].mxu0 %v1983
        %v2071 = vpop.f32.mrb[0].mxu0
        %v2072 = vadd.f32 0.0, %v2071
        %v2073 = vpop.f32.mrb[0].mxu0
        %v2074 = vpop.f32.mrb[0].mxu0
        %v2075 = vadd.f32 0.0, %v2074
        %v2076 = vpop.f32.mrb[0].mxu0
        %2077 = vdwg.mxu0
        %v2078 = vld [vmem:[#allocation3] sm:$0xff]
        %v2079 = vld [vmem:[#allocation3 + $0x8] sm:$0xff]
        %v2080 = vld [vmem:[#allocation3 + $0x10] sm:$0xff]
        %v2081 = vld [vmem:[#allocation3 + $0x18] sm:$0xff]
        %v2082 = vld [vmem:[#allocation3 + $0x20] sm:$0xff]
        %v2083 = vld [vmem:[#allocation3 + $0x28] sm:$0xff]
        %v2084 = vadd.f32 %v2078, %v2029
        %v2085 = vadd.f32 %v2079, %v2031
        %v2086 = vadd.f32 %v2080, %v2072
        %v2087 = vadd.f32 %v2081, %v2033
        %v2088 = vadd.f32 %v2082, %v2035
        %v2089 = vadd.f32 %v2083, %v2075
        %2090 = vst [vmem:[#allocation3] sm:$0xff] %v2084
        %2091 = vst [vmem:[#allocation3 + $0x8] sm:$0xff] %v2085
        %2092 = vst.msk [vmem:[#allocation3 + $0x10] sm:$0xff] %vm507, %v2086
        %2093 = vst [vmem:[#allocation3 + $0x18] sm:$0xff] %v2087
        %2094 = vst [vmem:[#allocation3 + $0x20] sm:$0xff] %v2088
        %2095 = vst.msk [vmem:[#allocation3 + $0x28] sm:$0xff] %vm507, %v2089
        %v2096 = vld [vmem:[%s193 + $0x4] sm:$0xff]
        %v2097 = vld [vmem:[%s193 + $0xc] sm:$0xf]
        %2100 = vrot.lane.b32.xlu0 %v2096, 124
        %v2101 = vpop.permute.xlu0 %2100
        %2102 = vrot.lane.b32.xlu0 %v2097, 124
        %v2103 = vpop.permute.xlu0 %2102
        %v2104 = vrot.slane %v2101, 4
        %v2105 = vrot.slane %v2103, 4
        %v2106 = vsel %vm237, %v2104, %v2105
        %v2107 = vsel %vm290, %v2101, %v2106
        %2110 = vst [vmem:[#allocation2] sm:$0xff] %v2107
        %2111 = vst.msk [vmem:[#allocation2 + $0x8] sm:$0xf] %vm225, %v2103
        %v2112 = vld [vmem:[%s193 + $0x4] sm:$0xff]
        %v2113 = vld [vmem:[%s193 + $0xc] sm:$0xf]
        %2116 = vrot.lane.b32.xlu0 %v2112, 123
        %v2117 = vpop.permute.xlu0 %2116
        %2118 = vrot.lane.b32.xlu0 %v2113, 123
        %v2119 = vpop.permute.xlu0 %2118
        %v2120 = vrot.slane %v2117, 4
        %v2121 = vrot.slane %v2119, 4
        %v2122 = vsel %vm237, %v2120, %v2121
        %v2123 = vsel %vm307, %v2117, %v2122
        %2126 = vst [vmem:[#allocation2 + $0xc] sm:$0xff] %v2123
        %2127 = vst.msk [vmem:[#allocation2 + $0x14] sm:$0xf] %vm225, %v2119
        %v2128 = vld [vmem:[%s193 + $0x4] sm:$0xff]
        %v2129 = vld [vmem:[%s193 + $0xc] sm:$0xf]
        %2132 = vrot.lane.b32.xlu0 %v2128, 122
        %v2133 = vpop.permute.xlu0 %2132
        %2134 = vrot.lane.b32.xlu0 %v2129, 122
        %v2135 = vpop.permute.xlu0 %2134
        %v2136 = vrot.slane %v2133, 4
        %v2137 = vrot.slane %v2135, 4
        %v2138 = vsel %vm237, %v2136, %v2137
        %v2139 = vsel %vm324, %v2133, %v2138
        %2142 = vst [vmem:[#allocation2 + $0x18] sm:$0xff] %v2139
        %2143 = vst.msk [vmem:[#allocation2 + $0x20] sm:$0xf] %vm225, %v2135
        %v2144 = vld [vmem:[%s193 + $0x4] sm:$0xff]
        %v2145 = vld [vmem:[%s193 + $0xc] sm:$0xf]
        %2148 = vrot.lane.b32.xlu0 %v2144, 121
        %v2149 = vpop.permute.xlu0 %2148
        %2150 = vrot.lane.b32.xlu0 %v2145, 121
        %v2151 = vpop.permute.xlu0 %2150
        %v2152 = vrot.slane %v2149, 4
        %v2153 = vrot.slane %v2151, 4
        %v2154 = vsel %vm237, %v2152, %v2153
        %vm2155 = vcmask 990208
        %v2156 = vsel %vm2155, %v2149, %v2154
        %2159 = vst [vmem:[#allocation2 + $0x24] sm:$0xff] %v2156
        %2160 = vst.msk [vmem:[#allocation2 + $0x2c] sm:$0xf] %vm225, %v2151
        %v2161 = vld [vmem:[%s193 + $0x4] sm:$0xff]
        %v2162 = vld [vmem:[%s193 + $0xc] sm:$0xf]
        %2165 = vrot.lane.b32.xlu0 %v2161, 120
        %v2166 = vpop.permute.xlu0 %2165
        %2167 = vrot.lane.b32.xlu0 %v2162, 120
        %v2168 = vpop.permute.xlu0 %2167
        %v2169 = vrot.slane %v2166, 4
        %v2170 = vrot.slane %v2168, 4
        %v2171 = vsel %vm237, %v2169, %v2170
        %vm2172 = vcmask 982016
        %v2173 = vsel %vm2172, %v2166, %v2171
        %2176 = vst [vmem:[#allocation2 + $0x30] sm:$0xff] %v2173
        %2177 = vst.msk [vmem:[#allocation2 + $0x38] sm:$0xf] %vm225, %v2168
        %v2178 = vld [vmem:[%s193 + $0x4] sm:$0xff]
        %v2179 = vld [vmem:[%s193 + $0xc] sm:$0xf]
        %2182 = vrot.lane.b32.xlu0 %v2178, 119
        %v2183 = vpop.permute.xlu0 %2182
        %2184 = vrot.lane.b32.xlu0 %v2179, 119
        %v2185 = vpop.permute.xlu0 %2184
        %v2186 = vrot.slane %v2183, 4
        %v2187 = vrot.slane %v2185, 4
        %v2188 = vsel %vm237, %v2186, %v2187
        %vm2189 = vcmask 973824
        %v2190 = vsel %vm2189, %v2183, %v2188
        %2193 = vst [vmem:[#allocation2 + $0x3c] sm:$0xff] %v2190
        %2194 = vst.msk [vmem:[#allocation2 + $0x44] sm:$0xf] %vm225, %v2185
        %v2195 = vld [vmem:[%s193 + $0x4] sm:$0xff]
        %v2196 = vld [vmem:[%s193 + $0xc] sm:$0xf]
        %2199 = vrot.lane.b32.xlu0 %v2195, 118
        %v2200 = vpop.permute.xlu0 %2199
        %2201 = vrot.lane.b32.xlu0 %v2196, 118
        %v2202 = vpop.permute.xlu0 %2201
        %v2203 = vrot.slane %v2200, 4
        %v2204 = vrot.slane %v2202, 4
        %v2205 = vsel %vm237, %v2203, %v2204
        %vm2206 = vcmask 965632
        %v2207 = vsel %vm2206, %v2200, %v2205
        %2210 = vst [vmem:[#allocation2 + $0x48] sm:$0xff] %v2207
        %2211 = vst.msk [vmem:[#allocation2 + $0x50] sm:$0xf] %vm225, %v2202
        %s2212 = scalar_lea.vmem [#allocation7], 48
        %v2213 = vld [vmem:[%s2212] sm:$0xf]
        %v2214 = vld [vmem:[%s2212 + $0x4] sm:$0xf]
        %v2215 = vld [vmem:[#allocation2] sm:$0xff]
        %v2216 = vld [vmem:[#allocation2 + $0x8] sm:$0xf]
        %v2217 = vld [vmem:[#allocation2 + $0xc] sm:$0xff]
        %v2218 = vld [vmem:[#allocation2 + $0x14] sm:$0xf]
        %v2219 = vld [vmem:[#allocation2 + $0x18] sm:$0xff]
        %v2220 = vld [vmem:[#allocation2 + $0x20] sm:$0xf]
        %v2221 = vld [vmem:[#allocation2 + $0x24] sm:$0xff]
        %v2222 = vld [vmem:[#allocation2 + $0x2c] sm:$0xf]
        %v2223 = vld [vmem:[#allocation2 + $0x30] sm:$0xff]
        %v2224 = vld [vmem:[#allocation2 + $0x38] sm:$0xf]
        %v2225 = vld [vmem:[#allocation2 + $0x3c] sm:$0xff]
        %v2226 = vld [vmem:[#allocation2 + $0x44] sm:$0xf]
        %v2227 = vld [vmem:[#allocation2 + $0x48] sm:$0xff]
        %v2228 = vld [vmem:[#allocation2 + $0x50] sm:$0xf]
        %v2231 = vunpack.c.l.b16 %v2213
        %v2232 = vunpack.c.l.b16 %v2214
        %v2233 = vpack.c.b16 %v2232, %v2231
        %v2248 = vunpack.c.l.b16 %v2215
        %v2249 = vunpack.c.h.b16 %v2215
        %v2250 = vunpack.c.l.b16 %v2216
        %v2251 = vunpack.c.l.b16 %v2217
        %v2252 = vunpack.c.h.b16 %v2217
        %v2253 = vunpack.c.l.b16 %v2218
        %v2254 = vunpack.c.l.b16 %v2219
        %v2255 = vunpack.c.h.b16 %v2219
        %v2256 = vunpack.c.l.b16 %v2220
        %v2257 = vunpack.c.l.b16 %v2221
        %v2258 = vunpack.c.h.b16 %v2221
        %v2259 = vunpack.c.l.b16 %v2222
        %v2260 = vunpack.c.l.b16 %v2223
        %v2261 = vunpack.c.h.b16 %v2223
        %v2262 = vunpack.c.l.b16 %v2224
        %v2263 = vunpack.c.l.b16 %v2225
        %v2264 = vunpack.c.h.b16 %v2225
        %v2265 = vunpack.c.l.b16 %v2226
        %v2266 = vunpack.c.l.b16 %v2227
        %v2267 = vunpack.c.h.b16 %v2227
        %v2268 = vunpack.c.l.b16 %v2228
        %v2269 = vpack.c.b16 %v2251, %v2248
        %v2270 = vpack.c.b16 %v2252, %v2249
        %v2271 = vpack.c.b16 %v2253, %v2250
        %v2272 = vpack.c.b16 %v2257, %v2254
        %v2273 = vpack.c.b16 %v2258, %v2255
        %v2274 = vpack.c.b16 %v2259, %v2256
        %v2275 = vpack.c.b16 %v2263, %v2260
        %v2276 = vpack.c.b16 %v2264, %v2261
        %v2277 = vpack.c.b16 %v2265, %v2262
        %v2278 = vpack.c.b16 %v2266, %v2266
        %v2279 = vpack.c.b16 %v2267, %v2267
        %v2280 = vpack.c.b16 %v2268, %v2268
        %v2291 = vsel %vm407, %v2233, 0
        %v2294 = vsel %vm411, %v2278, 0
        %v2297 = vsel %vm411, %v2279, 0
        %v2300 = vsel %vm411, %v2280, 0
        %2302 = vmatprep.subr.bf16.mxu0 %v2270
        %2303 = vmatpush1.bf16.msra.mxu0 %v2269
        %2304 = vmatprep.subr.bf16.mxu0 %v2273
        %2305 = vmatpush1.bf16.msra.mxu0 %v2272
        %2306 = vmatprep.subr.bf16.mxu0 %v2276
        %2307 = vmatpush1.bf16.msra.mxu0 %v2275
        %2308 = vmatprep.subr.bf16.mxu0 %v2297
        %2309 = vmatpush1.bf16.msra.mxu0 %v2294
        %2310 = vmatprep.subr.bf16.mxu0 0
        %2311 = vmatpush1.bf16.msra.mxu0 0
        %2312 = vmatprep.subr.bf16.mxu0 0
        %2313 = vmatpush1.bf16.msra.mxu0 0
        %2314 = vmatprep.subr.bf16.mxu0 0
        %2315 = vmatpush1.bf16.msra.mxu0 0
        %2316 = vmatprep.subr.bf16.mxu0 0
        %2317 = vmatpush1.bf16.msra.mxu0 0
        %2318 = vmatprep.subr.bf16.mxu0 0
        %2319 = vmatpush1.bf16.msra.mxu0 0
        %2320 = vmatprep.subr.bf16.mxu0 0
        %2321 = vmatpush1.bf16.msra.mxu0 0
        %2322 = vmatprep.subr.bf16.mxu0 0
        %2323 = vmatpush1.bf16.msra.mxu0 0
        %2324 = vmatprep.subr.bf16.mxu0 0
        %2325 = vmatpush1.bf16.msra.mxu0 0
        %2326 = vmatprep.subr.bf16.mxu0 0
        %2327 = vmatpush1.bf16.msra.mxu0 0
        %2328 = vmatprep.subr.bf16.mxu0 0
        %2329 = vmatpush1.bf16.msra.mxu0 0
        %2330 = vmatprep.subr.bf16.mxu0 0
        %2331 = vmatpush1.bf16.msra.mxu0 0
        %2332 = vmatprep.subr.bf16.mxu0 0
        %2333 = vmatpush1.bf16.msra.mxu0 0
        %2334 = vmatprep.mubr.bf16.mxu0 0
        %2335 = vmatmul.mubr.bf16.gmra.mrb[0].mxu0 %v2291
        %v2336 = vpop.f32.mrb[0].mxu0
        %v2337 = vadd.f32 0.0, %v2336
        %v2338 = vpop.f32.mrb[0].mxu0
        %v2339 = vadd.f32 0.0, %v2338
        %v2340 = vpop.f32.mrb[0].mxu0
        %v2341 = vadd.f32 0.0, %v2340
        %v2342 = vpop.f32.mrb[0].mxu0
        %v2343 = vadd.f32 0.0, %v2342
        %2344 = vdwg.mxu0
        %2345 = vmatprep.subr.bf16.mxu0 0
        %2346 = vmatpush1.bf16.msra.mxu0 %v2271
        %2347 = vmatprep.subr.bf16.mxu0 0
        %2348 = vmatpush1.bf16.msra.mxu0 %v2274
        %2349 = vmatprep.subr.bf16.mxu0 0
        %2350 = vmatpush1.bf16.msra.mxu0 %v2277
        %2351 = vmatprep.subr.bf16.mxu0 0
        %2352 = vmatpush1.bf16.msra.mxu0 %v2300
        %2353 = vmatprep.subr.bf16.mxu0 0
        %2354 = vmatpush1.bf16.msra.mxu0 0
        %2355 = vmatprep.subr.bf16.mxu0 0
        %2356 = vmatpush1.bf16.msra.mxu0 0
        %2357 = vmatprep.subr.bf16.mxu0 0
        %2358 = vmatpush1.bf16.msra.mxu0 0
        %2359 = vmatprep.subr.bf16.mxu0 0
        %2360 = vmatpush1.bf16.msra.mxu0 0
        %2361 = vmatprep.subr.bf16.mxu0 0
        %2362 = vmatpush1.bf16.msra.mxu0 0
        %2363 = vmatprep.subr.bf16.mxu0 0
        %2364 = vmatpush1.bf16.msra.mxu0 0
        %2365 = vmatprep.subr.bf16.mxu0 0
        %2366 = vmatpush1.bf16.msra.mxu0 0
        %2367 = vmatprep.subr.bf16.mxu0 0
        %2368 = vmatpush1.bf16.msra.mxu0 0
        %2369 = vmatprep.subr.bf16.mxu0 0
        %2370 = vmatpush1.bf16.msra.mxu0 0
        %2371 = vmatprep.subr.bf16.mxu0 0
        %2372 = vmatpush1.bf16.msra.mxu0 0
        %2373 = vmatprep.subr.bf16.mxu0 0
        %2374 = vmatpush1.bf16.msra.mxu0 0
        %2375 = vmatprep.subr.bf16.mxu0 0
        %2376 = vmatpush1.bf16.msra.mxu0 0
        %2377 = vmatprep.mubr.bf16.mxu0 0
        %2378 = vmatmul.mubr.bf16.gmra.mrb[0].mxu0 %v2291
        %v2379 = vpop.f32.mrb[0].mxu0
        %v2380 = vadd.f32 0.0, %v2379
        %v2381 = vpop.f32.mrb[0].mxu0
        %v2382 = vpop.f32.mrb[0].mxu0
        %v2383 = vadd.f32 0.0, %v2382
        %v2384 = vpop.f32.mrb[0].mxu0
        %2385 = vdwg.mxu0
        %v2386 = vld [vmem:[#allocation3] sm:$0xff]
        %v2387 = vld [vmem:[#allocation3 + $0x8] sm:$0xff]
        %v2388 = vld [vmem:[#allocation3 + $0x10] sm:$0xff]
        %v2389 = vld [vmem:[#allocation3 + $0x18] sm:$0xff]
        %v2390 = vld [vmem:[#allocation3 + $0x20] sm:$0xff]
        %v2391 = vld [vmem:[#allocation3 + $0x28] sm:$0xff]
        %v2392 = vadd.f32 %v2386, %v2337
        %v2393 = vadd.f32 %v2387, %v2339
        %v2394 = vadd.f32 %v2388, %v2380
        %v2395 = vadd.f32 %v2389, %v2341
        %v2396 = vadd.f32 %v2390, %v2343
        %v2397 = vadd.f32 %v2391, %v2383
        %2398 = vst [vmem:[#allocation3] sm:$0xff] %v2392
        %2399 = vst [vmem:[#allocation3 + $0x8] sm:$0xff] %v2393
        %2400 = vst.msk [vmem:[#allocation3 + $0x10] sm:$0xff] %vm507, %v2394
        %2401 = vst [vmem:[#allocation3 + $0x18] sm:$0xff] %v2395
        %2402 = vst [vmem:[#allocation3 + $0x20] sm:$0xff] %v2396
        %2403 = vst.msk [vmem:[#allocation3 + $0x28] sm:$0xff] %vm507, %v2397
        %v2404 = vld [vmem:[#allocation3] sm:$0xff]
        %v2405 = vld [vmem:[#allocation3 + $0x8] sm:$0xff]
        %v2406 = vld [vmem:[#allocation3 + $0x10] sm:$0xff]
        %v2407 = vld [vmem:[#allocation3 + $0x18] sm:$0xff]
        %v2408 = vld [vmem:[#allocation3 + $0x20] sm:$0xff]
        %v2409 = vld [vmem:[#allocation3 + $0x28] sm:$0xff]
        %v2410 = vld [vmem:[%s2] sm:$0xff]
        %v2411 = vld [vmem:[%s2 + $0x8] sm:$0xff]
        %2413 = vset.pattern.permute.xlu0 0
        %2414 = vperm.xlu0 %2413, %v2410
        %v2415 = vpop.permute.xlu0 %2414
        %2418 = vset.pattern.permute.xlu0 0
        %2419 = vperm.xlu0 %2418, %v2411
        %v2420 = vpop.permute.xlu0 %2419
        %v2422 = vadd.f32 %v2404, %v2415
        %v2423 = vadd.f32 %v2405, %v2415
        %v2424 = vadd.f32 %v2406, %v2415
        %v2425 = vadd.f32 %v2407, %v2420
        %v2426 = vadd.f32 %v2408, %v2420
        %v2427 = vadd.f32 %v2409, %v2420
        %v2428 = vmax.f32 %v2422, 0.0
        %v2429 = vmax.f32 %v2423, 0.0
        %v2430 = vmax.f32 %v2424, 0.0
        %v2431 = vmax.f32 %v2425, 0.0
        %v2432 = vmax.f32 %v2426, 0.0
        %v2433 = vmax.f32 %v2427, 0.0
        %2434 = vst [vmem:[%s219] sm:$0xff] %v2428
        %2435 = vst [vmem:[%s219 + $0x8] sm:$0xff] %v2429
        %2436 = vst.msk [vmem:[%s219 + $0x10] sm:$0xff] %vm507, %v2430
        %2437 = vst [vmem:[%s219 + $0x18] sm:$0xff] %v2431
        %2438 = vst [vmem:[%s219 + $0x20] sm:$0xff] %v2432
        %2439 = vst.msk [vmem:[%s219 + $0x28] sm:$0xff] %vm507, %v2433
        %s2440 = sand.u32 %s113, 1
        %s2441 = scalar_lea.sflag [#allocation6], %s2440
        %s2442 = sand.u32 %s113, 1
        %s2443 = smul.addr %s2442, 48
        %s2444 = scalar_lea.vmem [#allocation9], %s2443
        // Predicated region
        $region41: #{tpu_custom_call.1} parent=31 // pred_check
          %p2445 = pneg %p123
        $region42: #{tpu_custom_call.1} parent=31 // pred_check_branch
          %2447 = sbr.rel (%p2445) target = $region44
        $region43: #{tpu_custom_call.1} parent=31 // pred_region
          %s2448 = smul.u32 3, %s26
          %s2450 = ssub.s32 768, 768
          %2451 = vsyncadd %s2441, %s2450
          %s2452 = smul.addr %s25, 6
          %s2453 = sadd.s32 %s2448, %s2452
          %s2454 = smul.addr %s2453, 128
          %s2455 = scalar_lea.hbm %s3, %s2454
          %s2456 = sshll.u32 %s2444, 4
          %s2457 = int_to_ptr.vmem [resolvable:$true] %s2456
          %2462 = dma.vmem_to_hbm [thread:$0]  %s2457, 768, %s2455, %s2441, 384, 384, 24
        $region44: #{tpu_custom_call.1} parent=31 // pred_fallthru
          _
      $region32: #{tpu_custom_call.1} parent=5 // pred_fallthru
        _
      %p2463 = scmp.le.s32.totalorder 2, %s16
      // Predicated region
      $region45: #{tpu_custom_call.1} parent=5 // pred_check
        %p2464 = pneg %p2463
      $region46: #{tpu_custom_call.1} parent=5 // pred_check_branch
        %2466 = sbr.rel (%p2464) target = $region48
      $region47: #{tpu_custom_call.1} parent=5 // pred_region
        %s2467 = ssub.s32 %s16, 2
        // Predicated region
        $region49: #{tpu_custom_call.1} parent=47 // pred_check
          %p2468 = pneg %p129
        $region50: #{tpu_custom_call.1} parent=47 // pred_check_branch
          %2470 = sbr.rel (%p2468) target = $region52
        $region51: #{tpu_custom_call.1} parent=47 // pred_region
          %s2471 = sand.u32 %s114, 1
          %s2472 = scalar_lea.sflag [#allocation6], %s2471
          %s2473 = sand.u32 %s114, 1
          %s2474 = smul.addr %s2473, 48
          %s2475 = scalar_lea.vmem [#allocation9], %s2474
          %2476 = dma.done %s2472, 768
        $region52: #{tpu_custom_call.1} parent=47 // pred_fallthru
          _
      $region48: #{tpu_custom_call.1} parent=5 // pred_fallthru
        _
    $region6: #{tpu_custom_call.1} parent=1 // loop_footer
      %s20 = sadd.s32 1, %s16
    $region7: #{tpu_custom_call.1} parent=1 // loop_footer_branch
      %15 = sbr.rel target = $region3
    $region8: #{tpu_custom_call.1} parent=1 // loop_exit
      _
    %2477 = vsyncpa [#allocation5], 1
    %s2478 = scalar_lea.sflag [#allocation5], 1
    %2479 = vsyncpa %s2478, 1
    %2480 = vsyncpa [#allocation8], 1
    %2481 = vsyncpa [#allocation6], 1
    %s2482 = scalar_lea.sflag [#allocation6], 1
    %2483 = vsyncpa %s2482, 1

</llo_original>
